<compile_context>
chip_gen: v7x
topology: tpu7x:2x2x1
jax: 0.10.0
libtpu: 0.0.40
codegen_flags: <defaults>
</compile_context>

<pallas_src>
import functools

import jax
import jax.numpy as jnp
from jax.experimental import pallas as pl
from jax.experimental.pallas import tpu as pltpu


def _round_up(x, m):
    return (x + m - 1) // m * m


def _fused_conv_kernel(x_ref, w1_ref, b1_ref, w2_ref, b2_ref, mask_ref,
                       o_ref, hp_ref, *, wp, margin):
    # x_ref   : (CIN_P, WIDTH)       packed padded images, per-image lane stride S
    # w1_ref  : (9, C1, CIN_P)       conv1 weights, one (C1, CIN_P) slab per tap
    # b1_ref  : (C1, 1)
    # w2_ref  : (9, C2, C1)          conv2 weights, one (C2, C1) slab per tap
    # b2_ref  : (C2, 1)
    # mask_ref: (1, WIDTH)           1.0 on real output columns, 0.0 elsewhere
    # o_ref   : (C2, WIDTH)          lane-dense output slab
    # hp_ref  : (C1, MARGIN + WIDTH) zero-haloed intermediate (VMEM scratch)
    width = x_ref.shape[-1]
    hpw = hp_ref.shape[-1]

    # ---- conv1: 9 accumulating per-tap GEMMs on rolled views (no patch matrix) ----
    x = x_ref[...]                                            # (CIN_P, WIDTH)
    acc1 = None
    for t in range(9):
        ky, kx = divmod(t, 3)
        d = ky * wp + kx                                      # flat tap offset >= 0
        xs = x if d == 0 else pltpu.roll(x, shift=width - d, axis=1)
        part = jnp.dot(w1_ref[t], xs, preferred_element_type=jnp.float32)
        acc1 = part if acc1 is None else acc1 + part
    h = jnp.maximum(acc1 + b1_ref[...], 0.0) * mask_ref[...]  # (C1, WIDTH) f32

    # ---- re-pad intermediate in VMEM: zero ONLY the leading halo ------------------
    hp_ref[:, :margin] = jnp.zeros((hp_ref.shape[0], margin), hp_ref.dtype)
    hp_ref[:, margin:] = h                                    # lane-aligned store

    # ---- conv2: 9 accumulating per-tap GEMMs on rolled haloed views ----------------
    hpv = hp_ref[...]                                         # (C1, MARGIN+WIDTH)
    acc2 = None
    for t in range(9):
        ky, kx = divmod(t, 3)
        delta = (ky - 1) * wp + (kx - 1)                      # signed tap offset
        shift = (hpw - (margin + delta)) % hpw
        hs = hpv if shift == 0 else pltpu.roll(hpv, shift=shift, axis=1)
        part = jnp.dot(w2_ref[t], hs[:, :width],
                       preferred_element_type=jnp.float32)
        acc2 = part if acc2 is None else acc2 + part
    o_ref[...] = (acc2 + b2_ref[...]).astype(o_ref.dtype)


def no_blocks_model(x_nchw, params):
    """Forward of NoBlocksModel: conv3x3(pad=1) -> ReLU -> conv3x3(pad=1), NCHW."""
    N, Cin, H, W = x_nchw.shape
    C1 = params["w1"].shape[0]
    C2 = params["w2"].shape[0]
    Hp, Wp = H + 2, W + 2

    CIN_P = _round_up(Cin, 8)                   # sublane-align conv1's contraction
    S = _round_up(Hp * Wp, 128)                 # common per-image lane stride
    MARGIN = _round_up(Wp + 1, 128)             # zero halo for conv2's negative taps

    # Images per grid step: amortize per-step overhead but keep >= 2 steps (v7x TCs)
    # and keep per-step lane width (VMEM footprint) modest.
    bt_cap = max(1, 16384 // S)
    bt = max(1, min(bt_cap, N // 2)) if N >= 2 else 1
    steps = -(-N // bt)
    N2 = steps * bt
    WIDTH = bt * S

    x = x_nchw.astype(jnp.float32)
    # One pad for batch / channel / spatial halo, then a small flat-tail pad to S.
    xp = jnp.pad(x, ((0, N2 - N), (0, CIN_P - Cin), (1, 1), (1, 1)))   # (N2,CIN_P,Hp,Wp)
    xf = jnp.pad(xp.reshape(N2, CIN_P, Hp * Wp),
                 ((0, 0), (0, 0), (0, S - Hp * Wp)))                   # (N2,CIN_P,S)
    xcat = jnp.transpose(xf, (1, 0, 2)).reshape(CIN_P, N2 * S)         # (CIN_P, N2*S)

    # Per-tap weight slabs: PyTorch (O, I, kh, kw) -> (9, O, I), tap index t = kh*3+kw.
    w1t = jnp.transpose(params["w1"], (2, 3, 0, 1)).reshape(9, C1, Cin).astype(jnp.float32)
    w1t = jnp.pad(w1t, ((0, 0), (0, 0), (0, CIN_P - Cin)))
    w2t = jnp.transpose(params["w2"], (2, 3, 0, 1)).reshape(9, C2, C1).astype(jnp.float32)
    b1c = params["b1"].reshape(C1, 1).astype(jnp.float32)
    b2c = params["b2"].reshape(C2, 1).astype(jnp.float32)

    # 1.0 on columns that are real output pixels of the flat (H, Wp) grid, per image.
    g = jnp.arange(S, dtype=jnp.int32)
    m1 = (((g % Wp) < W) & (g < H * Wp)).astype(jnp.float32)
    mask = jnp.tile(m1, (bt,)).reshape(1, WIDTH)

    kernel = functools.partial(_fused_conv_kernel, wp=Wp, margin=MARGIN)

    out_flat = pl.pallas_call(
        kernel,
        out_shape=jax.ShapeDtypeStruct((C2, N2 * S), jnp.float32),
        grid=(steps,),
        in_specs=[
            pl.BlockSpec((CIN_P, WIDTH), lambda n: (0, n)),      # packed images
            pl.BlockSpec((9, C1, CIN_P), lambda n: (0, 0, 0)),   # resident weights
            pl.BlockSpec((C1, 1), lambda n: (0, 0)),
            pl.BlockSpec((9, C2, C1), lambda n: (0, 0, 0)),
            pl.BlockSpec((C2, 1), lambda n: (0, 0)),
            pl.BlockSpec((1, WIDTH), lambda n: (0, 0)),          # resident mask
        ],
        out_specs=pl.BlockSpec((C2, WIDTH), lambda n: (0, n)),
        scratch_shapes=[
            pltpu.VMEM((C1, MARGIN + WIDTH), jnp.float32),       # haloed intermediate
        ],
        compiler_params=pltpu.CompilerParams(
            dimension_semantics=("parallel",),
            vmem_limit_bytes=32 * 1024 * 1024),
    )(xcat, w1t, b1c, w2t, b2c, mask)

    # (C2, N2*S) -> (N, C2, H, W): drop batch padding, lane rounding, and pad columns.
    out = out_flat.reshape(C2, N2, S).transpose(1, 0, 2)[:N, :, :H * Wp]
    out = out.reshape(N, C2, H, Wp)[:, :, :, :W]
    return out


def _conv_ref(x_nchw, w_oihw, b):
    y = jax.lax.conv_general_dilated(
        x_nchw, w_oihw, window_strides=(1, 1), padding=((1, 1), (1, 1)),
        dimension_numbers=("NCHW", "OIHW", "NCHW"))
    return y + b.reshape(1, -1, 1, 1)


if __name__ == "__main__":
    key = jax.random.PRNGKey(0)
    kx_, k1, k2, k3, k4 = jax.random.split(key, 5)

    # Small shapes consistent with the module (conv1 requires 3 input channels).
    x = jax.random.normal(kx_, (2, 3, 16, 16), jnp.float32)
    params = {
        "w1": 0.1 * jax.random.normal(k1, (16, 3, 3, 3), jnp.float32),
        "b1": 0.1 * jax.random.normal(k2, (16,), jnp.float32),
        "w2": 0.1 * jax.random.normal(k3, (3, 16, 3, 3), jnp.float32),
        "b2": 0.1 * jax.random.normal(k4, (3,), jnp.float32),
    }

    y = jax.jit(no_blocks_model)(x, params)
    jax.block_until_ready(y)
    assert y.shape == (2, 3, 16, 16) and y.dtype == jnp.float32

    # Cross-check against XLA's reference convolutions.
    ref = _conv_ref(jnp.maximum(_conv_ref(x, params["w1"], params["b1"]), 0.0),
                    params["w2"], params["b2"])
    max_err = float(jnp.max(jnp.abs(y - ref)))
    assert jnp.allclose(y, ref, atol=5e-3, rtol=5e-3), max_err

    print("KERNEL_OK")
</pallas_src>

<mosaic_0001>
module attributes {stable_mosaic.version = 11 : i64} {
  func.func @_fused_conv_kernel(%arg0: i32, %arg1: memref<8x384xf32, #tpu.memory_space<vmem>>, %arg2: memref<9x16x8xf32, #tpu.memory_space<vmem>>, %arg3: memref<16x1xf32, #tpu.memory_space<vmem>>, %arg4: memref<9x3x16xf32, #tpu.memory_space<vmem>>, %arg5: memref<3x1xf32, #tpu.memory_space<vmem>>, %arg6: memref<1x384xf32, #tpu.memory_space<vmem>>, %arg7: memref<3x384xf32, #tpu.memory_space<vmem>>, %arg8: memref<16x512xf32, #tpu.memory_space<vmem>>) attributes {dimension_semantics = [#tpu.dimension_semantics<parallel>], iteration_bounds = array<i64: 2>, scalar_prefetch = 0 : i64, scratch_operands = 1 : i64, tpu.core_type = #tpu.core_type<tc>, window_params = [{transform_indices = @transform_0, window_bounds = array<i64: 8, 384>}, {pipeline_mode = #tpu.pipeline_mode<synchronous>, transform_indices = @transform_1, window_bounds = array<i64: 9, 16, 8>}, {pipeline_mode = #tpu.pipeline_mode<synchronous>, transform_indices = @transform_2, window_bounds = array<i64: 16, 1>}, {pipeline_mode = #tpu.pipeline_mode<synchronous>, transform_indices = @transform_3, window_bounds = array<i64: 9, 3, 16>}, {pipeline_mode = #tpu.pipeline_mode<synchronous>, transform_indices = @transform_4, window_bounds = array<i64: 3, 1>}, {pipeline_mode = #tpu.pipeline_mode<synchronous>, transform_indices = @transform_5, window_bounds = array<i64: 1, 384>}, {transform_indices = @transform_6, window_bounds = array<i64: 3, 384>}]} {
    %c0 = arith.constant 0 : index
    %c0_0 = arith.constant 0 : index
    %0 = vector.load %arg1[%c0, %c0_0] : memref<8x384xf32, #tpu.memory_space<vmem>>, vector<8x384xf32>
    %c0_1 = arith.constant 0 : index
    %c0_2 = arith.constant 0 : index
    %c0_3 = arith.constant 0 : index
    %1 = vector.load %arg2[%c0_1, %c0_2, %c0_3] : memref<9x16x8xf32, #tpu.memory_space<vmem>>, vector<1x16x8xf32>
    %2 = vector.shape_cast %1 : vector<1x16x8xf32> to vector<16x8xf32>
    %cst = arith.constant dense<0.000000e+00> : vector<16x384xf32>
    %3 = tpu.matmul %2, %0, %cst {dimension_numbers = #tpu.dot_dimension_numbers<[1], [0], [0], [1], [0, 0, 1, 1], [], []>} : vector<16x8xf32>, vector<8x384xf32>, vector<16x384xf32> -> vector<16x384xf32>
    %c383_i32 = arith.constant 383 : i32
    %4 = tpu.dynamic_rotate %0 by %c383_i32 dim 1 : vector<8x384xf32>, i32 -> vector<8x384xf32>
    %c1 = arith.constant 1 : index
    %c0_4 = arith.constant 0 : index
    %c0_5 = arith.constant 0 : index
    %5 = vector.load %arg2[%c1, %c0_4, %c0_5] : memref<9x16x8xf32, #tpu.memory_space<vmem>>, vector<1x16x8xf32>
    %6 = vector.shape_cast %5 : vector<1x16x8xf32> to vector<16x8xf32>
    %cst_6 = arith.constant dense<0.000000e+00> : vector<16x384xf32>
    %7 = tpu.matmul %6, %4, %cst_6 {dimension_numbers = #tpu.dot_dimension_numbers<[1], [0], [0], [1], [0, 0, 1, 1], [], []>} : vector<16x8xf32>, vector<8x384xf32>, vector<16x384xf32> -> vector<16x384xf32>
    %8 = arith.addf %3, %7 : vector<16x384xf32>
    %c382_i32 = arith.constant 382 : i32
    %9 = tpu.dynamic_rotate %0 by %c382_i32 dim 1 : vector<8x384xf32>, i32 -> vector<8x384xf32>
    %c2 = arith.constant 2 : index
    %c0_7 = arith.constant 0 : index
    %c0_8 = arith.constant 0 : index
    %10 = vector.load %arg2[%c2, %c0_7, %c0_8] : memref<9x16x8xf32, #tpu.memory_space<vmem>>, vector<1x16x8xf32>
    %11 = vector.shape_cast %10 : vector<1x16x8xf32> to vector<16x8xf32>
    %cst_9 = arith.constant dense<0.000000e+00> : vector<16x384xf32>
    %12 = tpu.matmul %11, %9, %cst_9 {dimension_numbers = #tpu.dot_dimension_numbers<[1], [0], [0], [1], [0, 0, 1, 1], [], []>} : vector<16x8xf32>, vector<8x384xf32>, vector<16x384xf32> -> vector<16x384xf32>
    %13 = arith.addf %8, %12 : vector<16x384xf32>
    %c366_i32 = arith.constant 366 : i32
    %14 = tpu.dynamic_rotate %0 by %c366_i32 dim 1 : vector<8x384xf32>, i32 -> vector<8x384xf32>
    %c3 = arith.constant 3 : index
    %c0_10 = arith.constant 0 : index
    %c0_11 = arith.constant 0 : index
    %15 = vector.load %arg2[%c3, %c0_10, %c0_11] : memref<9x16x8xf32, #tpu.memory_space<vmem>>, vector<1x16x8xf32>
    %16 = vector.shape_cast %15 : vector<1x16x8xf32> to vector<16x8xf32>
    %cst_12 = arith.constant dense<0.000000e+00> : vector<16x384xf32>
    %17 = tpu.matmul %16, %14, %cst_12 {dimension_numbers = #tpu.dot_dimension_numbers<[1], [0], [0], [1], [0, 0, 1, 1], [], []>} : vector<16x8xf32>, vector<8x384xf32>, vector<16x384xf32> -> vector<16x384xf32>
    %18 = arith.addf %13, %17 : vector<16x384xf32>
    %c365_i32 = arith.constant 365 : i32
    %19 = tpu.dynamic_rotate %0 by %c365_i32 dim 1 : vector<8x384xf32>, i32 -> vector<8x384xf32>
    %c4 = arith.constant 4 : index
    %c0_13 = arith.constant 0 : index
    %c0_14 = arith.constant 0 : index
    %20 = vector.load %arg2[%c4, %c0_13, %c0_14] : memref<9x16x8xf32, #tpu.memory_space<vmem>>, vector<1x16x8xf32>
    %21 = vector.shape_cast %20 : vector<1x16x8xf32> to vector<16x8xf32>
    %cst_15 = arith.constant dense<0.000000e+00> : vector<16x384xf32>
    %22 = tpu.matmul %21, %19, %cst_15 {dimension_numbers = #tpu.dot_dimension_numbers<[1], [0], [0], [1], [0, 0, 1, 1], [], []>} : vector<16x8xf32>, vector<8x384xf32>, vector<16x384xf32> -> vector<16x384xf32>
    %23 = arith.addf %18, %22 : vector<16x384xf32>
    %c364_i32 = arith.constant 364 : i32
    %24 = tpu.dynamic_rotate %0 by %c364_i32 dim 1 : vector<8x384xf32>, i32 -> vector<8x384xf32>
    %c5 = arith.constant 5 : index
    %c0_16 = arith.constant 0 : index
    %c0_17 = arith.constant 0 : index
    %25 = vector.load %arg2[%c5, %c0_16, %c0_17] : memref<9x16x8xf32, #tpu.memory_space<vmem>>, vector<1x16x8xf32>
    %26 = vector.shape_cast %25 : vector<1x16x8xf32> to vector<16x8xf32>
    %cst_18 = arith.constant dense<0.000000e+00> : vector<16x384xf32>
    %27 = tpu.matmul %26, %24, %cst_18 {dimension_numbers = #tpu.dot_dimension_numbers<[1], [0], [0], [1], [0, 0, 1, 1], [], []>} : vector<16x8xf32>, vector<8x384xf32>, vector<16x384xf32> -> vector<16x384xf32>
    %28 = arith.addf %23, %27 : vector<16x384xf32>
    %c348_i32 = arith.constant 348 : i32
    %29 = tpu.dynamic_rotate %0 by %c348_i32 dim 1 : vector<8x384xf32>, i32 -> vector<8x384xf32>
    %c6 = arith.constant 6 : index
    %c0_19 = arith.constant 0 : index
    %c0_20 = arith.constant 0 : index
    %30 = vector.load %arg2[%c6, %c0_19, %c0_20] : memref<9x16x8xf32, #tpu.memory_space<vmem>>, vector<1x16x8xf32>
    %31 = vector.shape_cast %30 : vector<1x16x8xf32> to vector<16x8xf32>
    %cst_21 = arith.constant dense<0.000000e+00> : vector<16x384xf32>
    %32 = tpu.matmul %31, %29, %cst_21 {dimension_numbers = #tpu.dot_dimension_numbers<[1], [0], [0], [1], [0, 0, 1, 1], [], []>} : vector<16x8xf32>, vector<8x384xf32>, vector<16x384xf32> -> vector<16x384xf32>
    %33 = arith.addf %28, %32 : vector<16x384xf32>
    %c347_i32 = arith.constant 347 : i32
    %34 = tpu.dynamic_rotate %0 by %c347_i32 dim 1 : vector<8x384xf32>, i32 -> vector<8x384xf32>
    %c7 = arith.constant 7 : index
    %c0_22 = arith.constant 0 : index
    %c0_23 = arith.constant 0 : index
    %35 = vector.load %arg2[%c7, %c0_22, %c0_23] : memref<9x16x8xf32, #tpu.memory_space<vmem>>, vector<1x16x8xf32>
    %36 = vector.shape_cast %35 : vector<1x16x8xf32> to vector<16x8xf32>
    %cst_24 = arith.constant dense<0.000000e+00> : vector<16x384xf32>
    %37 = tpu.matmul %36, %34, %cst_24 {dimension_numbers = #tpu.dot_dimension_numbers<[1], [0], [0], [1], [0, 0, 1, 1], [], []>} : vector<16x8xf32>, vector<8x384xf32>, vector<16x384xf32> -> vector<16x384xf32>
    %38 = arith.addf %33, %37 : vector<16x384xf32>
    %c346_i32 = arith.constant 346 : i32
    %39 = tpu.dynamic_rotate %0 by %c346_i32 dim 1 : vector<8x384xf32>, i32 -> vector<8x384xf32>
    %c8 = arith.constant 8 : index
    %c0_25 = arith.constant 0 : index
    %c0_26 = arith.constant 0 : index
    %40 = vector.load %arg2[%c8, %c0_25, %c0_26] : memref<9x16x8xf32, #tpu.memory_space<vmem>>, vector<1x16x8xf32>
    %41 = vector.shape_cast %40 : vector<1x16x8xf32> to vector<16x8xf32>
    %cst_27 = arith.constant dense<0.000000e+00> : vector<16x384xf32>
    %42 = tpu.matmul %41, %39, %cst_27 {dimension_numbers = #tpu.dot_dimension_numbers<[1], [0], [0], [1], [0, 0, 1, 1], [], []>} : vector<16x8xf32>, vector<8x384xf32>, vector<16x384xf32> -> vector<16x384xf32>
    %43 = arith.addf %38, %42 : vector<16x384xf32>
    %c0_28 = arith.constant 0 : index
    %c0_29 = arith.constant 0 : index
    %44 = vector.load %arg3[%c0_28, %c0_29] : memref<16x1xf32, #tpu.memory_space<vmem>>, vector<16x1xf32>
    %45 = vector.broadcast %44 : vector<16x1xf32> to vector<16x384xf32>
    %46 = arith.addf %43, %45 : vector<16x384xf32>
    %cst_30 = arith.constant 0.000000e+00 : f32
    %47 = vector.broadcast %cst_30 : f32 to vector<16x384xf32>
    %48 = arith.maximumf %46, %47 : vector<16x384xf32>
    %c0_31 = arith.constant 0 : index
    %c0_32 = arith.constant 0 : index
    %49 = vector.load %arg6[%c0_31, %c0_32] : memref<1x384xf32, #tpu.memory_space<vmem>>, vector<1x384xf32>
    %50 = vector.broadcast %49 : vector<1x384xf32> to vector<16x384xf32>
    %51 = arith.mulf %48, %50 : vector<16x384xf32>
    %cst_33 = arith.constant 0.000000e+00 : f32
    %52 = vector.broadcast %cst_33 : f32 to vector<16x128xf32>
    %c0_34 = arith.constant 0 : index
    %c0_35 = arith.constant 0 : index
    %53 = vector.load %arg8[%c0_34, %c0_35] : memref<16x512xf32, #tpu.memory_space<vmem>>, vector<16x128xf32>
    tpu.vector_store %arg8[%c0_34, %c0_35], %52 {strides = array<i32>} : memref<16x512xf32, #tpu.memory_space<vmem>>, vector<16x128xf32>,
    %c0_36 = arith.constant 0 : index
    %c128 = arith.constant 128 : index
    %54 = vector.load %arg8[%c0_36, %c128] : memref<16x512xf32, #tpu.memory_space<vmem>>, vector<16x384xf32>
    tpu.vector_store %arg8[%c0_36, %c128], %51 {strides = array<i32>} : memref<16x512xf32, #tpu.memory_space<vmem>>, vector<16x384xf32>,
    %c0_37 = arith.constant 0 : index
    %c0_38 = arith.constant 0 : index
    %55 = vector.load %arg8[%c0_37, %c0_38] : memref<16x512xf32, #tpu.memory_space<vmem>>, vector<16x512xf32>
    %c403_i32 = arith.constant 403 : i32
    %56 = tpu.dynamic_rotate %55 by %c403_i32 dim 1 : vector<16x512xf32>, i32 -> vector<16x512xf32>
    %c0_39 = arith.constant 0 : index
    %c0_40 = arith.constant 0 : index
    %c0_41 = arith.constant 0 : index
    %57 = vector.load %arg4[%c0_39, %c0_40, %c0_41] : memref<9x3x16xf32, #tpu.memory_space<vmem>>, vector<1x3x16xf32>
    %58 = vector.shape_cast %57 : vector<1x3x16xf32> to vector<3x16xf32>
    %59 = vector.extract_strided_slice %56 {offsets = [0, 0], sizes = [16, 384], strides = [1, 1]} : vector<16x512xf32> to vector<16x384xf32>
    %cst_42 = arith.constant dense<0.000000e+00> : vector<3x384xf32>
    %60 = tpu.matmul %58, %59, %cst_42 {dimension_numbers = #tpu.dot_dimension_numbers<[1], [0], [0], [1], [0, 0, 1, 1], [], []>} : vector<3x16xf32>, vector<16x384xf32>, vector<3x384xf32> -> vector<3x384xf32>
    %c402_i32 = arith.constant 402 : i32
    %61 = tpu.dynamic_rotate %55 by %c402_i32 dim 1 : vector<16x512xf32>, i32 -> vector<16x512xf32>
    %c1_43 = arith.constant 1 : index
    %c0_44 = arith.constant 0 : index
    %c0_45 = arith.constant 0 : index
    %62 = vector.load %arg4[%c1_43, %c0_44, %c0_45] : memref<9x3x16xf32, #tpu.memory_space<vmem>>, vector<1x3x16xf32>
    %63 = vector.shape_cast %62 : vector<1x3x16xf32> to vector<3x16xf32>
    %64 = vector.extract_strided_slice %61 {offsets = [0, 0], sizes = [16, 384], strides = [1, 1]} : vector<16x512xf32> to vector<16x384xf32>
    %cst_46 = arith.constant dense<0.000000e+00> : vector<3x384xf32>
    %65 = tpu.matmul %63, %64, %cst_46 {dimension_numbers = #tpu.dot_dimension_numbers<[1], [0], [0], [1], [0, 0, 1, 1], [], []>} : vector<3x16xf32>, vector<16x384xf32>, vector<3x384xf32> -> vector<3x384xf32>
    %66 = arith.addf %60, %65 : vector<3x384xf32>
    %c401_i32 = arith.constant 401 : i32
    %67 = tpu.dynamic_rotate %55 by %c401_i32 dim 1 : vector<16x512xf32>, i32 -> vector<16x512xf32>
    %c2_47 = arith.constant 2 : index
    %c0_48 = arith.constant 0 : index
    %c0_49 = arith.constant 0 : index
    %68 = vector.load %arg4[%c2_47, %c0_48, %c0_49] : memref<9x3x16xf32, #tpu.memory_space<vmem>>, vector<1x3x16xf32>
    %69 = vector.shape_cast %68 : vector<1x3x16xf32> to vector<3x16xf32>
    %70 = vector.extract_strided_slice %67 {offsets = [0, 0], sizes = [16, 384], strides = [1, 1]} : vector<16x512xf32> to vector<16x384xf32>
    %cst_50 = arith.constant dense<0.000000e+00> : vector<3x384xf32>
    %71 = tpu.matmul %69, %70, %cst_50 {dimension_numbers = #tpu.dot_dimension_numbers<[1], [0], [0], [1], [0, 0, 1, 1], [], []>} : vector<3x16xf32>, vector<16x384xf32>, vector<3x384xf32> -> vector<3x384xf32>
    %72 = arith.addf %66, %71 : vector<3x384xf32>
    %c385_i32 = arith.constant 385 : i32
    %73 = tpu.dynamic_rotate %55 by %c385_i32 dim 1 : vector<16x512xf32>, i32 -> vector<16x512xf32>
    %c3_51 = arith.constant 3 : index
    %c0_52 = arith.constant 0 : index
    %c0_53 = arith.constant 0 : index
    %74 = vector.load %arg4[%c3_51, %c0_52, %c0_53] : memref<9x3x16xf32, #tpu.memory_space<vmem>>, vector<1x3x16xf32>
    %75 = vector.shape_cast %74 : vector<1x3x16xf32> to vector<3x16xf32>
    %76 = vector.extract_strided_slice %73 {offsets = [0, 0], sizes = [16, 384], strides = [1, 1]} : vector<16x512xf32> to vector<16x384xf32>
    %cst_54 = arith.constant dense<0.000000e+00> : vector<3x384xf32>
    %77 = tpu.matmul %75, %76, %cst_54 {dimension_numbers = #tpu.dot_dimension_numbers<[1], [0], [0], [1], [0, 0, 1, 1], [], []>} : vector<3x16xf32>, vector<16x384xf32>, vector<3x384xf32> -> vector<3x384xf32>
    %78 = arith.addf %72, %77 : vector<3x384xf32>
    %c384_i32 = arith.constant 384 : i32
    %79 = tpu.dynamic_rotate %55 by %c384_i32 dim 1 : vector<16x512xf32>, i32 -> vector<16x512xf32>
    %c4_55 = arith.constant 4 : index
    %c0_56 = arith.constant 0 : index
    %c0_57 = arith.constant 0 : index
    %80 = vector.load %arg4[%c4_55, %c0_56, %c0_57] : memref<9x3x16xf32, #tpu.memory_space<vmem>>, vector<1x3x16xf32>
    %81 = vector.shape_cast %80 : vector<1x3x16xf32> to vector<3x16xf32>
    %82 = vector.extract_strided_slice %79 {offsets = [0, 0], sizes = [16, 384], strides = [1, 1]} : vector<16x512xf32> to vector<16x384xf32>
    %cst_58 = arith.constant dense<0.000000e+00> : vector<3x384xf32>
    %83 = tpu.matmul %81, %82, %cst_58 {dimension_numbers = #tpu.dot_dimension_numbers<[1], [0], [0], [1], [0, 0, 1, 1], [], []>} : vector<3x16xf32>, vector<16x384xf32>, vector<3x384xf32> -> vector<3x384xf32>
    %84 = arith.addf %78, %83 : vector<3x384xf32>
    %c383_i32_59 = arith.constant 383 : i32
    %85 = tpu.dynamic_rotate %55 by %c383_i32_59 dim 1 : vector<16x512xf32>, i32 -> vector<16x512xf32>
    %c5_60 = arith.constant 5 : index
    %c0_61 = arith.constant 0 : index
    %c0_62 = arith.constant 0 : index
    %86 = vector.load %arg4[%c5_60, %c0_61, %c0_62] : memref<9x3x16xf32, #tpu.memory_space<vmem>>, vector<1x3x16xf32>
    %87 = vector.shape_cast %86 : vector<1x3x16xf32> to vector<3x16xf32>
    %88 = vector.extract_strided_slice %85 {offsets = [0, 0], sizes = [16, 384], strides = [1, 1]} : vector<16x512xf32> to vector<16x384xf32>
    %cst_63 = arith.constant dense<0.000000e+00> : vector<3x384xf32>
    %89 = tpu.matmul %87, %88, %cst_63 {dimension_numbers = #tpu.dot_dimension_numbers<[1], [0], [0], [1], [0, 0, 1, 1], [], []>} : vector<3x16xf32>, vector<16x384xf32>, vector<3x384xf32> -> vector<3x384xf32>
    %90 = arith.addf %84, %89 : vector<3x384xf32>
    %c367_i32 = arith.constant 367 : i32
    %91 = tpu.dynamic_rotate %55 by %c367_i32 dim 1 : vector<16x512xf32>, i32 -> vector<16x512xf32>
    %c6_64 = arith.constant 6 : index
    %c0_65 = arith.constant 0 : index
    %c0_66 = arith.constant 0 : index
    %92 = vector.load %arg4[%c6_64, %c0_65, %c0_66] : memref<9x3x16xf32, #tpu.memory_space<vmem>>, vector<1x3x16xf32>
    %93 = vector.shape_cast %92 : vector<1x3x16xf32> to vector<3x16xf32>
    %94 = vector.extract_strided_slice %91 {offsets = [0, 0], sizes = [16, 384], strides = [1, 1]} : vector<16x512xf32> to vector<16x384xf32>
    %cst_67 = arith.constant dense<0.000000e+00> : vector<3x384xf32>
    %95 = tpu.matmul %93, %94, %cst_67 {dimension_numbers = #tpu.dot_dimension_numbers<[1], [0], [0], [1], [0, 0, 1, 1], [], []>} : vector<3x16xf32>, vector<16x384xf32>, vector<3x384xf32> -> vector<3x384xf32>
    %96 = arith.addf %90, %95 : vector<3x384xf32>
    %c366_i32_68 = arith.constant 366 : i32
    %97 = tpu.dynamic_rotate %55 by %c366_i32_68 dim 1 : vector<16x512xf32>, i32 -> vector<16x512xf32>
    %c7_69 = arith.constant 7 : index
    %c0_70 = arith.constant 0 : index
    %c0_71 = arith.constant 0 : index
    %98 = vector.load %arg4[%c7_69, %c0_70, %c0_71] : memref<9x3x16xf32, #tpu.memory_space<vmem>>, vector<1x3x16xf32>
    %99 = vector.shape_cast %98 : vector<1x3x16xf32> to vector<3x16xf32>
    %100 = vector.extract_strided_slice %97 {offsets = [0, 0], sizes = [16, 384], strides = [1, 1]} : vector<16x512xf32> to vector<16x384xf32>
    %cst_72 = arith.constant dense<0.000000e+00> : vector<3x384xf32>
    %101 = tpu.matmul %99, %100, %cst_72 {dimension_numbers = #tpu.dot_dimension_numbers<[1], [0], [0], [1], [0, 0, 1, 1], [], []>} : vector<3x16xf32>, vector<16x384xf32>, vector<3x384xf32> -> vector<3x384xf32>
    %102 = arith.addf %96, %101 : vector<3x384xf32>
    %c365_i32_73 = arith.constant 365 : i32
    %103 = tpu.dynamic_rotate %55 by %c365_i32_73 dim 1 : vector<16x512xf32>, i32 -> vector<16x512xf32>
    %c8_74 = arith.constant 8 : index
    %c0_75 = arith.constant 0 : index
    %c0_76 = arith.constant 0 : index
    %104 = vector.load %arg4[%c8_74, %c0_75, %c0_76] : memref<9x3x16xf32, #tpu.memory_space<vmem>>, vector<1x3x16xf32>
    %105 = vector.shape_cast %104 : vector<1x3x16xf32> to vector<3x16xf32>
    %106 = vector.extract_strided_slice %103 {offsets = [0, 0], sizes = [16, 384], strides = [1, 1]} : vector<16x512xf32> to vector<16x384xf32>
    %cst_77 = arith.constant dense<0.000000e+00> : vector<3x384xf32>
    %107 = tpu.matmul %105, %106, %cst_77 {dimension_numbers = #tpu.dot_dimension_numbers<[1], [0], [0], [1], [0, 0, 1, 1], [], []>} : vector<3x16xf32>, vector<16x384xf32>, vector<3x384xf32> -> vector<3x384xf32>
    %108 = arith.addf %102, %107 : vector<3x384xf32>
    %c0_78 = arith.constant 0 : index
    %c0_79 = arith.constant 0 : index
    %109 = vector.load %arg5[%c0_78, %c0_79] : memref<3x1xf32, #tpu.memory_space<vmem>>, vector<3x1xf32>
    %110 = vector.broadcast %109 : vector<3x1xf32> to vector<3x384xf32>
    %111 = arith.addf %108, %110 : vector<3x384xf32>
    %c0_80 = arith.constant 0 : index
    %c0_81 = arith.constant 0 : index
    %112 = vector.load %arg7[%c0_80, %c0_81] : memref<3x384xf32, #tpu.memory_space<vmem>>, vector<3x384xf32>
    tpu.vector_store %arg7[%c0_80, %c0_81], %111 {strides = array<i32>} : memref<3x384xf32, #tpu.memory_space<vmem>>, vector<3x384xf32>,
    return
  }
  func.func @transform_0(%arg0: i32) -> (i32, i32) {
    %c0_i32 = arith.constant 0 : i32
    %c0_i32_0 = arith.constant 0 : i32
    return %c0_i32, %arg0 : i32, i32
  }
  func.func @transform_1(%arg0: i32) -> (i32, i32, i32) {
    %c0_i32 = arith.constant 0 : i32
    %c0_i32_0 = arith.constant 0 : i32
    %c0_i32_1 = arith.constant 0 : i32
    %c0_i32_2 = arith.constant 0 : i32
    return %c0_i32, %c0_i32_0, %c0_i32_1 : i32, i32, i32
  }
  func.func @transform_2(%arg0: i32) -> (i32, i32) {
    %c0_i32 = arith.constant 0 : i32
    %c0_i32_0 = arith.constant 0 : i32
    %c0_i32_1 = arith.constant 0 : i32
    return %c0_i32, %c0_i32_0 : i32, i32
  }
  func.func @transform_3(%arg0: i32) -> (i32, i32, i32) {
    %c0_i32 = arith.constant 0 : i32
    %c0_i32_0 = arith.constant 0 : i32
    %c0_i32_1 = arith.constant 0 : i32
    %c0_i32_2 = arith.constant 0 : i32
    return %c0_i32, %c0_i32_0, %c0_i32_1 : i32, i32, i32
  }
  func.func @transform_4(%arg0: i32) -> (i32, i32) {
    %c0_i32 = arith.constant 0 : i32
    %c0_i32_0 = arith.constant 0 : i32
    %c0_i32_1 = arith.constant 0 : i32
    return %c0_i32, %c0_i32_0 : i32, i32
  }
  func.func @transform_5(%arg0: i32) -> (i32, i32) {
    %c0_i32 = arith.constant 0 : i32
    %c0_i32_0 = arith.constant 0 : i32
    %c0_i32_1 = arith.constant 0 : i32
    return %c0_i32, %c0_i32_0 : i32, i32
  }
  func.func @transform_6(%arg0: i32) -> (i32, i32) {
    %c0_i32 = arith.constant 0 : i32
    %c0_i32_0 = arith.constant 0 : i32
    return %c0_i32, %arg0 : i32, i32
  }
}

</mosaic_0001>

<llo_original>
// kernel: no_blocks_model.1
$region0: #{no_blocks_model.1}
  #allocation0 [shape = 'u32[]', space=smem, size = 0x4, offset = 0x4, fixed_abs, tag = 'smem constant byte address 0x4 - core index']
  #allocation1 [shape = 'u32[144,128]{1,0:T(1,128)}', space=vmem, size = 0x12000, scoped, tag = 'internal scratch']
  #allocation2 [shape = 'f32[16,512]{1,0:T(8,128)}', space=vmem, size = 0x8000, scoped, tag = 'scratch operand']
  %s0 = inlined_call_operand.vmem [shape: f32[8,768], index: 0, kind: input, shape index: {}]
  %s1 = inlined_call_operand.vmem [shape: f32[9,16,8], index: 1, kind: input, shape index: {}]
  %s2 = inlined_call_operand.vmem [shape: f32[16,1], index: 2, kind: input, shape index: {}]
  %s3 = inlined_call_operand.vmem [shape: f32[9,3,16], index: 3, kind: input, shape index: {}]
  %s4 = inlined_call_operand.vmem [shape: f32[3,1], index: 4, kind: input, shape index: {}]
  %s5 = inlined_call_operand.vmem [shape: f32[1,384], index: 5, kind: input, shape index: {}]
  %s6 = inlined_call_operand.vmem [shape: f32[3,768], index: 6, kind: output, shape index: {}]
  %s7 = sld [smem:[#allocation0]]
  $region57: #{no_blocks_model.1} parent=0
    _
  %s9 = ssub.s32 1, %s7
  %s10 = scalar_select 0, %s9, %s7
  loop: start=0, step=1, limit=4
  $region2: #{no_blocks_model.1} parent=0 // loop_pre_header
    _
  $region3: #{no_blocks_model.1} parent=0 // loop_header
    %s12 = sphi 0, %s16
    %p13 = scmp.ge.s32.totalorder %s12, 4
    %s22 = sphi 0, %s24
    %s25 = sphi 0, %s22
    %s26 = sphi 0, %s25
    %s42 = sphi 0, %s26
    %s46 = sphi 0, %s46
    %s48 = sphi 0, %s46
    %s49 = sphi 0, %s48
    %s63 = sphi 0, %s49
    %s67 = sphi 0, %s67
    %s69 = sphi 0, %s67
    %s70 = sphi 0, %s69
    %s84 = sphi 0, %s70
    %s88 = sphi 0, %s88
    %s90 = sphi 0, %s88
    %s91 = sphi 0, %s90
    %s105 = sphi 0, %s91
    %s109 = sphi 0, %s109
    %s111 = sphi 0, %s109
    %s112 = sphi 0, %s111
    %s126 = sphi 0, %s112
    %s130 = sphi 0, %s130
    %s132 = sphi 0, %s130
    %s133 = sphi 0, %s132
    %s147 = sphi 0, %s133
    %s153 = sphi 0, %s155
    %s156 = sphi 0, %s153
    %s157 = sphi 0, %s156
    %s173 = sphi 0, %s157
  $region4: #{no_blocks_model.1} parent=0 // loop_header_branch
    %15 = sbr.rel (%p13) target = $region8
  $region5: #{no_blocks_model.1} parent=0 // loop_body
    %s17 = ssub.s32 %s12, 1
    %s18 = ssub.s32 %s12, 2
    %s19 = sadd.s32 %s12, 1
    %s20 = ssub.s32 %s12, %s19
    %p21 = scmp.eq.s32.totalorder %s20, 0
    %s23 = sadd.s32 %s22, 1
    %s24 = scalar_select %p21, %s22, %s23
    %p27 = pneg %p21
    %p28 = scmp.eq.s32.totalorder %s12, 1
    %p29 = por %p27, %p28
    %p30 = scmp.ne.s32.totalorder %s22, %s25
    %p31 = scmp.eq.s32.totalorder %s12, 0
    %p32 = por %p30, %p31
    %p33 = scmp.ne.s32.totalorder %s22, %s25
    %p34 = scmp.eq.s32.totalorder %s17, 1
    %p35 = por %p33, %p34
    %p36 = scmp.ne.s32.totalorder %s25, %s26
    %p37 = scmp.eq.s32.totalorder %s17, 0
    %p38 = por %p36, %p37
    %p39 = scmp.ne.s32.totalorder %s25, %s26
    %p40 = scmp.eq.s32.totalorder %s18, 1
    %p41 = por %p39, %p40
    %p43 = scmp.ne.s32.totalorder %s26, %s42
    %p44 = scmp.eq.s32.totalorder %s18, 0
    %p45 = por %p43, %p44
    %s47 = sadd.s32 %s46, 1
    %p50 = scmp.eq.s32.totalorder %s12, 1
    %p51 = scmp.ne.s32.totalorder %s46, %s48
    %p52 = scmp.eq.s32.totalorder %s12, 0
    %p53 = por %p51, %p52
    %p54 = scmp.ne.s32.totalorder %s46, %s48
    %p55 = scmp.eq.s32.totalorder %s17, 1
    %p56 = por %p54, %p55
    %p57 = scmp.ne.s32.totalorder %s48, %s49
    %p58 = scmp.eq.s32.totalorder %s17, 0
    %p59 = por %p57, %p58
    %p60 = scmp.ne.s32.totalorder %s48, %s49
    %p61 = scmp.eq.s32.totalorder %s18, 1
    %p62 = por %p60, %p61
    %p64 = scmp.ne.s32.totalorder %s49, %s63
    %p65 = scmp.eq.s32.totalorder %s18, 0
    %p66 = por %p64, %p65
    %s68 = sadd.s32 %s67, 1
    %p71 = scmp.eq.s32.totalorder %s12, 1
    %p72 = scmp.ne.s32.totalorder %s67, %s69
    %p73 = scmp.eq.s32.totalorder %s12, 0
    %p74 = por %p72, %p73
    %p75 = scmp.ne.s32.totalorder %s67, %s69
    %p76 = scmp.eq.s32.totalorder %s17, 1
    %p77 = por %p75, %p76
    %p78 = scmp.ne.s32.totalorder %s69, %s70
    %p79 = scmp.eq.s32.totalorder %s17, 0
    %p80 = por %p78, %p79
    %p81 = scmp.ne.s32.totalorder %s69, %s70
    %p82 = scmp.eq.s32.totalorder %s18, 1
    %p83 = por %p81, %p82
    %p85 = scmp.ne.s32.totalorder %s70, %s84
    %p86 = scmp.eq.s32.totalorder %s18, 0
    %p87 = por %p85, %p86
    %s89 = sadd.s32 %s88, 1
    %p92 = scmp.eq.s32.totalorder %s12, 1
    %p93 = scmp.ne.s32.totalorder %s88, %s90
    %p94 = scmp.eq.s32.totalorder %s12, 0
    %p95 = por %p93, %p94
    %p96 = scmp.ne.s32.totalorder %s88, %s90
    %p97 = scmp.eq.s32.totalorder %s17, 1
    %p98 = por %p96, %p97
    %p99 = scmp.ne.s32.totalorder %s90, %s91
    %p100 = scmp.eq.s32.totalorder %s17, 0
    %p101 = por %p99, %p100
    %p102 = scmp.ne.s32.totalorder %s90, %s91
    %p103 = scmp.eq.s32.totalorder %s18, 1
    %p104 = por %p102, %p103
    %p106 = scmp.ne.s32.totalorder %s91, %s105
    %p107 = scmp.eq.s32.totalorder %s18, 0
    %p108 = por %p106, %p107
    %s110 = sadd.s32 %s109, 1
    %p113 = scmp.eq.s32.totalorder %s12, 1
    %p114 = scmp.ne.s32.totalorder %s109, %s111
    %p115 = scmp.eq.s32.totalorder %s12, 0
    %p116 = por %p114, %p115
    %p117 = scmp.ne.s32.totalorder %s109, %s111
    %p118 = scmp.eq.s32.totalorder %s17, 1
    %p119 = por %p117, %p118
    %p120 = scmp.ne.s32.totalorder %s111, %s112
    %p121 = scmp.eq.s32.totalorder %s17, 0
    %p122 = por %p120, %p121
    %p123 = scmp.ne.s32.totalorder %s111, %s112
    %p124 = scmp.eq.s32.totalorder %s18, 1
    %p125 = por %p123, %p124
    %p127 = scmp.ne.s32.totalorder %s112, %s126
    %p128 = scmp.eq.s32.totalorder %s18, 0
    %p129 = por %p127, %p128
    %s131 = sadd.s32 %s130, 1
    %p134 = scmp.eq.s32.totalorder %s12, 1
    %p135 = scmp.ne.s32.totalorder %s130, %s132
    %p136 = scmp.eq.s32.totalorder %s12, 0
    %p137 = por %p135, %p136
    %p138 = scmp.ne.s32.totalorder %s130, %s132
    %p139 = scmp.eq.s32.totalorder %s17, 1
    %p140 = por %p138, %p139
    %p141 = scmp.ne.s32.totalorder %s132, %s133
    %p142 = scmp.eq.s32.totalorder %s17, 0
    %p143 = por %p141, %p142
    %p144 = scmp.ne.s32.totalorder %s132, %s133
    %p145 = scmp.eq.s32.totalorder %s18, 1
    %p146 = por %p144, %p145
    %p148 = scmp.ne.s32.totalorder %s133, %s147
    %p149 = scmp.eq.s32.totalorder %s18, 0
    %p150 = por %p148, %p149
    %s151 = ssub.s32 %s12, %s19
    %p152 = scmp.eq.s32.totalorder %s151, 0
    %s154 = sadd.s32 %s153, 1
    %s155 = scalar_select %p152, %s153, %s154
    %p158 = pneg %p152
    %p159 = scmp.eq.s32.totalorder %s12, 1
    %p160 = por %p158, %p159
    %p161 = scmp.ne.s32.totalorder %s153, %s156
    %p162 = scmp.eq.s32.totalorder %s12, 0
    %p163 = por %p161, %p162
    %p164 = scmp.ne.s32.totalorder %s153, %s156
    %p165 = scmp.eq.s32.totalorder %s17, 1
    %p166 = por %p164, %p165
    %p167 = scmp.ne.s32.totalorder %s156, %s157
    %p168 = scmp.eq.s32.totalorder %s17, 0
    %p169 = por %p167, %p168
    %p170 = scmp.ne.s32.totalorder %s156, %s157
    %p171 = scmp.eq.s32.totalorder %s18, 1
    %p172 = por %p170, %p171
    %p174 = scmp.ne.s32.totalorder %s157, %s173
    %p175 = scmp.eq.s32.totalorder %s18, 0
    %p176 = por %p174, %p175
    %p177 = scmp.le.s32.totalorder 1, %s12
    %p178 = scmp.lt.s32.totalorder %s12, 3
    %p179 = pnand %p177, %p178
    %p180 = pneg %p179
    // Predicated region
    $region9: #{no_blocks_model.1} parent=5 // pred_check
      _
    $region10: #{no_blocks_model.1} parent=5 // pred_check_branch
      %182 = sbr.rel (%p179) target = $region12
    $region11: #{no_blocks_model.1} parent=5 // pred_region
      %s183 = ssub.s32 %s12, 1
      // Predicated region
      $region13: #{no_blocks_model.1} parent=11 // pred_check
        %p184 = pneg %p59
      $region14: #{no_blocks_model.1} parent=11 // pred_check_branch
        %186 = sbr.rel (%p184) target = $region16
      $region15: #{no_blocks_model.1} parent=11 // pred_region
        _
      $region16: #{no_blocks_model.1} parent=11 // pred_fallthru
        _
      // Predicated region
      $region17: #{no_blocks_model.1} parent=11 // pred_check
        %p187 = pneg %p80
      $region18: #{no_blocks_model.1} parent=11 // pred_check_branch
        %189 = sbr.rel (%p187) target = $region20
      $region19: #{no_blocks_model.1} parent=11 // pred_region
        _
      $region20: #{no_blocks_model.1} parent=11 // pred_fallthru
        _
      // Predicated region
      $region21: #{no_blocks_model.1} parent=11 // pred_check
        %p190 = pneg %p101
      $region22: #{no_blocks_model.1} parent=11 // pred_check_branch
        %192 = sbr.rel (%p190) target = $region24
      $region23: #{no_blocks_model.1} parent=11 // pred_region
        _
      $region24: #{no_blocks_model.1} parent=11 // pred_fallthru
        _
      // Predicated region
      $region25: #{no_blocks_model.1} parent=11 // pred_check
        %p193 = pneg %p122
      $region26: #{no_blocks_model.1} parent=11 // pred_check_branch
        %195 = sbr.rel (%p193) target = $region28
      $region27: #{no_blocks_model.1} parent=11 // pred_region
        _
      $region28: #{no_blocks_model.1} parent=11 // pred_fallthru
        _
      // Predicated region
      $region29: #{no_blocks_model.1} parent=11 // pred_check
        %p196 = pneg %p143
      $region30: #{no_blocks_model.1} parent=11 // pred_check_branch
        %198 = sbr.rel (%p196) target = $region32
      $region31: #{no_blocks_model.1} parent=11 // pred_region
        _
      $region32: #{no_blocks_model.1} parent=11 // pred_fallthru
        _
    $region12: #{no_blocks_model.1} parent=5 // pred_fallthru
      _
    %p199 = scmp.lt.s32.totalorder %s12, 2
    // Predicated region
    $region33: #{no_blocks_model.1} parent=5 // pred_check
      %p200 = pneg %p199
    $region34: #{no_blocks_model.1} parent=5 // pred_check_branch
      %202 = sbr.rel (%p200) target = $region36
    $region35: #{no_blocks_model.1} parent=5 // pred_region
      // Predicated region
      $region37: #{no_blocks_model.1} parent=35 // pred_check
        %p203 = pneg %p32
      $region38: #{no_blocks_model.1} parent=35 // pred_check_branch
        %205 = sbr.rel (%p203) target = $region40
      $region39: #{no_blocks_model.1} parent=35 // pred_region
        %s206 = smul.u32 3, %s12
        %p207 = scmp.lt.s32.totalorder %s206, 5
        %s208 = scalar_select %p207, %s206, 5
        %s209 = smul.addr %s208, 8
        %s210 = scalar_lea.vmem %s0, %s209
        %s211 = smul.u32 3, %s12
      $region40: #{no_blocks_model.1} parent=35 // pred_fallthru
        _
    $region36: #{no_blocks_model.1} parent=5 // pred_fallthru
      _
    %p212 = scmp.le.s32.totalorder 1, %s12
    %p213 = scmp.lt.s32.totalorder %s12, 3
    %p214 = pnand %p212, %p213
    %p215 = pneg %p214
    // Predicated region
    $region41: #{no_blocks_model.1} parent=5 // pred_check
      _
    $region42: #{no_blocks_model.1} parent=5 // pred_check_branch
      %217 = sbr.rel (%p214) target = $region44
    $region43: #{no_blocks_model.1} parent=5 // pred_region
      %s218 = ssub.s32 %s12, 1
      %s219 = smul.u32 3, %s17
      %p220 = scmp.lt.s32.totalorder %s219, 5
      %s221 = scalar_select %p220, %s219, 5
      %s222 = smul.addr %s221, 8
      %s223 = scalar_lea.vmem %s0, %s222
      %p224 = pneg %p38
      %p225 = pneg %p35
      %p226 = pneg %p59
      %p227 = pneg %p56
      %p228 = pneg %p80
      %p229 = pneg %p77
      %p230 = pneg %p101
      %p231 = pneg %p98
      %p232 = pneg %p122
      %p233 = pneg %p119
      %p234 = pneg %p143
      %p235 = pneg %p140
      %p236 = pneg %p169
      %p237 = pneg %p166
      %s238 = smul.u32 3, %s17
      %p239 = scmp.lt.s32.totalorder %s238, 5
      %s240 = scalar_select %p239, %s238, 5
      %s241 = smul.addr %s240, 4
      %s242 = scalar_lea.vmem %s6, %s241
      %s243 = smul.u32 3, %s17
      %p244 = scmp.lt.s32.totalorder %s243, 5
      %s245 = scalar_select %p244, %s243, 5
      %s246 = smul.addr %s245, 8
      %s247 = scalar_lea.vmem %s0, %s246
      %s248 = smul.u32 3, %s17
      %s249 = smul.u32 3, %s17
      %p250 = scmp.lt.s32.totalorder %s249, 5
      %s251 = scalar_select %p250, %s249, 5
      %s252 = smul.addr %s251, 4
      %s253 = scalar_lea.vmem %s6, %s252
      %s254 = smul.u32 3, %s17
      %v255 = vld [vmem:[%s247] sm:$0xff]
      %v256 = vld [vmem:[%s247 + $0x8] sm:$0xff]
      %v257 = vld [vmem:[%s247 + $0x10] sm:$0xff]
      %v258 = vld [vmem:[%s1] sm:$0xff]
      %v259 = vld [vmem:[%s1 + $0x8] sm:$0xff]
      %260 = vrot.lane.b32.xlu0 %v255, 127
      %v261 = vpop.permute.xlu0 %260
      %262 = vrot.lane.b32.xlu0 %v256, 127
      %v263 = vpop.permute.xlu0 %262
      %264 = vrot.lane.b32.xlu0 %v257, 127
      %v265 = vpop.permute.xlu0 %264
      %v266 = vlaneseq
      %v267 = vand.u32 %v266, 127
      %vm268 = vcmp.lt.s32.totalorder %v267, 127
      %v269 = vsel %vm268, %v263, %v265
      %v270 = vsel %vm268, %v261, %v263
      %v271 = vsel %vm268, %v265, %v261
      %s272 = scalar_lea.vmem %s1, 16
      %v273 = vld [vmem:[%s272] sm:$0xff]
      %v274 = vld [vmem:[%s272 + $0x8] sm:$0xff]
      %vm275 = vcmask 64512
      %v277 = vsel %vm275, %v273, 0
      %v280 = vsel %vm275, %v274, 0
      %282 = vmatprep.subr.mxu0 %v269
      %283 = vmatpush1.msra.mxu0 %v270
      %284 = vmatprep.subr.mxu0 0.0
      %285 = vmatpush1.msra.mxu0 0.0
      %286 = vmatprep.subr.mxu0 0.0
      %287 = vmatpush1.msra.mxu0 0.0
      %288 = vmatprep.subr.mxu0 0.0
      %289 = vmatpush1.msra.mxu0 0.0
      %290 = vmatprep.subr.mxu0 0.0
      %291 = vmatpush1.msra.mxu0 0.0
      %292 = vmatprep.subr.mxu0 0.0
      %293 = vmatpush1.msra.mxu0 0.0
      %294 = vmatprep.subr.mxu0 0.0
      %295 = vmatpush1.msra.mxu0 0.0
      %296 = vmatprep.subr.mxu0 0.0
      %297 = vmatpush1.msra.mxu0 0.0
      %298 = vmatprep.subr.mxu0 0.0
      %299 = vmatpush1.msra.mxu0 0.0
      %300 = vmatprep.subr.mxu0 0.0
      %301 = vmatpush1.msra.mxu0 0.0
      %302 = vmatprep.subr.mxu0 0.0
      %303 = vmatpush1.msra.mxu0 0.0
      %304 = vmatprep.subr.mxu0 0.0
      %305 = vmatpush1.msra.mxu0 0.0
      %306 = vmatprep.subr.mxu0 0.0
      %307 = vmatpush1.msra.mxu0 0.0
      %308 = vmatprep.subr.mxu0 0.0
      %309 = vmatpush1.msra.mxu0 0.0
      %310 = vmatprep.subr.mxu0 0.0
      %311 = vmatpush1.msra.mxu0 0.0
      %312 = vmatprep.subr.mxu0 0.0
      %313 = vmatpush1.msra.mxu0 0.0
      %314 = vmatprep.subr.mxu0 0.0
      %315 = vmatpush1.msra.mxu0 0.0
      %316 = vmatprep.subr.mxu0 0.0
      %317 = vmatpush1.msra.mxu0 0.0
      %318 = vmatprep.subr.mxu0 0.0
      %319 = vmatpush1.msra.mxu0 0.0
      %320 = vmatprep.subr.mxu0 0.0
      %321 = vmatpush1.msra.mxu0 0.0
      %322 = vmatprep.subr.mxu0 0.0
      %323 = vmatpush1.msra.mxu0 0.0
      %324 = vmatprep.subr.mxu0 0.0
      %325 = vmatpush1.msra.mxu0 0.0
      %326 = vmatprep.subr.mxu0 0.0
      %327 = vmatpush1.msra.mxu0 0.0
      %328 = vmatprep.subr.mxu0 0.0
      %329 = vmatpush1.msra.mxu0 0.0
      %330 = vmatprep.subr.mxu0 0.0
      %331 = vmatpush1.msra.mxu0 0.0
      %332 = vmatprep.subr.mxu0 0.0
      %333 = vmatpush1.msra.mxu0 0.0
      %334 = vmatprep.subr.mxu0 0.0
      %335 = vmatpush1.msra.mxu0 0.0
      %336 = vmatprep.subr.mxu0 0.0
      %337 = vmatpush1.msra.mxu0 0.0
      %338 = vmatprep.subr.mxu0 0.0
      %339 = vmatpush1.msra.mxu0 0.0
      %340 = vmatprep.subr.mxu0 0.0
      %341 = vmatpush1.msra.mxu0 0.0
      %342 = vmatprep.subr.mxu0 0.0
      %343 = vmatpush1.msra.mxu0 0.0
      %344 = vmatprep.subr.mxu0 0.0
      %345 = vmatpush1.msra.mxu0 0.0
      %346 = vmatprep.mubr.f32.mxu0 0.0
      %347 = vmatmul.mubr.f32.gmra.mrb[0].mxu0 %v277
      %v348 = vpop.f32.mrb[0].mxu0
      %v349 = vadd.f32 0.0, %v348
      %v350 = vpop.f32.mrb[0].mxu0
      %v351 = vadd.f32 0.0, %v350
      %352 = vmatprep.mubr.f32.mxu0 0.0
      %353 = vmatmul.mubr.f32.gmra.mrb[0].mxu0 %v280
      %v354 = vpop.f32.mrb[0].mxu0
      %v355 = vadd.f32 0.0, %v354
      %v356 = vpop.f32.mrb[0].mxu0
      %v357 = vadd.f32 0.0, %v356
      %358 = vdwg.mxu0
      %359 = vmatprep.subr.mxu0 0.0
      %360 = vmatpush1.msra.mxu0 %v271
      %361 = vmatprep.subr.mxu0 0.0
      %362 = vmatpush1.msra.mxu0 0.0
      %363 = vmatprep.subr.mxu0 0.0
      %364 = vmatpush1.msra.mxu0 0.0
      %365 = vmatprep.subr.mxu0 0.0
      %366 = vmatpush1.msra.mxu0 0.0
      %367 = vmatprep.subr.mxu0 0.0
      %368 = vmatpush1.msra.mxu0 0.0
      %369 = vmatprep.subr.mxu0 0.0
      %370 = vmatpush1.msra.mxu0 0.0
      %371 = vmatprep.subr.mxu0 0.0
      %372 = vmatpush1.msra.mxu0 0.0
      %373 = vmatprep.subr.mxu0 0.0
      %374 = vmatpush1.msra.mxu0 0.0
      %375 = vmatprep.subr.mxu0 0.0
      %376 = vmatpush1.msra.mxu0 0.0
      %377 = vmatprep.subr.mxu0 0.0
      %378 = vmatpush1.msra.mxu0 0.0
      %379 = vmatprep.subr.mxu0 0.0
      %380 = vmatpush1.msra.mxu0 0.0
      %381 = vmatprep.subr.mxu0 0.0
      %382 = vmatpush1.msra.mxu0 0.0
      %383 = vmatprep.subr.mxu0 0.0
      %384 = vmatpush1.msra.mxu0 0.0
      %385 = vmatprep.subr.mxu0 0.0
      %386 = vmatpush1.msra.mxu0 0.0
      %387 = vmatprep.subr.mxu0 0.0
      %388 = vmatpush1.msra.mxu0 0.0
      %389 = vmatprep.subr.mxu0 0.0
      %390 = vmatpush1.msra.mxu0 0.0
      %391 = vmatprep.subr.mxu0 0.0
      %392 = vmatpush1.msra.mxu0 0.0
      %393 = vmatprep.subr.mxu0 0.0
      %394 = vmatpush1.msra.mxu0 0.0
      %395 = vmatprep.subr.mxu0 0.0
      %396 = vmatpush1.msra.mxu0 0.0
      %397 = vmatprep.subr.mxu0 0.0
      %398 = vmatpush1.msra.mxu0 0.0
      %399 = vmatprep.subr.mxu0 0.0
      %400 = vmatpush1.msra.mxu0 0.0
      %401 = vmatprep.subr.mxu0 0.0
      %402 = vmatpush1.msra.mxu0 0.0
      %403 = vmatprep.subr.mxu0 0.0
      %404 = vmatpush1.msra.mxu0 0.0
      %405 = vmatprep.subr.mxu0 0.0
      %406 = vmatpush1.msra.mxu0 0.0
      %407 = vmatprep.subr.mxu0 0.0
      %408 = vmatpush1.msra.mxu0 0.0
      %409 = vmatprep.subr.mxu0 0.0
      %410 = vmatpush1.msra.mxu0 0.0
      %411 = vmatprep.subr.mxu0 0.0
      %412 = vmatpush1.msra.mxu0 0.0
      %413 = vmatprep.subr.mxu0 0.0
      %414 = vmatpush1.msra.mxu0 0.0
      %415 = vmatprep.subr.mxu0 0.0
      %416 = vmatpush1.msra.mxu0 0.0
      %417 = vmatprep.subr.mxu0 0.0
      %418 = vmatpush1.msra.mxu0 0.0
      %419 = vmatprep.subr.mxu0 0.0
      %420 = vmatpush1.msra.mxu0 0.0
      %421 = vmatprep.subr.mxu0 0.0
      %422 = vmatpush1.msra.mxu0 0.0
      %423 = vmatprep.mubr.f32.mxu0 0.0
      %424 = vmatmul.mubr.f32.gmra.mrb[0].mxu0 %v277
      %v425 = vpop.f32.mrb[0].mxu0
      %v426 = vadd.f32 0.0, %v425
      %v427 = vpop.f32.mrb[0].mxu0
      %428 = vmatprep.mubr.f32.mxu0 0.0
      %429 = vmatmul.mubr.f32.gmra.mrb[0].mxu0 %v280
      %v430 = vpop.f32.mrb[0].mxu0
      %v431 = vadd.f32 0.0, %v430
      %v432 = vpop.f32.mrb[0].mxu0
      %433 = vdwg.mxu0
      %v435 = vsel %vm275, %v258, 0
      %v438 = vsel %vm275, %v259, 0
      %440 = vmatprep.subr.mxu0 %v256
      %441 = vmatpush1.msra.mxu0 %v255
      %442 = vmatprep.subr.mxu0 0.0
      %443 = vmatpush1.msra.mxu0 0.0
      %444 = vmatprep.subr.mxu0 0.0
      %445 = vmatpush1.msra.mxu0 0.0
      %446 = vmatprep.subr.mxu0 0.0
      %447 = vmatpush1.msra.mxu0 0.0
      %448 = vmatprep.subr.mxu0 0.0
      %449 = vmatpush1.msra.mxu0 0.0
      %450 = vmatprep.subr.mxu0 0.0
      %451 = vmatpush1.msra.mxu0 0.0
      %452 = vmatprep.subr.mxu0 0.0
      %453 = vmatpush1.msra.mxu0 0.0
      %454 = vmatprep.subr.mxu0 0.0
      %455 = vmatpush1.msra.mxu0 0.0
      %456 = vmatprep.subr.mxu0 0.0
      %457 = vmatpush1.msra.mxu0 0.0
      %458 = vmatprep.subr.mxu0 0.0
      %459 = vmatpush1.msra.mxu0 0.0
      %460 = vmatprep.subr.mxu0 0.0
      %461 = vmatpush1.msra.mxu0 0.0
      %462 = vmatprep.subr.mxu0 0.0
      %463 = vmatpush1.msra.mxu0 0.0
      %464 = vmatprep.subr.mxu0 0.0
      %465 = vmatpush1.msra.mxu0 0.0
      %466 = vmatprep.subr.mxu0 0.0
      %467 = vmatpush1.msra.mxu0 0.0
      %468 = vmatprep.subr.mxu0 0.0
      %469 = vmatpush1.msra.mxu0 0.0
      %470 = vmatprep.subr.mxu0 0.0
      %471 = vmatpush1.msra.mxu0 0.0
      %472 = vmatprep.subr.mxu0 0.0
      %473 = vmatpush1.msra.mxu0 0.0
      %474 = vmatprep.subr.mxu0 0.0
      %475 = vmatpush1.msra.mxu0 0.0
      %476 = vmatprep.subr.mxu0 0.0
      %477 = vmatpush1.msra.mxu0 0.0
      %478 = vmatprep.subr.mxu0 0.0
      %479 = vmatpush1.msra.mxu0 0.0
      %480 = vmatprep.subr.mxu0 0.0
      %481 = vmatpush1.msra.mxu0 0.0
      %482 = vmatprep.subr.mxu0 0.0
      %483 = vmatpush1.msra.mxu0 0.0
      %484 = vmatprep.subr.mxu0 0.0
      %485 = vmatpush1.msra.mxu0 0.0
      %486 = vmatprep.subr.mxu0 0.0
      %487 = vmatpush1.msra.mxu0 0.0
      %488 = vmatprep.subr.mxu0 0.0
      %489 = vmatpush1.msra.mxu0 0.0
      %490 = vmatprep.subr.mxu0 0.0
      %491 = vmatpush1.msra.mxu0 0.0
      %492 = vmatprep.subr.mxu0 0.0
      %493 = vmatpush1.msra.mxu0 0.0
      %494 = vmatprep.subr.mxu0 0.0
      %495 = vmatpush1.msra.mxu0 0.0
      %496 = vmatprep.subr.mxu0 0.0
      %497 = vmatpush1.msra.mxu0 0.0
      %498 = vmatprep.subr.mxu0 0.0
      %499 = vmatpush1.msra.mxu0 0.0
      %500 = vmatprep.subr.mxu0 0.0
      %501 = vmatpush1.msra.mxu0 0.0
      %502 = vmatprep.subr.mxu0 0.0
      %503 = vmatpush1.msra.mxu0 0.0
      %504 = vmatprep.mubr.f32.mxu0 0.0
      %505 = vmatmul.mubr.f32.gmra.mrb[0].mxu0 %v435
      %v506 = vpop.f32.mrb[0].mxu0
      %v507 = vadd.f32 %v349, %v506
      %v508 = vpop.f32.mrb[0].mxu0
      %v509 = vadd.f32 %v351, %v508
      %510 = vmatprep.mubr.f32.mxu0 0.0
      %511 = vmatmul.mubr.f32.gmra.mrb[0].mxu0 %v438
      %v512 = vpop.f32.mrb[0].mxu0
      %v513 = vadd.f32 %v355, %v512
      %v514 = vpop.f32.mrb[0].mxu0
      %v515 = vadd.f32 %v357, %v514
      %516 = vdwg.mxu0
      %517 = vmatprep.subr.mxu0 0.0
      %518 = vmatpush1.msra.mxu0 %v257
      %519 = vmatprep.subr.mxu0 0.0
      %520 = vmatpush1.msra.mxu0 0.0
      %521 = vmatprep.subr.mxu0 0.0
      %522 = vmatpush1.msra.mxu0 0.0
      %523 = vmatprep.subr.mxu0 0.0
      %524 = vmatpush1.msra.mxu0 0.0
      %525 = vmatprep.subr.mxu0 0.0
      %526 = vmatpush1.msra.mxu0 0.0
      %527 = vmatprep.subr.mxu0 0.0
      %528 = vmatpush1.msra.mxu0 0.0
      %529 = vmatprep.subr.mxu0 0.0
      %530 = vmatpush1.msra.mxu0 0.0
      %531 = vmatprep.subr.mxu0 0.0
      %532 = vmatpush1.msra.mxu0 0.0
      %533 = vmatprep.subr.mxu0 0.0
      %534 = vmatpush1.msra.mxu0 0.0
      %535 = vmatprep.subr.mxu0 0.0
      %536 = vmatpush1.msra.mxu0 0.0
      %537 = vmatprep.subr.mxu0 0.0
      %538 = vmatpush1.msra.mxu0 0.0
      %539 = vmatprep.subr.mxu0 0.0
      %540 = vmatpush1.msra.mxu0 0.0
      %541 = vmatprep.subr.mxu0 0.0
      %542 = vmatpush1.msra.mxu0 0.0
      %543 = vmatprep.subr.mxu0 0.0
      %544 = vmatpush1.msra.mxu0 0.0
      %545 = vmatprep.subr.mxu0 0.0
      %546 = vmatpush1.msra.mxu0 0.0
      %547 = vmatprep.subr.mxu0 0.0
      %548 = vmatpush1.msra.mxu0 0.0
      %549 = vmatprep.subr.mxu0 0.0
      %550 = vmatpush1.msra.mxu0 0.0
      %551 = vmatprep.subr.mxu0 0.0
      %552 = vmatpush1.msra.mxu0 0.0
      %553 = vmatprep.subr.mxu0 0.0
      %554 = vmatpush1.msra.mxu0 0.0
      %555 = vmatprep.subr.mxu0 0.0
      %556 = vmatpush1.msra.mxu0 0.0
      %557 = vmatprep.subr.mxu0 0.0
      %558 = vmatpush1.msra.mxu0 0.0
      %559 = vmatprep.subr.mxu0 0.0
      %560 = vmatpush1.msra.mxu0 0.0
      %561 = vmatprep.subr.mxu0 0.0
      %562 = vmatpush1.msra.mxu0 0.0
      %563 = vmatprep.subr.mxu0 0.0
      %564 = vmatpush1.msra.mxu0 0.0
      %565 = vmatprep.subr.mxu0 0.0
      %566 = vmatpush1.msra.mxu0 0.0
      %567 = vmatprep.subr.mxu0 0.0
      %568 = vmatpush1.msra.mxu0 0.0
      %569 = vmatprep.subr.mxu0 0.0
      %570 = vmatpush1.msra.mxu0 0.0
      %571 = vmatprep.subr.mxu0 0.0
      %572 = vmatpush1.msra.mxu0 0.0
      %573 = vmatprep.subr.mxu0 0.0
      %574 = vmatpush1.msra.mxu0 0.0
      %575 = vmatprep.subr.mxu0 0.0
      %576 = vmatpush1.msra.mxu0 0.0
      %577 = vmatprep.subr.mxu0 0.0
      %578 = vmatpush1.msra.mxu0 0.0
      %579 = vmatprep.subr.mxu0 0.0
      %580 = vmatpush1.msra.mxu0 0.0
      %581 = vmatprep.mubr.f32.mxu0 0.0
      %582 = vmatmul.mubr.f32.gmra.mrb[0].mxu0 %v435
      %v583 = vpop.f32.mrb[0].mxu0
      %v584 = vadd.f32 %v426, %v583
      %v585 = vpop.f32.mrb[0].mxu0
      %586 = vmatprep.mubr.f32.mxu0 0.0
      %587 = vmatmul.mubr.f32.gmra.mrb[0].mxu0 %v438
      %v588 = vpop.f32.mrb[0].mxu0
      %v589 = vadd.f32 %v431, %v588
      %v590 = vpop.f32.mrb[0].mxu0
      %591 = vdwg.mxu0
      %592 = vrot.lane.b32.xlu0 %v255, 126
      %v593 = vpop.permute.xlu0 %592
      %594 = vrot.lane.b32.xlu0 %v256, 126
      %v595 = vpop.permute.xlu0 %594
      %596 = vrot.lane.b32.xlu0 %v257, 126
      %v597 = vpop.permute.xlu0 %596
      %vm598 = vcmp.lt.s32.totalorder %v267, 126
      %v599 = vsel %vm598, %v595, %v597
      %v600 = vsel %vm598, %v593, %v595
      %v601 = vsel %vm598, %v597, %v593
      %s602 = scalar_lea.vmem %s1, 32
      %v603 = vld [vmem:[%s602] sm:$0xff]
      %v604 = vld [vmem:[%s602 + $0x8] sm:$0xff]
      %v606 = vsel %vm275, %v603, 0
      %v609 = vsel %vm275, %v604, 0
      %611 = vmatprep.subr.mxu0 %v599
      %612 = vmatpush1.msra.mxu0 %v600
      %613 = vmatprep.subr.mxu0 0.0
      %614 = vmatpush1.msra.mxu0 0.0
      %615 = vmatprep.subr.mxu0 0.0
      %616 = vmatpush1.msra.mxu0 0.0
      %617 = vmatprep.subr.mxu0 0.0
      %618 = vmatpush1.msra.mxu0 0.0
      %619 = vmatprep.subr.mxu0 0.0
      %620 = vmatpush1.msra.mxu0 0.0
      %621 = vmatprep.subr.mxu0 0.0
      %622 = vmatpush1.msra.mxu0 0.0
      %623 = vmatprep.subr.mxu0 0.0
      %624 = vmatpush1.msra.mxu0 0.0
      %625 = vmatprep.subr.mxu0 0.0
      %626 = vmatpush1.msra.mxu0 0.0
      %627 = vmatprep.subr.mxu0 0.0
      %628 = vmatpush1.msra.mxu0 0.0
      %629 = vmatprep.subr.mxu0 0.0
      %630 = vmatpush1.msra.mxu0 0.0
      %631 = vmatprep.subr.mxu0 0.0
      %632 = vmatpush1.msra.mxu0 0.0
      %633 = vmatprep.subr.mxu0 0.0
      %634 = vmatpush1.msra.mxu0 0.0
      %635 = vmatprep.subr.mxu0 0.0
      %636 = vmatpush1.msra.mxu0 0.0
      %637 = vmatprep.subr.mxu0 0.0
      %638 = vmatpush1.msra.mxu0 0.0
      %639 = vmatprep.subr.mxu0 0.0
      %640 = vmatpush1.msra.mxu0 0.0
      %641 = vmatprep.subr.mxu0 0.0
      %642 = vmatpush1.msra.mxu0 0.0
      %643 = vmatprep.subr.mxu0 0.0
      %644 = vmatpush1.msra.mxu0 0.0
      %645 = vmatprep.subr.mxu0 0.0
      %646 = vmatpush1.msra.mxu0 0.0
      %647 = vmatprep.subr.mxu0 0.0
      %648 = vmatpush1.msra.mxu0 0.0
      %649 = vmatprep.subr.mxu0 0.0
      %650 = vmatpush1.msra.mxu0 0.0
      %651 = vmatprep.subr.mxu0 0.0
      %652 = vmatpush1.msra.mxu0 0.0
      %653 = vmatprep.subr.mxu0 0.0
      %654 = vmatpush1.msra.mxu0 0.0
      %655 = vmatprep.subr.mxu0 0.0
      %656 = vmatpush1.msra.mxu0 0.0
      %657 = vmatprep.subr.mxu0 0.0
      %658 = vmatpush1.msra.mxu0 0.0
      %659 = vmatprep.subr.mxu0 0.0
      %660 = vmatpush1.msra.mxu0 0.0
      %661 = vmatprep.subr.mxu0 0.0
      %662 = vmatpush1.msra.mxu0 0.0
      %663 = vmatprep.subr.mxu0 0.0
      %664 = vmatpush1.msra.mxu0 0.0
      %665 = vmatprep.subr.mxu0 0.0
      %666 = vmatpush1.msra.mxu0 0.0
      %667 = vmatprep.subr.mxu0 0.0
      %668 = vmatpush1.msra.mxu0 0.0
      %669 = vmatprep.subr.mxu0 0.0
      %670 = vmatpush1.msra.mxu0 0.0
      %671 = vmatprep.subr.mxu0 0.0
      %672 = vmatpush1.msra.mxu0 0.0
      %673 = vmatprep.subr.mxu0 0.0
      %674 = vmatpush1.msra.mxu0 0.0
      %675 = vmatprep.mubr.f32.mxu0 0.0
      %676 = vmatmul.mubr.f32.gmra.mrb[0].mxu0 %v606
      %v677 = vpop.f32.mrb[0].mxu0
      %v678 = vadd.f32 0.0, %v677
      %v679 = vpop.f32.mrb[0].mxu0
      %v680 = vadd.f32 0.0, %v679
      %681 = vmatprep.mubr.f32.mxu0 0.0
      %682 = vmatmul.mubr.f32.gmra.mrb[0].mxu0 %v609
      %v683 = vpop.f32.mrb[0].mxu0
      %v684 = vadd.f32 0.0, %v683
      %v685 = vpop.f32.mrb[0].mxu0
      %v686 = vadd.f32 0.0, %v685
      %687 = vdwg.mxu0
      %688 = vmatprep.subr.mxu0 0.0
      %689 = vmatpush1.msra.mxu0 %v601
      %690 = vmatprep.subr.mxu0 0.0
      %691 = vmatpush1.msra.mxu0 0.0
      %692 = vmatprep.subr.mxu0 0.0
      %693 = vmatpush1.msra.mxu0 0.0
      %694 = vmatprep.subr.mxu0 0.0
      %695 = vmatpush1.msra.mxu0 0.0
      %696 = vmatprep.subr.mxu0 0.0
      %697 = vmatpush1.msra.mxu0 0.0
      %698 = vmatprep.subr.mxu0 0.0
      %699 = vmatpush1.msra.mxu0 0.0
      %700 = vmatprep.subr.mxu0 0.0
      %701 = vmatpush1.msra.mxu0 0.0
      %702 = vmatprep.subr.mxu0 0.0
      %703 = vmatpush1.msra.mxu0 0.0
      %704 = vmatprep.subr.mxu0 0.0
      %705 = vmatpush1.msra.mxu0 0.0
      %706 = vmatprep.subr.mxu0 0.0
      %707 = vmatpush1.msra.mxu0 0.0
      %708 = vmatprep.subr.mxu0 0.0
      %709 = vmatpush1.msra.mxu0 0.0
      %710 = vmatprep.subr.mxu0 0.0
      %711 = vmatpush1.msra.mxu0 0.0
      %712 = vmatprep.subr.mxu0 0.0
      %713 = vmatpush1.msra.mxu0 0.0
      %714 = vmatprep.subr.mxu0 0.0
      %715 = vmatpush1.msra.mxu0 0.0
      %716 = vmatprep.subr.mxu0 0.0
      %717 = vmatpush1.msra.mxu0 0.0
      %718 = vmatprep.subr.mxu0 0.0
      %719 = vmatpush1.msra.mxu0 0.0
      %720 = vmatprep.subr.mxu0 0.0
      %721 = vmatpush1.msra.mxu0 0.0
      %722 = vmatprep.subr.mxu0 0.0
      %723 = vmatpush1.msra.mxu0 0.0
      %724 = vmatprep.subr.mxu0 0.0
      %725 = vmatpush1.msra.mxu0 0.0
      %726 = vmatprep.subr.mxu0 0.0
      %727 = vmatpush1.msra.mxu0 0.0
      %728 = vmatprep.subr.mxu0 0.0
      %729 = vmatpush1.msra.mxu0 0.0
      %730 = vmatprep.subr.mxu0 0.0
      %731 = vmatpush1.msra.mxu0 0.0
      %732 = vmatprep.subr.mxu0 0.0
      %733 = vmatpush1.msra.mxu0 0.0
      %734 = vmatprep.subr.mxu0 0.0
      %735 = vmatpush1.msra.mxu0 0.0
      %736 = vmatprep.subr.mxu0 0.0
      %737 = vmatpush1.msra.mxu0 0.0
      %738 = vmatprep.subr.mxu0 0.0
      %739 = vmatpush1.msra.mxu0 0.0
      %740 = vmatprep.subr.mxu0 0.0
      %741 = vmatpush1.msra.mxu0 0.0
      %742 = vmatprep.subr.mxu0 0.0
      %743 = vmatpush1.msra.mxu0 0.0
      %744 = vmatprep.subr.mxu0 0.0
      %745 = vmatpush1.msra.mxu0 0.0
      %746 = vmatprep.subr.mxu0 0.0
      %747 = vmatpush1.msra.mxu0 0.0
      %748 = vmatprep.subr.mxu0 0.0
      %749 = vmatpush1.msra.mxu0 0.0
      %750 = vmatprep.subr.mxu0 0.0
      %751 = vmatpush1.msra.mxu0 0.0
      %752 = vmatprep.mubr.f32.mxu0 0.0
      %753 = vmatmul.mubr.f32.gmra.mrb[0].mxu0 %v606
      %v754 = vpop.f32.mrb[0].mxu0
      %v755 = vadd.f32 0.0, %v754
      %v756 = vpop.f32.mrb[0].mxu0
      %757 = vmatprep.mubr.f32.mxu0 0.0
      %758 = vmatmul.mubr.f32.gmra.mrb[0].mxu0 %v609
      %v759 = vpop.f32.mrb[0].mxu0
      %v760 = vadd.f32 0.0, %v759
      %v761 = vpop.f32.mrb[0].mxu0
      %762 = vdwg.mxu0
      %v763 = vadd.f32 %v507, %v678
      %v764 = vadd.f32 %v509, %v680
      %v765 = vadd.f32 %v584, %v755
      %v766 = vadd.f32 %v513, %v684
      %v767 = vadd.f32 %v515, %v686
      %v768 = vadd.f32 %v589, %v760
      %769 = vrot.lane.b32.xlu0 %v255, 110
      %v770 = vpop.permute.xlu0 %769
      %771 = vrot.lane.b32.xlu0 %v256, 110
      %v772 = vpop.permute.xlu0 %771
      %773 = vrot.lane.b32.xlu0 %v257, 110
      %v774 = vpop.permute.xlu0 %773
      %vm775 = vcmp.lt.s32.totalorder %v267, 110
      %v776 = vsel %vm775, %v772, %v774
      %v777 = vsel %vm775, %v770, %v772
      %v778 = vsel %vm775, %v774, %v770
      %s779 = scalar_lea.vmem %s1, 48
      %v780 = vld [vmem:[%s779] sm:$0xff]
      %v781 = vld [vmem:[%s779 + $0x8] sm:$0xff]
      %v783 = vsel %vm275, %v780, 0
      %v786 = vsel %vm275, %v781, 0
      %788 = vmatprep.subr.mxu0 %v776
      %789 = vmatpush1.msra.mxu0 %v777
      %790 = vmatprep.subr.mxu0 0.0
      %791 = vmatpush1.msra.mxu0 0.0
      %792 = vmatprep.subr.mxu0 0.0
      %793 = vmatpush1.msra.mxu0 0.0
      %794 = vmatprep.subr.mxu0 0.0
      %795 = vmatpush1.msra.mxu0 0.0
      %796 = vmatprep.subr.mxu0 0.0
      %797 = vmatpush1.msra.mxu0 0.0
      %798 = vmatprep.subr.mxu0 0.0
      %799 = vmatpush1.msra.mxu0 0.0
      %800 = vmatprep.subr.mxu0 0.0
      %801 = vmatpush1.msra.mxu0 0.0
      %802 = vmatprep.subr.mxu0 0.0
      %803 = vmatpush1.msra.mxu0 0.0
      %804 = vmatprep.subr.mxu0 0.0
      %805 = vmatpush1.msra.mxu0 0.0
      %806 = vmatprep.subr.mxu0 0.0
      %807 = vmatpush1.msra.mxu0 0.0
      %808 = vmatprep.subr.mxu0 0.0
      %809 = vmatpush1.msra.mxu0 0.0
      %810 = vmatprep.subr.mxu0 0.0
      %811 = vmatpush1.msra.mxu0 0.0
      %812 = vmatprep.subr.mxu0 0.0
      %813 = vmatpush1.msra.mxu0 0.0
      %814 = vmatprep.subr.mxu0 0.0
      %815 = vmatpush1.msra.mxu0 0.0
      %816 = vmatprep.subr.mxu0 0.0
      %817 = vmatpush1.msra.mxu0 0.0
      %818 = vmatprep.subr.mxu0 0.0
      %819 = vmatpush1.msra.mxu0 0.0
      %820 = vmatprep.subr.mxu0 0.0
      %821 = vmatpush1.msra.mxu0 0.0
      %822 = vmatprep.subr.mxu0 0.0
      %823 = vmatpush1.msra.mxu0 0.0
      %824 = vmatprep.subr.mxu0 0.0
      %825 = vmatpush1.msra.mxu0 0.0
      %826 = vmatprep.subr.mxu0 0.0
      %827 = vmatpush1.msra.mxu0 0.0
      %828 = vmatprep.subr.mxu0 0.0
      %829 = vmatpush1.msra.mxu0 0.0
      %830 = vmatprep.subr.mxu0 0.0
      %831 = vmatpush1.msra.mxu0 0.0
      %832 = vmatprep.subr.mxu0 0.0
      %833 = vmatpush1.msra.mxu0 0.0
      %834 = vmatprep.subr.mxu0 0.0
      %835 = vmatpush1.msra.mxu0 0.0
      %836 = vmatprep.subr.mxu0 0.0
      %837 = vmatpush1.msra.mxu0 0.0
      %838 = vmatprep.subr.mxu0 0.0
      %839 = vmatpush1.msra.mxu0 0.0
      %840 = vmatprep.subr.mxu0 0.0
      %841 = vmatpush1.msra.mxu0 0.0
      %842 = vmatprep.subr.mxu0 0.0
      %843 = vmatpush1.msra.mxu0 0.0
      %844 = vmatprep.subr.mxu0 0.0
      %845 = vmatpush1.msra.mxu0 0.0
      %846 = vmatprep.subr.mxu0 0.0
      %847 = vmatpush1.msra.mxu0 0.0
      %848 = vmatprep.subr.mxu0 0.0
      %849 = vmatpush1.msra.mxu0 0.0
      %850 = vmatprep.subr.mxu0 0.0
      %851 = vmatpush1.msra.mxu0 0.0
      %852 = vmatprep.mubr.f32.mxu0 0.0
      %853 = vmatmul.mubr.f32.gmra.mrb[0].mxu0 %v783
      %v854 = vpop.f32.mrb[0].mxu0
      %v855 = vadd.f32 0.0, %v854
      %v856 = vpop.f32.mrb[0].mxu0
      %v857 = vadd.f32 0.0, %v856
      %858 = vmatprep.mubr.f32.mxu0 0.0
      %859 = vmatmul.mubr.f32.gmra.mrb[0].mxu0 %v786
      %v860 = vpop.f32.mrb[0].mxu0
      %v861 = vadd.f32 0.0, %v860
      %v862 = vpop.f32.mrb[0].mxu0
      %v863 = vadd.f32 0.0, %v862
      %864 = vdwg.mxu0
      %865 = vmatprep.subr.mxu0 0.0
      %866 = vmatpush1.msra.mxu0 %v778
      %867 = vmatprep.subr.mxu0 0.0
      %868 = vmatpush1.msra.mxu0 0.0
      %869 = vmatprep.subr.mxu0 0.0
      %870 = vmatpush1.msra.mxu0 0.0
      %871 = vmatprep.subr.mxu0 0.0
      %872 = vmatpush1.msra.mxu0 0.0
      %873 = vmatprep.subr.mxu0 0.0
      %874 = vmatpush1.msra.mxu0 0.0
      %875 = vmatprep.subr.mxu0 0.0
      %876 = vmatpush1.msra.mxu0 0.0
      %877 = vmatprep.subr.mxu0 0.0
      %878 = vmatpush1.msra.mxu0 0.0
      %879 = vmatprep.subr.mxu0 0.0
      %880 = vmatpush1.msra.mxu0 0.0
      %881 = vmatprep.subr.mxu0 0.0
      %882 = vmatpush1.msra.mxu0 0.0
      %883 = vmatprep.subr.mxu0 0.0
      %884 = vmatpush1.msra.mxu0 0.0
      %885 = vmatprep.subr.mxu0 0.0
      %886 = vmatpush1.msra.mxu0 0.0
      %887 = vmatprep.subr.mxu0 0.0
      %888 = vmatpush1.msra.mxu0 0.0
      %889 = vmatprep.subr.mxu0 0.0
      %890 = vmatpush1.msra.mxu0 0.0
      %891 = vmatprep.subr.mxu0 0.0
      %892 = vmatpush1.msra.mxu0 0.0
      %893 = vmatprep.subr.mxu0 0.0
      %894 = vmatpush1.msra.mxu0 0.0
      %895 = vmatprep.subr.mxu0 0.0
      %896 = vmatpush1.msra.mxu0 0.0
      %897 = vmatprep.subr.mxu0 0.0
      %898 = vmatpush1.msra.mxu0 0.0
      %899 = vmatprep.subr.mxu0 0.0
      %900 = vmatpush1.msra.mxu0 0.0
      %901 = vmatprep.subr.mxu0 0.0
      %902 = vmatpush1.msra.mxu0 0.0
      %903 = vmatprep.subr.mxu0 0.0
      %904 = vmatpush1.msra.mxu0 0.0
      %905 = vmatprep.subr.mxu0 0.0
      %906 = vmatpush1.msra.mxu0 0.0
      %907 = vmatprep.subr.mxu0 0.0
      %908 = vmatpush1.msra.mxu0 0.0
      %909 = vmatprep.subr.mxu0 0.0
      %910 = vmatpush1.msra.mxu0 0.0
      %911 = vmatprep.subr.mxu0 0.0
      %912 = vmatpush1.msra.mxu0 0.0
      %913 = vmatprep.subr.mxu0 0.0
      %914 = vmatpush1.msra.mxu0 0.0
      %915 = vmatprep.subr.mxu0 0.0
      %916 = vmatpush1.msra.mxu0 0.0
      %917 = vmatprep.subr.mxu0 0.0
      %918 = vmatpush1.msra.mxu0 0.0
      %919 = vmatprep.subr.mxu0 0.0
      %920 = vmatpush1.msra.mxu0 0.0
      %921 = vmatprep.subr.mxu0 0.0
      %922 = vmatpush1.msra.mxu0 0.0
      %923 = vmatprep.subr.mxu0 0.0
      %924 = vmatpush1.msra.mxu0 0.0
      %925 = vmatprep.subr.mxu0 0.0
      %926 = vmatpush1.msra.mxu0 0.0
      %927 = vmatprep.subr.mxu0 0.0
      %928 = vmatpush1.msra.mxu0 0.0
      %929 = vmatprep.mubr.f32.mxu0 0.0
      %930 = vmatmul.mubr.f32.gmra.mrb[0].mxu0 %v783
      %v931 = vpop.f32.mrb[0].mxu0
      %v932 = vadd.f32 0.0, %v931
      %v933 = vpop.f32.mrb[0].mxu0
      %934 = vmatprep.mubr.f32.mxu0 0.0
      %935 = vmatmul.mubr.f32.gmra.mrb[0].mxu0 %v786
      %v936 = vpop.f32.mrb[0].mxu0
      %v937 = vadd.f32 0.0, %v936
      %v938 = vpop.f32.mrb[0].mxu0
      %939 = vdwg.mxu0
      %v940 = vadd.f32 %v763, %v855
      %v941 = vadd.f32 %v764, %v857
      %v942 = vadd.f32 %v765, %v932
      %v943 = vadd.f32 %v766, %v861
      %v944 = vadd.f32 %v767, %v863
      %v945 = vadd.f32 %v768, %v937
      %946 = vrot.lane.b32.xlu0 %v255, 109
      %v947 = vpop.permute.xlu0 %946
      %948 = vrot.lane.b32.xlu0 %v256, 109
      %v949 = vpop.permute.xlu0 %948
      %950 = vrot.lane.b32.xlu0 %v257, 109
      %v951 = vpop.permute.xlu0 %950
      %vm952 = vcmp.lt.s32.totalorder %v267, 109
      %v953 = vsel %vm952, %v949, %v951
      %v954 = vsel %vm952, %v947, %v949
      %v955 = vsel %vm952, %v951, %v947
      %s956 = scalar_lea.vmem %s1, 64
      %v957 = vld [vmem:[%s956] sm:$0xff]
      %v958 = vld [vmem:[%s956 + $0x8] sm:$0xff]
      %v960 = vsel %vm275, %v957, 0
      %v963 = vsel %vm275, %v958, 0
      %965 = vmatprep.subr.mxu0 %v953
      %966 = vmatpush1.msra.mxu0 %v954
      %967 = vmatprep.subr.mxu0 0.0
      %968 = vmatpush1.msra.mxu0 0.0
      %969 = vmatprep.subr.mxu0 0.0
      %970 = vmatpush1.msra.mxu0 0.0
      %971 = vmatprep.subr.mxu0 0.0
      %972 = vmatpush1.msra.mxu0 0.0
      %973 = vmatprep.subr.mxu0 0.0
      %974 = vmatpush1.msra.mxu0 0.0
      %975 = vmatprep.subr.mxu0 0.0
      %976 = vmatpush1.msra.mxu0 0.0
      %977 = vmatprep.subr.mxu0 0.0
      %978 = vmatpush1.msra.mxu0 0.0
      %979 = vmatprep.subr.mxu0 0.0
      %980 = vmatpush1.msra.mxu0 0.0
      %981 = vmatprep.subr.mxu0 0.0
      %982 = vmatpush1.msra.mxu0 0.0
      %983 = vmatprep.subr.mxu0 0.0
      %984 = vmatpush1.msra.mxu0 0.0
      %985 = vmatprep.subr.mxu0 0.0
      %986 = vmatpush1.msra.mxu0 0.0
      %987 = vmatprep.subr.mxu0 0.0
      %988 = vmatpush1.msra.mxu0 0.0
      %989 = vmatprep.subr.mxu0 0.0
      %990 = vmatpush1.msra.mxu0 0.0
      %991 = vmatprep.subr.mxu0 0.0
      %992 = vmatpush1.msra.mxu0 0.0
      %993 = vmatprep.subr.mxu0 0.0
      %994 = vmatpush1.msra.mxu0 0.0
      %995 = vmatprep.subr.mxu0 0.0
      %996 = vmatpush1.msra.mxu0 0.0
      %997 = vmatprep.subr.mxu0 0.0
      %998 = vmatpush1.msra.mxu0 0.0
      %999 = vmatprep.subr.mxu0 0.0
      %1000 = vmatpush1.msra.mxu0 0.0
      %1001 = vmatprep.subr.mxu0 0.0
      %1002 = vmatpush1.msra.mxu0 0.0
      %1003 = vmatprep.subr.mxu0 0.0
      %1004 = vmatpush1.msra.mxu0 0.0
      %1005 = vmatprep.subr.mxu0 0.0
      %1006 = vmatpush1.msra.mxu0 0.0
      %1007 = vmatprep.subr.mxu0 0.0
      %1008 = vmatpush1.msra.mxu0 0.0
      %1009 = vmatprep.subr.mxu0 0.0
      %1010 = vmatpush1.msra.mxu0 0.0
      %1011 = vmatprep.subr.mxu0 0.0
      %1012 = vmatpush1.msra.mxu0 0.0
      %1013 = vmatprep.subr.mxu0 0.0
      %1014 = vmatpush1.msra.mxu0 0.0
      %1015 = vmatprep.subr.mxu0 0.0
      %1016 = vmatpush1.msra.mxu0 0.0
      %1017 = vmatprep.subr.mxu0 0.0
      %1018 = vmatpush1.msra.mxu0 0.0
      %1019 = vmatprep.subr.mxu0 0.0
      %1020 = vmatpush1.msra.mxu0 0.0
      %1021 = vmatprep.subr.mxu0 0.0
      %1022 = vmatpush1.msra.mxu0 0.0
      %1023 = vmatprep.subr.mxu0 0.0
      %1024 = vmatpush1.msra.mxu0 0.0
      %1025 = vmatprep.subr.mxu0 0.0
      %1026 = vmatpush1.msra.mxu0 0.0
      %1027 = vmatprep.subr.mxu0 0.0
      %1028 = vmatpush1.msra.mxu0 0.0
      %1029 = vmatprep.mubr.f32.mxu0 0.0
      %1030 = vmatmul.mubr.f32.gmra.mrb[0].mxu0 %v960
      %v1031 = vpop.f32.mrb[0].mxu0
      %v1032 = vadd.f32 0.0, %v1031
      %v1033 = vpop.f32.mrb[0].mxu0
      %v1034 = vadd.f32 0.0, %v1033
      %1035 = vmatprep.mubr.f32.mxu0 0.0
      %1036 = vmatmul.mubr.f32.gmra.mrb[0].mxu0 %v963
      %v1037 = vpop.f32.mrb[0].mxu0
      %v1038 = vadd.f32 0.0, %v1037
      %v1039 = vpop.f32.mrb[0].mxu0
      %v1040 = vadd.f32 0.0, %v1039
      %1041 = vdwg.mxu0
      %1042 = vmatprep.subr.mxu0 0.0
      %1043 = vmatpush1.msra.mxu0 %v955
      %1044 = vmatprep.subr.mxu0 0.0
      %1045 = vmatpush1.msra.mxu0 0.0
      %1046 = vmatprep.subr.mxu0 0.0
      %1047 = vmatpush1.msra.mxu0 0.0
      %1048 = vmatprep.subr.mxu0 0.0
      %1049 = vmatpush1.msra.mxu0 0.0
      %1050 = vmatprep.subr.mxu0 0.0
      %1051 = vmatpush1.msra.mxu0 0.0
      %1052 = vmatprep.subr.mxu0 0.0
      %1053 = vmatpush1.msra.mxu0 0.0
      %1054 = vmatprep.subr.mxu0 0.0
      %1055 = vmatpush1.msra.mxu0 0.0
      %1056 = vmatprep.subr.mxu0 0.0
      %1057 = vmatpush1.msra.mxu0 0.0
      %1058 = vmatprep.subr.mxu0 0.0
      %1059 = vmatpush1.msra.mxu0 0.0
      %1060 = vmatprep.subr.mxu0 0.0
      %1061 = vmatpush1.msra.mxu0 0.0
      %1062 = vmatprep.subr.mxu0 0.0
      %1063 = vmatpush1.msra.mxu0 0.0
      %1064 = vmatprep.subr.mxu0 0.0
      %1065 = vmatpush1.msra.mxu0 0.0
      %1066 = vmatprep.subr.mxu0 0.0
      %1067 = vmatpush1.msra.mxu0 0.0
      %1068 = vmatprep.subr.mxu0 0.0
      %1069 = vmatpush1.msra.mxu0 0.0
      %1070 = vmatprep.subr.mxu0 0.0
      %1071 = vmatpush1.msra.mxu0 0.0
      %1072 = vmatprep.subr.mxu0 0.0
      %1073 = vmatpush1.msra.mxu0 0.0
      %1074 = vmatprep.subr.mxu0 0.0
      %1075 = vmatpush1.msra.mxu0 0.0
      %1076 = vmatprep.subr.mxu0 0.0
      %1077 = vmatpush1.msra.mxu0 0.0
      %1078 = vmatprep.subr.mxu0 0.0
      %1079 = vmatpush1.msra.mxu0 0.0
      %1080 = vmatprep.subr.mxu0 0.0
      %1081 = vmatpush1.msra.mxu0 0.0
      %1082 = vmatprep.subr.mxu0 0.0
      %1083 = vmatpush1.msra.mxu0 0.0
      %1084 = vmatprep.subr.mxu0 0.0
      %1085 = vmatpush1.msra.mxu0 0.0
      %1086 = vmatprep.subr.mxu0 0.0
      %1087 = vmatpush1.msra.mxu0 0.0
      %1088 = vmatprep.subr.mxu0 0.0
      %1089 = vmatpush1.msra.mxu0 0.0
      %1090 = vmatprep.subr.mxu0 0.0
      %1091 = vmatpush1.msra.mxu0 0.0
      %1092 = vmatprep.subr.mxu0 0.0
      %1093 = vmatpush1.msra.mxu0 0.0
      %1094 = vmatprep.subr.mxu0 0.0
      %1095 = vmatpush1.msra.mxu0 0.0
      %1096 = vmatprep.subr.mxu0 0.0
      %1097 = vmatpush1.msra.mxu0 0.0
      %1098 = vmatprep.subr.mxu0 0.0
      %1099 = vmatpush1.msra.mxu0 0.0
      %1100 = vmatprep.subr.mxu0 0.0
      %1101 = vmatpush1.msra.mxu0 0.0
      %1102 = vmatprep.subr.mxu0 0.0
      %1103 = vmatpush1.msra.mxu0 0.0
      %1104 = vmatprep.subr.mxu0 0.0
      %1105 = vmatpush1.msra.mxu0 0.0
      %1106 = vmatprep.mubr.f32.mxu0 0.0
      %1107 = vmatmul.mubr.f32.gmra.mrb[0].mxu0 %v960
      %v1108 = vpop.f32.mrb[0].mxu0
      %v1109 = vadd.f32 0.0, %v1108
      %v1110 = vpop.f32.mrb[0].mxu0
      %1111 = vmatprep.mubr.f32.mxu0 0.0
      %1112 = vmatmul.mubr.f32.gmra.mrb[0].mxu0 %v963
      %v1113 = vpop.f32.mrb[0].mxu0
      %v1114 = vadd.f32 0.0, %v1113
      %v1115 = vpop.f32.mrb[0].mxu0
      %1116 = vdwg.mxu0
      %v1117 = vadd.f32 %v940, %v1032
      %v1118 = vadd.f32 %v941, %v1034
      %v1119 = vadd.f32 %v942, %v1109
      %v1120 = vadd.f32 %v943, %v1038
      %v1121 = vadd.f32 %v944, %v1040
      %v1122 = vadd.f32 %v945, %v1114
      %1123 = vrot.lane.b32.xlu0 %v255, 108
      %v1124 = vpop.permute.xlu0 %1123
      %1125 = vrot.lane.b32.xlu0 %v256, 108
      %v1126 = vpop.permute.xlu0 %1125
      %1127 = vrot.lane.b32.xlu0 %v257, 108
      %v1128 = vpop.permute.xlu0 %1127
      %vm1129 = vcmp.lt.s32.totalorder %v267, 108
      %v1130 = vsel %vm1129, %v1126, %v1128
      %v1131 = vsel %vm1129, %v1124, %v1126
      %v1132 = vsel %vm1129, %v1128, %v1124
      %s1133 = scalar_lea.vmem %s1, 80
      %v1134 = vld [vmem:[%s1133] sm:$0xff]
      %v1135 = vld [vmem:[%s1133 + $0x8] sm:$0xff]
      %v1137 = vsel %vm275, %v1134, 0
      %v1140 = vsel %vm275, %v1135, 0
      %1142 = vmatprep.subr.mxu0 %v1130
      %1143 = vmatpush1.msra.mxu0 %v1131
      %1144 = vmatprep.subr.mxu0 0.0
      %1145 = vmatpush1.msra.mxu0 0.0
      %1146 = vmatprep.subr.mxu0 0.0
      %1147 = vmatpush1.msra.mxu0 0.0
      %1148 = vmatprep.subr.mxu0 0.0
      %1149 = vmatpush1.msra.mxu0 0.0
      %1150 = vmatprep.subr.mxu0 0.0
      %1151 = vmatpush1.msra.mxu0 0.0
      %1152 = vmatprep.subr.mxu0 0.0
      %1153 = vmatpush1.msra.mxu0 0.0
      %1154 = vmatprep.subr.mxu0 0.0
      %1155 = vmatpush1.msra.mxu0 0.0
      %1156 = vmatprep.subr.mxu0 0.0
      %1157 = vmatpush1.msra.mxu0 0.0
      %1158 = vmatprep.subr.mxu0 0.0
      %1159 = vmatpush1.msra.mxu0 0.0
      %1160 = vmatprep.subr.mxu0 0.0
      %1161 = vmatpush1.msra.mxu0 0.0
      %1162 = vmatprep.subr.mxu0 0.0
      %1163 = vmatpush1.msra.mxu0 0.0
      %1164 = vmatprep.subr.mxu0 0.0
      %1165 = vmatpush1.msra.mxu0 0.0
      %1166 = vmatprep.subr.mxu0 0.0
      %1167 = vmatpush1.msra.mxu0 0.0
      %1168 = vmatprep.subr.mxu0 0.0
      %1169 = vmatpush1.msra.mxu0 0.0
      %1170 = vmatprep.subr.mxu0 0.0
      %1171 = vmatpush1.msra.mxu0 0.0
      %1172 = vmatprep.subr.mxu0 0.0
      %1173 = vmatpush1.msra.mxu0 0.0
      %1174 = vmatprep.subr.mxu0 0.0
      %1175 = vmatpush1.msra.mxu0 0.0
      %1176 = vmatprep.subr.mxu0 0.0
      %1177 = vmatpush1.msra.mxu0 0.0
      %1178 = vmatprep.subr.mxu0 0.0
      %1179 = vmatpush1.msra.mxu0 0.0
      %1180 = vmatprep.subr.mxu0 0.0
      %1181 = vmatpush1.msra.mxu0 0.0
      %1182 = vmatprep.subr.mxu0 0.0
      %1183 = vmatpush1.msra.mxu0 0.0
      %1184 = vmatprep.subr.mxu0 0.0
      %1185 = vmatpush1.msra.mxu0 0.0
      %1186 = vmatprep.subr.mxu0 0.0
      %1187 = vmatpush1.msra.mxu0 0.0
      %1188 = vmatprep.subr.mxu0 0.0
      %1189 = vmatpush1.msra.mxu0 0.0
      %1190 = vmatprep.subr.mxu0 0.0
      %1191 = vmatpush1.msra.mxu0 0.0
      %1192 = vmatprep.subr.mxu0 0.0
      %1193 = vmatpush1.msra.mxu0 0.0
      %1194 = vmatprep.subr.mxu0 0.0
      %1195 = vmatpush1.msra.mxu0 0.0
      %1196 = vmatprep.subr.mxu0 0.0
      %1197 = vmatpush1.msra.mxu0 0.0
      %1198 = vmatprep.subr.mxu0 0.0
      %1199 = vmatpush1.msra.mxu0 0.0
      %1200 = vmatprep.subr.mxu0 0.0
      %1201 = vmatpush1.msra.mxu0 0.0
      %1202 = vmatprep.subr.mxu0 0.0
      %1203 = vmatpush1.msra.mxu0 0.0
      %1204 = vmatprep.subr.mxu0 0.0
      %1205 = vmatpush1.msra.mxu0 0.0
      %1206 = vmatprep.mubr.f32.mxu0 0.0
      %1207 = vmatmul.mubr.f32.gmra.mrb[0].mxu0 %v1137
      %v1208 = vpop.f32.mrb[0].mxu0
      %v1209 = vadd.f32 0.0, %v1208
      %v1210 = vpop.f32.mrb[0].mxu0
      %v1211 = vadd.f32 0.0, %v1210
      %1212 = vmatprep.mubr.f32.mxu0 0.0
      %1213 = vmatmul.mubr.f32.gmra.mrb[0].mxu0 %v1140
      %v1214 = vpop.f32.mrb[0].mxu0
      %v1215 = vadd.f32 0.0, %v1214
      %v1216 = vpop.f32.mrb[0].mxu0
      %v1217 = vadd.f32 0.0, %v1216
      %1218 = vdwg.mxu0
      %1219 = vmatprep.subr.mxu0 0.0
      %1220 = vmatpush1.msra.mxu0 %v1132
      %1221 = vmatprep.subr.mxu0 0.0
      %1222 = vmatpush1.msra.mxu0 0.0
      %1223 = vmatprep.subr.mxu0 0.0
      %1224 = vmatpush1.msra.mxu0 0.0
      %1225 = vmatprep.subr.mxu0 0.0
      %1226 = vmatpush1.msra.mxu0 0.0
      %1227 = vmatprep.subr.mxu0 0.0
      %1228 = vmatpush1.msra.mxu0 0.0
      %1229 = vmatprep.subr.mxu0 0.0
      %1230 = vmatpush1.msra.mxu0 0.0
      %1231 = vmatprep.subr.mxu0 0.0
      %1232 = vmatpush1.msra.mxu0 0.0
      %1233 = vmatprep.subr.mxu0 0.0
      %1234 = vmatpush1.msra.mxu0 0.0
      %1235 = vmatprep.subr.mxu0 0.0
      %1236 = vmatpush1.msra.mxu0 0.0
      %1237 = vmatprep.subr.mxu0 0.0
      %1238 = vmatpush1.msra.mxu0 0.0
      %1239 = vmatprep.subr.mxu0 0.0
      %1240 = vmatpush1.msra.mxu0 0.0
      %1241 = vmatprep.subr.mxu0 0.0
      %1242 = vmatpush1.msra.mxu0 0.0
      %1243 = vmatprep.subr.mxu0 0.0
      %1244 = vmatpush1.msra.mxu0 0.0
      %1245 = vmatprep.subr.mxu0 0.0
      %1246 = vmatpush1.msra.mxu0 0.0
      %1247 = vmatprep.subr.mxu0 0.0
      %1248 = vmatpush1.msra.mxu0 0.0
      %1249 = vmatprep.subr.mxu0 0.0
      %1250 = vmatpush1.msra.mxu0 0.0
      %1251 = vmatprep.subr.mxu0 0.0
      %1252 = vmatpush1.msra.mxu0 0.0
      %1253 = vmatprep.subr.mxu0 0.0
      %1254 = vmatpush1.msra.mxu0 0.0
      %1255 = vmatprep.subr.mxu0 0.0
      %1256 = vmatpush1.msra.mxu0 0.0
      %1257 = vmatprep.subr.mxu0 0.0
      %1258 = vmatpush1.msra.mxu0 0.0
      %1259 = vmatprep.subr.mxu0 0.0
      %1260 = vmatpush1.msra.mxu0 0.0
      %1261 = vmatprep.subr.mxu0 0.0
      %1262 = vmatpush1.msra.mxu0 0.0
      %1263 = vmatprep.subr.mxu0 0.0
      %1264 = vmatpush1.msra.mxu0 0.0
      %1265 = vmatprep.subr.mxu0 0.0
      %1266 = vmatpush1.msra.mxu0 0.0
      %1267 = vmatprep.subr.mxu0 0.0
      %1268 = vmatpush1.msra.mxu0 0.0
      %1269 = vmatprep.subr.mxu0 0.0
      %1270 = vmatpush1.msra.mxu0 0.0
      %1271 = vmatprep.subr.mxu0 0.0
      %1272 = vmatpush1.msra.mxu0 0.0
      %1273 = vmatprep.subr.mxu0 0.0
      %1274 = vmatpush1.msra.mxu0 0.0
      %1275 = vmatprep.subr.mxu0 0.0
      %1276 = vmatpush1.msra.mxu0 0.0
      %1277 = vmatprep.subr.mxu0 0.0
      %1278 = vmatpush1.msra.mxu0 0.0
      %1279 = vmatprep.subr.mxu0 0.0
      %1280 = vmatpush1.msra.mxu0 0.0
      %1281 = vmatprep.subr.mxu0 0.0
      %1282 = vmatpush1.msra.mxu0 0.0
      %1283 = vmatprep.mubr.f32.mxu0 0.0
      %1284 = vmatmul.mubr.f32.gmra.mrb[0].mxu0 %v1137
      %v1285 = vpop.f32.mrb[0].mxu0
      %v1286 = vadd.f32 0.0, %v1285
      %v1287 = vpop.f32.mrb[0].mxu0
      %1288 = vmatprep.mubr.f32.mxu0 0.0
      %1289 = vmatmul.mubr.f32.gmra.mrb[0].mxu0 %v1140
      %v1290 = vpop.f32.mrb[0].mxu0
      %v1291 = vadd.f32 0.0, %v1290
      %v1292 = vpop.f32.mrb[0].mxu0
      %1293 = vdwg.mxu0
      %v1294 = vadd.f32 %v1117, %v1209
      %v1295 = vadd.f32 %v1118, %v1211
      %v1296 = vadd.f32 %v1119, %v1286
      %v1297 = vadd.f32 %v1120, %v1215
      %v1298 = vadd.f32 %v1121, %v1217
      %v1299 = vadd.f32 %v1122, %v1291
      %1300 = vrot.lane.b32.xlu0 %v255, 92
      %v1301 = vpop.permute.xlu0 %1300
      %1302 = vrot.lane.b32.xlu0 %v256, 92
      %v1303 = vpop.permute.xlu0 %1302
      %1304 = vrot.lane.b32.xlu0 %v257, 92
      %v1305 = vpop.permute.xlu0 %1304
      %vm1306 = vcmp.lt.s32.totalorder %v267, 92
      %v1307 = vsel %vm1306, %v1303, %v1305
      %v1308 = vsel %vm1306, %v1301, %v1303
      %v1309 = vsel %vm1306, %v1305, %v1301
      %s1310 = scalar_lea.vmem %s1, 96
      %v1311 = vld [vmem:[%s1310] sm:$0xff]
      %v1312 = vld [vmem:[%s1310 + $0x8] sm:$0xff]
      %v1314 = vsel %vm275, %v1311, 0
      %v1317 = vsel %vm275, %v1312, 0
      %1319 = vmatprep.subr.mxu0 %v1307
      %1320 = vmatpush1.msra.mxu0 %v1308
      %1321 = vmatprep.subr.mxu0 0.0
      %1322 = vmatpush1.msra.mxu0 0.0
      %1323 = vmatprep.subr.mxu0 0.0
      %1324 = vmatpush1.msra.mxu0 0.0
      %1325 = vmatprep.subr.mxu0 0.0
      %1326 = vmatpush1.msra.mxu0 0.0
      %1327 = vmatprep.subr.mxu0 0.0
      %1328 = vmatpush1.msra.mxu0 0.0
      %1329 = vmatprep.subr.mxu0 0.0
      %1330 = vmatpush1.msra.mxu0 0.0
      %1331 = vmatprep.subr.mxu0 0.0
      %1332 = vmatpush1.msra.mxu0 0.0
      %1333 = vmatprep.subr.mxu0 0.0
      %1334 = vmatpush1.msra.mxu0 0.0
      %1335 = vmatprep.subr.mxu0 0.0
      %1336 = vmatpush1.msra.mxu0 0.0
      %1337 = vmatprep.subr.mxu0 0.0
      %1338 = vmatpush1.msra.mxu0 0.0
      %1339 = vmatprep.subr.mxu0 0.0
      %1340 = vmatpush1.msra.mxu0 0.0
      %1341 = vmatprep.subr.mxu0 0.0
      %1342 = vmatpush1.msra.mxu0 0.0
      %1343 = vmatprep.subr.mxu0 0.0
      %1344 = vmatpush1.msra.mxu0 0.0
      %1345 = vmatprep.subr.mxu0 0.0
      %1346 = vmatpush1.msra.mxu0 0.0
      %1347 = vmatprep.subr.mxu0 0.0
      %1348 = vmatpush1.msra.mxu0 0.0
      %1349 = vmatprep.subr.mxu0 0.0
      %1350 = vmatpush1.msra.mxu0 0.0
      %1351 = vmatprep.subr.mxu0 0.0
      %1352 = vmatpush1.msra.mxu0 0.0
      %1353 = vmatprep.subr.mxu0 0.0
      %1354 = vmatpush1.msra.mxu0 0.0
      %1355 = vmatprep.subr.mxu0 0.0
      %1356 = vmatpush1.msra.mxu0 0.0
      %1357 = vmatprep.subr.mxu0 0.0
      %1358 = vmatpush1.msra.mxu0 0.0
      %1359 = vmatprep.subr.mxu0 0.0
      %1360 = vmatpush1.msra.mxu0 0.0
      %1361 = vmatprep.subr.mxu0 0.0
      %1362 = vmatpush1.msra.mxu0 0.0
      %1363 = vmatprep.subr.mxu0 0.0
      %1364 = vmatpush1.msra.mxu0 0.0
      %1365 = vmatprep.subr.mxu0 0.0
      %1366 = vmatpush1.msra.mxu0 0.0
      %1367 = vmatprep.subr.mxu0 0.0
      %1368 = vmatpush1.msra.mxu0 0.0
      %1369 = vmatprep.subr.mxu0 0.0
      %1370 = vmatpush1.msra.mxu0 0.0
      %1371 = vmatprep.subr.mxu0 0.0
      %1372 = vmatpush1.msra.mxu0 0.0
      %1373 = vmatprep.subr.mxu0 0.0
      %1374 = vmatpush1.msra.mxu0 0.0
      %1375 = vmatprep.subr.mxu0 0.0
      %1376 = vmatpush1.msra.mxu0 0.0
      %1377 = vmatprep.subr.mxu0 0.0
      %1378 = vmatpush1.msra.mxu0 0.0
      %1379 = vmatprep.subr.mxu0 0.0
      %1380 = vmatpush1.msra.mxu0 0.0
      %1381 = vmatprep.subr.mxu0 0.0
      %1382 = vmatpush1.msra.mxu0 0.0
      %1383 = vmatprep.mubr.f32.mxu0 0.0
      %1384 = vmatmul.mubr.f32.gmra.mrb[0].mxu0 %v1314
      %v1385 = vpop.f32.mrb[0].mxu0
      %v1386 = vadd.f32 0.0, %v1385
      %v1387 = vpop.f32.mrb[0].mxu0
      %v1388 = vadd.f32 0.0, %v1387
      %1389 = vmatprep.mubr.f32.mxu0 0.0
      %1390 = vmatmul.mubr.f32.gmra.mrb[0].mxu0 %v1317
      %v1391 = vpop.f32.mrb[0].mxu0
      %v1392 = vadd.f32 0.0, %v1391
      %v1393 = vpop.f32.mrb[0].mxu0
      %v1394 = vadd.f32 0.0, %v1393
      %1395 = vdwg.mxu0
      %1396 = vmatprep.subr.mxu0 0.0
      %1397 = vmatpush1.msra.mxu0 %v1309
      %1398 = vmatprep.subr.mxu0 0.0
      %1399 = vmatpush1.msra.mxu0 0.0
      %1400 = vmatprep.subr.mxu0 0.0
      %1401 = vmatpush1.msra.mxu0 0.0
      %1402 = vmatprep.subr.mxu0 0.0
      %1403 = vmatpush1.msra.mxu0 0.0
      %1404 = vmatprep.subr.mxu0 0.0
      %1405 = vmatpush1.msra.mxu0 0.0
      %1406 = vmatprep.subr.mxu0 0.0
      %1407 = vmatpush1.msra.mxu0 0.0
      %1408 = vmatprep.subr.mxu0 0.0
      %1409 = vmatpush1.msra.mxu0 0.0
      %1410 = vmatprep.subr.mxu0 0.0
      %1411 = vmatpush1.msra.mxu0 0.0
      %1412 = vmatprep.subr.mxu0 0.0
      %1413 = vmatpush1.msra.mxu0 0.0
      %1414 = vmatprep.subr.mxu0 0.0
      %1415 = vmatpush1.msra.mxu0 0.0
      %1416 = vmatprep.subr.mxu0 0.0
      %1417 = vmatpush1.msra.mxu0 0.0
      %1418 = vmatprep.subr.mxu0 0.0
      %1419 = vmatpush1.msra.mxu0 0.0
      %1420 = vmatprep.subr.mxu0 0.0
      %1421 = vmatpush1.msra.mxu0 0.0
      %1422 = vmatprep.subr.mxu0 0.0
      %1423 = vmatpush1.msra.mxu0 0.0
      %1424 = vmatprep.subr.mxu0 0.0
      %1425 = vmatpush1.msra.mxu0 0.0
      %1426 = vmatprep.subr.mxu0 0.0
      %1427 = vmatpush1.msra.mxu0 0.0
      %1428 = vmatprep.subr.mxu0 0.0
      %1429 = vmatpush1.msra.mxu0 0.0
      %1430 = vmatprep.subr.mxu0 0.0
      %1431 = vmatpush1.msra.mxu0 0.0
      %1432 = vmatprep.subr.mxu0 0.0
      %1433 = vmatpush1.msra.mxu0 0.0
      %1434 = vmatprep.subr.mxu0 0.0
      %1435 = vmatpush1.msra.mxu0 0.0
      %1436 = vmatprep.subr.mxu0 0.0
      %1437 = vmatpush1.msra.mxu0 0.0
      %1438 = vmatprep.subr.mxu0 0.0
      %1439 = vmatpush1.msra.mxu0 0.0
      %1440 = vmatprep.subr.mxu0 0.0
      %1441 = vmatpush1.msra.mxu0 0.0
      %1442 = vmatprep.subr.mxu0 0.0
      %1443 = vmatpush1.msra.mxu0 0.0
      %1444 = vmatprep.subr.mxu0 0.0
      %1445 = vmatpush1.msra.mxu0 0.0
      %1446 = vmatprep.subr.mxu0 0.0
      %1447 = vmatpush1.msra.mxu0 0.0
      %1448 = vmatprep.subr.mxu0 0.0
      %1449 = vmatpush1.msra.mxu0 0.0
      %1450 = vmatprep.subr.mxu0 0.0
      %1451 = vmatpush1.msra.mxu0 0.0
      %1452 = vmatprep.subr.mxu0 0.0
      %1453 = vmatpush1.msra.mxu0 0.0
      %1454 = vmatprep.subr.mxu0 0.0
      %1455 = vmatpush1.msra.mxu0 0.0
      %1456 = vmatprep.subr.mxu0 0.0
      %1457 = vmatpush1.msra.mxu0 0.0
      %1458 = vmatprep.subr.mxu0 0.0
      %1459 = vmatpush1.msra.mxu0 0.0
      %1460 = vmatprep.mubr.f32.mxu0 0.0
      %1461 = vmatmul.mubr.f32.gmra.mrb[0].mxu0 %v1314
      %v1462 = vpop.f32.mrb[0].mxu0
      %v1463 = vadd.f32 0.0, %v1462
      %v1464 = vpop.f32.mrb[0].mxu0
      %1465 = vmatprep.mubr.f32.mxu0 0.0
      %1466 = vmatmul.mubr.f32.gmra.mrb[0].mxu0 %v1317
      %v1467 = vpop.f32.mrb[0].mxu0
      %v1468 = vadd.f32 0.0, %v1467
      %v1469 = vpop.f32.mrb[0].mxu0
      %1470 = vdwg.mxu0
      %v1471 = vadd.f32 %v1294, %v1386
      %v1472 = vadd.f32 %v1295, %v1388
      %v1473 = vadd.f32 %v1296, %v1463
      %v1474 = vadd.f32 %v1297, %v1392
      %v1475 = vadd.f32 %v1298, %v1394
      %v1476 = vadd.f32 %v1299, %v1468
      %1477 = vrot.lane.b32.xlu0 %v255, 91
      %v1478 = vpop.permute.xlu0 %1477
      %1479 = vrot.lane.b32.xlu0 %v256, 91
      %v1480 = vpop.permute.xlu0 %1479
      %1481 = vrot.lane.b32.xlu0 %v257, 91
      %v1482 = vpop.permute.xlu0 %1481
      %vm1483 = vcmp.lt.s32.totalorder %v267, 91
      %v1484 = vsel %vm1483, %v1480, %v1482
      %v1485 = vsel %vm1483, %v1478, %v1480
      %v1486 = vsel %vm1483, %v1482, %v1478
      %s1487 = scalar_lea.vmem %s1, 112
      %v1488 = vld [vmem:[%s1487] sm:$0xff]
      %v1489 = vld [vmem:[%s1487 + $0x8] sm:$0xff]
      %v1491 = vsel %vm275, %v1488, 0
      %v1494 = vsel %vm275, %v1489, 0
      %1496 = vmatprep.subr.mxu0 %v1484
      %1497 = vmatpush1.msra.mxu0 %v1485
      %1498 = vmatprep.subr.mxu0 0.0
      %1499 = vmatpush1.msra.mxu0 0.0
      %1500 = vmatprep.subr.mxu0 0.0
      %1501 = vmatpush1.msra.mxu0 0.0
      %1502 = vmatprep.subr.mxu0 0.0
      %1503 = vmatpush1.msra.mxu0 0.0
      %1504 = vmatprep.subr.mxu0 0.0
      %1505 = vmatpush1.msra.mxu0 0.0
      %1506 = vmatprep.subr.mxu0 0.0
      %1507 = vmatpush1.msra.mxu0 0.0
      %1508 = vmatprep.subr.mxu0 0.0
      %1509 = vmatpush1.msra.mxu0 0.0
      %1510 = vmatprep.subr.mxu0 0.0
      %1511 = vmatpush1.msra.mxu0 0.0
      %1512 = vmatprep.subr.mxu0 0.0
      %1513 = vmatpush1.msra.mxu0 0.0
      %1514 = vmatprep.subr.mxu0 0.0
      %1515 = vmatpush1.msra.mxu0 0.0
      %1516 = vmatprep.subr.mxu0 0.0
      %1517 = vmatpush1.msra.mxu0 0.0
      %1518 = vmatprep.subr.mxu0 0.0
      %1519 = vmatpush1.msra.mxu0 0.0
      %1520 = vmatprep.subr.mxu0 0.0
      %1521 = vmatpush1.msra.mxu0 0.0
      %1522 = vmatprep.subr.mxu0 0.0
      %1523 = vmatpush1.msra.mxu0 0.0
      %1524 = vmatprep.subr.mxu0 0.0
      %1525 = vmatpush1.msra.mxu0 0.0
      %1526 = vmatprep.subr.mxu0 0.0
      %1527 = vmatpush1.msra.mxu0 0.0
      %1528 = vmatprep.subr.mxu0 0.0
      %1529 = vmatpush1.msra.mxu0 0.0
      %1530 = vmatprep.subr.mxu0 0.0
      %1531 = vmatpush1.msra.mxu0 0.0
      %1532 = vmatprep.subr.mxu0 0.0
      %1533 = vmatpush1.msra.mxu0 0.0
      %1534 = vmatprep.subr.mxu0 0.0
      %1535 = vmatpush1.msra.mxu0 0.0
      %1536 = vmatprep.subr.mxu0 0.0
      %1537 = vmatpush1.msra.mxu0 0.0
      %1538 = vmatprep.subr.mxu0 0.0
      %1539 = vmatpush1.msra.mxu0 0.0
      %1540 = vmatprep.subr.mxu0 0.0
      %1541 = vmatpush1.msra.mxu0 0.0
      %1542 = vmatprep.subr.mxu0 0.0
      %1543 = vmatpush1.msra.mxu0 0.0
      %1544 = vmatprep.subr.mxu0 0.0
      %1545 = vmatpush1.msra.mxu0 0.0
      %1546 = vmatprep.subr.mxu0 0.0
      %1547 = vmatpush1.msra.mxu0 0.0
      %1548 = vmatprep.subr.mxu0 0.0
      %1549 = vmatpush1.msra.mxu0 0.0
      %1550 = vmatprep.subr.mxu0 0.0
      %1551 = vmatpush1.msra.mxu0 0.0
      %1552 = vmatprep.subr.mxu0 0.0
      %1553 = vmatpush1.msra.mxu0 0.0
      %1554 = vmatprep.subr.mxu0 0.0
      %1555 = vmatpush1.msra.mxu0 0.0
      %1556 = vmatprep.subr.mxu0 0.0
      %1557 = vmatpush1.msra.mxu0 0.0
      %1558 = vmatprep.subr.mxu0 0.0
      %1559 = vmatpush1.msra.mxu0 0.0
      %1560 = vmatprep.mubr.f32.mxu0 0.0
      %1561 = vmatmul.mubr.f32.gmra.mrb[0].mxu0 %v1491
      %v1562 = vpop.f32.mrb[0].mxu0
      %v1563 = vadd.f32 0.0, %v1562
      %v1564 = vpop.f32.mrb[0].mxu0
      %v1565 = vadd.f32 0.0, %v1564
      %1566 = vmatprep.mubr.f32.mxu0 0.0
      %1567 = vmatmul.mubr.f32.gmra.mrb[0].mxu0 %v1494
      %v1568 = vpop.f32.mrb[0].mxu0
      %v1569 = vadd.f32 0.0, %v1568
      %v1570 = vpop.f32.mrb[0].mxu0
      %v1571 = vadd.f32 0.0, %v1570
      %1572 = vdwg.mxu0
      %1573 = vmatprep.subr.mxu0 0.0
      %1574 = vmatpush1.msra.mxu0 %v1486
      %1575 = vmatprep.subr.mxu0 0.0
      %1576 = vmatpush1.msra.mxu0 0.0
      %1577 = vmatprep.subr.mxu0 0.0
      %1578 = vmatpush1.msra.mxu0 0.0
      %1579 = vmatprep.subr.mxu0 0.0
      %1580 = vmatpush1.msra.mxu0 0.0
      %1581 = vmatprep.subr.mxu0 0.0
      %1582 = vmatpush1.msra.mxu0 0.0
      %1583 = vmatprep.subr.mxu0 0.0
      %1584 = vmatpush1.msra.mxu0 0.0
      %1585 = vmatprep.subr.mxu0 0.0
      %1586 = vmatpush1.msra.mxu0 0.0
      %1587 = vmatprep.subr.mxu0 0.0
      %1588 = vmatpush1.msra.mxu0 0.0
      %1589 = vmatprep.subr.mxu0 0.0
      %1590 = vmatpush1.msra.mxu0 0.0
      %1591 = vmatprep.subr.mxu0 0.0
      %1592 = vmatpush1.msra.mxu0 0.0
      %1593 = vmatprep.subr.mxu0 0.0
      %1594 = vmatpush1.msra.mxu0 0.0
      %1595 = vmatprep.subr.mxu0 0.0
      %1596 = vmatpush1.msra.mxu0 0.0
      %1597 = vmatprep.subr.mxu0 0.0
      %1598 = vmatpush1.msra.mxu0 0.0
      %1599 = vmatprep.subr.mxu0 0.0
      %1600 = vmatpush1.msra.mxu0 0.0
      %1601 = vmatprep.subr.mxu0 0.0
      %1602 = vmatpush1.msra.mxu0 0.0
      %1603 = vmatprep.subr.mxu0 0.0
      %1604 = vmatpush1.msra.mxu0 0.0
      %1605 = vmatprep.subr.mxu0 0.0
      %1606 = vmatpush1.msra.mxu0 0.0
      %1607 = vmatprep.subr.mxu0 0.0
      %1608 = vmatpush1.msra.mxu0 0.0
      %1609 = vmatprep.subr.mxu0 0.0
      %1610 = vmatpush1.msra.mxu0 0.0
      %1611 = vmatprep.subr.mxu0 0.0
      %1612 = vmatpush1.msra.mxu0 0.0
      %1613 = vmatprep.subr.mxu0 0.0
      %1614 = vmatpush1.msra.mxu0 0.0
      %1615 = vmatprep.subr.mxu0 0.0
      %1616 = vmatpush1.msra.mxu0 0.0
      %1617 = vmatprep.subr.mxu0 0.0
      %1618 = vmatpush1.msra.mxu0 0.0
      %1619 = vmatprep.subr.mxu0 0.0
      %1620 = vmatpush1.msra.mxu0 0.0
      %1621 = vmatprep.subr.mxu0 0.0
      %1622 = vmatpush1.msra.mxu0 0.0
      %1623 = vmatprep.subr.mxu0 0.0
      %1624 = vmatpush1.msra.mxu0 0.0
      %1625 = vmatprep.subr.mxu0 0.0
      %1626 = vmatpush1.msra.mxu0 0.0
      %1627 = vmatprep.subr.mxu0 0.0
      %1628 = vmatpush1.msra.mxu0 0.0
      %1629 = vmatprep.subr.mxu0 0.0
      %1630 = vmatpush1.msra.mxu0 0.0
      %1631 = vmatprep.subr.mxu0 0.0
      %1632 = vmatpush1.msra.mxu0 0.0
      %1633 = vmatprep.subr.mxu0 0.0
      %1634 = vmatpush1.msra.mxu0 0.0
      %1635 = vmatprep.subr.mxu0 0.0
      %1636 = vmatpush1.msra.mxu0 0.0
      %1637 = vmatprep.mubr.f32.mxu0 0.0
      %1638 = vmatmul.mubr.f32.gmra.mrb[0].mxu0 %v1491
      %v1639 = vpop.f32.mrb[0].mxu0
      %v1640 = vadd.f32 0.0, %v1639
      %v1641 = vpop.f32.mrb[0].mxu0
      %1642 = vmatprep.mubr.f32.mxu0 0.0
      %1643 = vmatmul.mubr.f32.gmra.mrb[0].mxu0 %v1494
      %v1644 = vpop.f32.mrb[0].mxu0
      %v1645 = vadd.f32 0.0, %v1644
      %v1646 = vpop.f32.mrb[0].mxu0
      %1647 = vdwg.mxu0
      %v1648 = vadd.f32 %v1471, %v1563
      %v1649 = vadd.f32 %v1472, %v1565
      %v1650 = vadd.f32 %v1473, %v1640
      %v1651 = vadd.f32 %v1474, %v1569
      %v1652 = vadd.f32 %v1475, %v1571
      %v1653 = vadd.f32 %v1476, %v1645
      %1654 = vrot.lane.b32.xlu0 %v255, 90
      %v1655 = vpop.permute.xlu0 %1654
      %1656 = vrot.lane.b32.xlu0 %v256, 90
      %v1657 = vpop.permute.xlu0 %1656
      %1658 = vrot.lane.b32.xlu0 %v257, 90
      %v1659 = vpop.permute.xlu0 %1658
      %vm1660 = vcmp.lt.s32.totalorder %v267, 90
      %v1661 = vsel %vm1660, %v1657, %v1659
      %v1662 = vsel %vm1660, %v1655, %v1657
      %v1663 = vsel %vm1660, %v1659, %v1655
      %s1664 = scalar_lea.vmem %s1, 128
      %v1665 = vld [vmem:[%s1664] sm:$0xff]
      %v1666 = vld [vmem:[%s1664 + $0x8] sm:$0xff]
      %v1668 = vsel %vm275, %v1665, 0
      %v1671 = vsel %vm275, %v1666, 0
      %1673 = vmatprep.subr.mxu0 %v1661
      %1674 = vmatpush1.msra.mxu0 %v1662
      %1675 = vmatprep.subr.mxu0 0.0
      %1676 = vmatpush1.msra.mxu0 0.0
      %1677 = vmatprep.subr.mxu0 0.0
      %1678 = vmatpush1.msra.mxu0 0.0
      %1679 = vmatprep.subr.mxu0 0.0
      %1680 = vmatpush1.msra.mxu0 0.0
      %1681 = vmatprep.subr.mxu0 0.0
      %1682 = vmatpush1.msra.mxu0 0.0
      %1683 = vmatprep.subr.mxu0 0.0
      %1684 = vmatpush1.msra.mxu0 0.0
      %1685 = vmatprep.subr.mxu0 0.0
      %1686 = vmatpush1.msra.mxu0 0.0
      %1687 = vmatprep.subr.mxu0 0.0
      %1688 = vmatpush1.msra.mxu0 0.0
      %1689 = vmatprep.subr.mxu0 0.0
      %1690 = vmatpush1.msra.mxu0 0.0
      %1691 = vmatprep.subr.mxu0 0.0
      %1692 = vmatpush1.msra.mxu0 0.0
      %1693 = vmatprep.subr.mxu0 0.0
      %1694 = vmatpush1.msra.mxu0 0.0
      %1695 = vmatprep.subr.mxu0 0.0
      %1696 = vmatpush1.msra.mxu0 0.0
      %1697 = vmatprep.subr.mxu0 0.0
      %1698 = vmatpush1.msra.mxu0 0.0
      %1699 = vmatprep.subr.mxu0 0.0
      %1700 = vmatpush1.msra.mxu0 0.0
      %1701 = vmatprep.subr.mxu0 0.0
      %1702 = vmatpush1.msra.mxu0 0.0
      %1703 = vmatprep.subr.mxu0 0.0
      %1704 = vmatpush1.msra.mxu0 0.0
      %1705 = vmatprep.subr.mxu0 0.0
      %1706 = vmatpush1.msra.mxu0 0.0
      %1707 = vmatprep.subr.mxu0 0.0
      %1708 = vmatpush1.msra.mxu0 0.0
      %1709 = vmatprep.subr.mxu0 0.0
      %1710 = vmatpush1.msra.mxu0 0.0
      %1711 = vmatprep.subr.mxu0 0.0
      %1712 = vmatpush1.msra.mxu0 0.0
      %1713 = vmatprep.subr.mxu0 0.0
      %1714 = vmatpush1.msra.mxu0 0.0
      %1715 = vmatprep.subr.mxu0 0.0
      %1716 = vmatpush1.msra.mxu0 0.0
      %1717 = vmatprep.subr.mxu0 0.0
      %1718 = vmatpush1.msra.mxu0 0.0
      %1719 = vmatprep.subr.mxu0 0.0
      %1720 = vmatpush1.msra.mxu0 0.0
      %1721 = vmatprep.subr.mxu0 0.0
      %1722 = vmatpush1.msra.mxu0 0.0
      %1723 = vmatprep.subr.mxu0 0.0
      %1724 = vmatpush1.msra.mxu0 0.0
      %1725 = vmatprep.subr.mxu0 0.0
      %1726 = vmatpush1.msra.mxu0 0.0
      %1727 = vmatprep.subr.mxu0 0.0
      %1728 = vmatpush1.msra.mxu0 0.0
      %1729 = vmatprep.subr.mxu0 0.0
      %1730 = vmatpush1.msra.mxu0 0.0
      %1731 = vmatprep.subr.mxu0 0.0
      %1732 = vmatpush1.msra.mxu0 0.0
      %1733 = vmatprep.subr.mxu0 0.0
      %1734 = vmatpush1.msra.mxu0 0.0
      %1735 = vmatprep.subr.mxu0 0.0
      %1736 = vmatpush1.msra.mxu0 0.0
      %1737 = vmatprep.mubr.f32.mxu0 0.0
      %1738 = vmatmul.mubr.f32.gmra.mrb[0].mxu0 %v1668
      %v1739 = vpop.f32.mrb[0].mxu0
      %v1740 = vadd.f32 0.0, %v1739
      %v1741 = vpop.f32.mrb[0].mxu0
      %v1742 = vadd.f32 0.0, %v1741
      %1743 = vmatprep.mubr.f32.mxu0 0.0
      %1744 = vmatmul.mubr.f32.gmra.mrb[0].mxu0 %v1671
      %v1745 = vpop.f32.mrb[0].mxu0
      %v1746 = vadd.f32 0.0, %v1745
      %v1747 = vpop.f32.mrb[0].mxu0
      %v1748 = vadd.f32 0.0, %v1747
      %1749 = vdwg.mxu0
      %1750 = vmatprep.subr.mxu0 0.0
      %1751 = vmatpush1.msra.mxu0 %v1663
      %1752 = vmatprep.subr.mxu0 0.0
      %1753 = vmatpush1.msra.mxu0 0.0
      %1754 = vmatprep.subr.mxu0 0.0
      %1755 = vmatpush1.msra.mxu0 0.0
      %1756 = vmatprep.subr.mxu0 0.0
      %1757 = vmatpush1.msra.mxu0 0.0
      %1758 = vmatprep.subr.mxu0 0.0
      %1759 = vmatpush1.msra.mxu0 0.0
      %1760 = vmatprep.subr.mxu0 0.0
      %1761 = vmatpush1.msra.mxu0 0.0
      %1762 = vmatprep.subr.mxu0 0.0
      %1763 = vmatpush1.msra.mxu0 0.0
      %1764 = vmatprep.subr.mxu0 0.0
      %1765 = vmatpush1.msra.mxu0 0.0
      %1766 = vmatprep.subr.mxu0 0.0
      %1767 = vmatpush1.msra.mxu0 0.0
      %1768 = vmatprep.subr.mxu0 0.0
      %1769 = vmatpush1.msra.mxu0 0.0
      %1770 = vmatprep.subr.mxu0 0.0
      %1771 = vmatpush1.msra.mxu0 0.0
      %1772 = vmatprep.subr.mxu0 0.0
      %1773 = vmatpush1.msra.mxu0 0.0
      %1774 = vmatprep.subr.mxu0 0.0
      %1775 = vmatpush1.msra.mxu0 0.0
      %1776 = vmatprep.subr.mxu0 0.0
      %1777 = vmatpush1.msra.mxu0 0.0
      %1778 = vmatprep.subr.mxu0 0.0
      %1779 = vmatpush1.msra.mxu0 0.0
      %1780 = vmatprep.subr.mxu0 0.0
      %1781 = vmatpush1.msra.mxu0 0.0
      %1782 = vmatprep.subr.mxu0 0.0
      %1783 = vmatpush1.msra.mxu0 0.0
      %1784 = vmatprep.subr.mxu0 0.0
      %1785 = vmatpush1.msra.mxu0 0.0
      %1786 = vmatprep.subr.mxu0 0.0
      %1787 = vmatpush1.msra.mxu0 0.0
      %1788 = vmatprep.subr.mxu0 0.0
      %1789 = vmatpush1.msra.mxu0 0.0
      %1790 = vmatprep.subr.mxu0 0.0
      %1791 = vmatpush1.msra.mxu0 0.0
      %1792 = vmatprep.subr.mxu0 0.0
      %1793 = vmatpush1.msra.mxu0 0.0
      %1794 = vmatprep.subr.mxu0 0.0
      %1795 = vmatpush1.msra.mxu0 0.0
      %1796 = vmatprep.subr.mxu0 0.0
      %1797 = vmatpush1.msra.mxu0 0.0
      %1798 = vmatprep.subr.mxu0 0.0
      %1799 = vmatpush1.msra.mxu0 0.0
      %1800 = vmatprep.subr.mxu0 0.0
      %1801 = vmatpush1.msra.mxu0 0.0
      %1802 = vmatprep.subr.mxu0 0.0
      %1803 = vmatpush1.msra.mxu0 0.0
      %1804 = vmatprep.subr.mxu0 0.0
      %1805 = vmatpush1.msra.mxu0 0.0
      %1806 = vmatprep.subr.mxu0 0.0
      %1807 = vmatpush1.msra.mxu0 0.0
      %1808 = vmatprep.subr.mxu0 0.0
      %1809 = vmatpush1.msra.mxu0 0.0
      %1810 = vmatprep.subr.mxu0 0.0
      %1811 = vmatpush1.msra.mxu0 0.0
      %1812 = vmatprep.subr.mxu0 0.0
      %1813 = vmatpush1.msra.mxu0 0.0
      %1814 = vmatprep.mubr.f32.mxu0 0.0
      %1815 = vmatmul.mubr.f32.gmra.mrb[0].mxu0 %v1668
      %v1816 = vpop.f32.mrb[0].mxu0
      %v1817 = vadd.f32 0.0, %v1816
      %v1818 = vpop.f32.mrb[0].mxu0
      %1819 = vmatprep.mubr.f32.mxu0 0.0
      %1820 = vmatmul.mubr.f32.gmra.mrb[0].mxu0 %v1671
      %v1821 = vpop.f32.mrb[0].mxu0
      %v1822 = vadd.f32 0.0, %v1821
      %v1823 = vpop.f32.mrb[0].mxu0
      %1824 = vdwg.mxu0
      %v1825 = vadd.f32 %v1648, %v1740
      %v1826 = vadd.f32 %v1649, %v1742
      %v1827 = vadd.f32 %v1650, %v1817
      %v1828 = vadd.f32 %v1651, %v1746
      %v1829 = vadd.f32 %v1652, %v1748
      %v1830 = vadd.f32 %v1653, %v1822
      %v1831 = vld [vmem:[%s2] sm:$0xff]
      %v1832 = vld [vmem:[%s2 + $0x8] sm:$0xff]
      %1834 = vset.pattern.permute.xlu0 0
      %1835 = vperm.xlu0 %1834, %v1831
      %v1836 = vpop.permute.xlu0 %1835
      %1839 = vset.pattern.permute.xlu0 0
      %1840 = vperm.xlu0 %1839, %v1832
      %v1841 = vpop.permute.xlu0 %1840
      %v1843 = vadd.f32 %v1825, %v1836
      %v1844 = vadd.f32 %v1826, %v1836
      %v1845 = vadd.f32 %v1827, %v1836
      %v1846 = vadd.f32 %v1828, %v1841
      %v1847 = vadd.f32 %v1829, %v1841
      %v1848 = vadd.f32 %v1830, %v1841
      %v1849 = vmax.f32 %v1843, 0.0
      %v1850 = vmax.f32 %v1844, 0.0
      %v1851 = vmax.f32 %v1845, 0.0
      %v1852 = vmax.f32 %v1846, 0.0
      %v1853 = vmax.f32 %v1847, 0.0
      %v1854 = vmax.f32 %v1848, 0.0
      %v1855 = vld [vmem:[%s5] sm:$0x7]
      %v1857 = vlaneseq
      %v1858 = vshrl.u32 %v1857, 7
      %v1859 = vsub.s32 0, %v1858
      %v1860 = vrot.slane %v1855, %v1859
      %v1861 = vlaneseq
      %v1862 = vshrl.u32 %v1861, 7
      %v1863 = vsub.s32 1, %v1862
      %v1864 = vrot.slane %v1855, %v1863
      %v1865 = vlaneseq
      %v1866 = vshrl.u32 %v1865, 7
      %v1867 = vsub.s32 2, %v1866
      %v1868 = vrot.slane %v1855, %v1867
      %v1872 = vmul.f32 %v1849, %v1860
      %v1873 = vmul.f32 %v1850, %v1864
      %v1874 = vmul.f32 %v1851, %v1868
      %v1875 = vmul.f32 %v1852, %v1860
      %v1876 = vmul.f32 %v1853, %v1864
      %v1877 = vmul.f32 %v1854, %v1868
      %1878 = vst [vmem:[#allocation2] sm:$0xff] 0.0
      %1879 = vst [vmem:[#allocation2 + $0x20] sm:$0xff] 0.0
      %1880 = vst [vmem:[#allocation2 + $0x8] sm:$0xff] %v1872
      %1881 = vst [vmem:[#allocation2 + $0x10] sm:$0xff] %v1873
      %1882 = vst [vmem:[#allocation2 + $0x18] sm:$0xff] %v1874
      %1883 = vst [vmem:[#allocation2 + $0x28] sm:$0xff] %v1875
      %1884 = vst [vmem:[#allocation2 + $0x30] sm:$0xff] %v1876
      %1885 = vst [vmem:[#allocation2 + $0x38] sm:$0xff] %v1877
      %v1886 = vld [vmem:[#allocation2] sm:$0xff]
      %v1887 = vld [vmem:[#allocation2 + $0x8] sm:$0xff]
      %v1888 = vld [vmem:[#allocation2 + $0x10] sm:$0xff]
      %v1889 = vld [vmem:[#allocation2 + $0x18] sm:$0xff]
      %v1890 = vld [vmem:[#allocation2 + $0x20] sm:$0xff]
      %v1891 = vld [vmem:[#allocation2 + $0x28] sm:$0xff]
      %v1892 = vld [vmem:[#allocation2 + $0x30] sm:$0xff]
      %v1893 = vld [vmem:[#allocation2 + $0x38] sm:$0xff]
      %1894 = vrot.lane.b32.xlu0 %v1886, 19
      %v1895 = vpop.permute.xlu0 %1894
      %1896 = vrot.lane.b32.xlu0 %v1890, 19
      %v1897 = vpop.permute.xlu0 %1896
      %1898 = vrot.lane.b32.xlu0 %v1887, 19
      %v1899 = vpop.permute.xlu0 %1898
      %1900 = vrot.lane.b32.xlu0 %v1891, 19
      %v1901 = vpop.permute.xlu0 %1900
      %1902 = vrot.lane.b32.xlu0 %v1888, 19
      %v1903 = vpop.permute.xlu0 %1902
      %1904 = vrot.lane.b32.xlu0 %v1892, 19
      %v1905 = vpop.permute.xlu0 %1904
      %1906 = vrot.lane.b32.xlu0 %v1889, 19
      %v1907 = vpop.permute.xlu0 %1906
      %1908 = vrot.lane.b32.xlu0 %v1893, 19
      %v1909 = vpop.permute.xlu0 %1908
      %vm1910 = vcmp.lt.s32.totalorder %v267, 19
      %v1911 = vsel %vm1910, %v1903, %v1907
      %v1912 = vsel %vm1910, %v1905, %v1909
      %v1913 = vsel %vm1910, %v1899, %v1903
      %v1914 = vsel %vm1910, %v1901, %v1905
      %v1915 = vsel %vm1910, %v1895, %v1899
      %v1916 = vsel %vm1910, %v1897, %v1901
      %v1917 = vld [vmem:[%s3] sm:$0x7]
      %1918 = vrot.lane.b32.xlu0 %v1886, 18
      %v1919 = vpop.permute.xlu0 %1918
      %1920 = vrot.lane.b32.xlu0 %v1890, 18
      %v1921 = vpop.permute.xlu0 %1920
      %1922 = vrot.lane.b32.xlu0 %v1887, 18
      %v1923 = vpop.permute.xlu0 %1922
      %1924 = vrot.lane.b32.xlu0 %v1891, 18
      %v1925 = vpop.permute.xlu0 %1924
      %1926 = vrot.lane.b32.xlu0 %v1888, 18
      %v1927 = vpop.permute.xlu0 %1926
      %1928 = vrot.lane.b32.xlu0 %v1892, 18
      %v1929 = vpop.permute.xlu0 %1928
      %1930 = vrot.lane.b32.xlu0 %v1889, 18
      %v1931 = vpop.permute.xlu0 %1930
      %1932 = vrot.lane.b32.xlu0 %v1893, 18
      %v1933 = vpop.permute.xlu0 %1932
      %vm1934 = vcmp.lt.s32.totalorder %v267, 18
      %v1935 = vsel %vm1934, %v1927, %v1931
      %v1936 = vsel %vm1934, %v1929, %v1933
      %v1937 = vsel %vm1934, %v1923, %v1927
      %v1938 = vsel %vm1934, %v1925, %v1929
      %v1939 = vsel %vm1934, %v1919, %v1923
      %v1940 = vsel %vm1934, %v1921, %v1925
      %s1941 = scalar_lea.vmem %s3, 4
      %v1942 = vld [vmem:[%s1941] sm:$0x7]
      %vm1943 = vcmask 130048
      %v1945 = vsel %vm1943, %v1942, 0
      %1947 = vmatprep.subr.mxu0 %v1937
      %1948 = vmatpush1.msra.mxu0 %v1939
      %1949 = vmatprep.subr.mxu0 %v1938
      %1950 = vmatpush1.msra.mxu0 %v1940
      %1951 = vmatprep.subr.mxu0 0.0
      %1952 = vmatpush1.msra.mxu0 0.0
      %1953 = vmatprep.subr.mxu0 0.0
      %1954 = vmatpush1.msra.mxu0 0.0
      %1955 = vmatprep.subr.mxu0 0.0
      %1956 = vmatpush1.msra.mxu0 0.0
      %1957 = vmatprep.subr.mxu0 0.0
      %1958 = vmatpush1.msra.mxu0 0.0
      %1959 = vmatprep.subr.mxu0 0.0
      %1960 = vmatpush1.msra.mxu0 0.0
      %1961 = vmatprep.subr.mxu0 0.0
      %1962 = vmatpush1.msra.mxu0 0.0
      %1963 = vmatprep.subr.mxu0 0.0
      %1964 = vmatpush1.msra.mxu0 0.0
      %1965 = vmatprep.subr.mxu0 0.0
      %1966 = vmatpush1.msra.mxu0 0.0
      %1967 = vmatprep.subr.mxu0 0.0
      %1968 = vmatpush1.msra.mxu0 0.0
      %1969 = vmatprep.subr.mxu0 0.0
      %1970 = vmatpush1.msra.mxu0 0.0
      %1971 = vmatprep.subr.mxu0 0.0
      %1972 = vmatpush1.msra.mxu0 0.0
      %1973 = vmatprep.subr.mxu0 0.0
      %1974 = vmatpush1.msra.mxu0 0.0
      %1975 = vmatprep.subr.mxu0 0.0
      %1976 = vmatpush1.msra.mxu0 0.0
      %1977 = vmatprep.subr.mxu0 0.0
      %1978 = vmatpush1.msra.mxu0 0.0
      %1979 = vmatprep.subr.mxu0 0.0
      %1980 = vmatpush1.msra.mxu0 0.0
      %1981 = vmatprep.subr.mxu0 0.0
      %1982 = vmatpush1.msra.mxu0 0.0
      %1983 = vmatprep.subr.mxu0 0.0
      %1984 = vmatpush1.msra.mxu0 0.0
      %1985 = vmatprep.subr.mxu0 0.0
      %1986 = vmatpush1.msra.mxu0 0.0
      %1987 = vmatprep.subr.mxu0 0.0
      %1988 = vmatpush1.msra.mxu0 0.0
      %1989 = vmatprep.subr.mxu0 0.0
      %1990 = vmatpush1.msra.mxu0 0.0
      %1991 = vmatprep.subr.mxu0 0.0
      %1992 = vmatpush1.msra.mxu0 0.0
      %1993 = vmatprep.subr.mxu0 0.0
      %1994 = vmatpush1.msra.mxu0 0.0
      %1995 = vmatprep.subr.mxu0 0.0
      %1996 = vmatpush1.msra.mxu0 0.0
      %1997 = vmatprep.subr.mxu0 0.0
      %1998 = vmatpush1.msra.mxu0 0.0
      %1999 = vmatprep.subr.mxu0 0.0
      %2000 = vmatpush1.msra.mxu0 0.0
      %2001 = vmatprep.subr.mxu0 0.0
      %2002 = vmatpush1.msra.mxu0 0.0
      %2003 = vmatprep.subr.mxu0 0.0
      %2004 = vmatpush1.msra.mxu0 0.0
      %2005 = vmatprep.subr.mxu0 0.0
      %2006 = vmatpush1.msra.mxu0 0.0
      %2007 = vmatprep.subr.mxu0 0.0
      %2008 = vmatpush1.msra.mxu0 0.0
      %2009 = vmatprep.subr.mxu0 0.0
      %2010 = vmatpush1.msra.mxu0 0.0
      %2011 = vmatprep.mubr.f32.mxu0 0.0
      %2012 = vmatmul.mubr.f32.gmra.mrb[0].mxu0 %v1945
      %v2013 = vpop.f32.mrb[0].mxu0
      %v2014 = vadd.f32 0.0, %v2013
      %v2015 = vpop.f32.mrb[0].mxu0
      %v2016 = vadd.f32 0.0, %v2015
      %2017 = vdwg.mxu0
      %2018 = vmatprep.subr.mxu0 0.0
      %2019 = vmatpush1.msra.mxu0 %v1935
      %2020 = vmatprep.subr.mxu0 0.0
      %2021 = vmatpush1.msra.mxu0 %v1936
      %2022 = vmatprep.subr.mxu0 0.0
      %2023 = vmatpush1.msra.mxu0 0.0
      %2024 = vmatprep.subr.mxu0 0.0
      %2025 = vmatpush1.msra.mxu0 0.0
      %2026 = vmatprep.subr.mxu0 0.0
      %2027 = vmatpush1.msra.mxu0 0.0
      %2028 = vmatprep.subr.mxu0 0.0
      %2029 = vmatpush1.msra.mxu0 0.0
      %2030 = vmatprep.subr.mxu0 0.0
      %2031 = vmatpush1.msra.mxu0 0.0
      %2032 = vmatprep.subr.mxu0 0.0
      %2033 = vmatpush1.msra.mxu0 0.0
      %2034 = vmatprep.subr.mxu0 0.0
      %2035 = vmatpush1.msra.mxu0 0.0
      %2036 = vmatprep.subr.mxu0 0.0
      %2037 = vmatpush1.msra.mxu0 0.0
      %2038 = vmatprep.subr.mxu0 0.0
      %2039 = vmatpush1.msra.mxu0 0.0
      %2040 = vmatprep.subr.mxu0 0.0
      %2041 = vmatpush1.msra.mxu0 0.0
      %2042 = vmatprep.subr.mxu0 0.0
      %2043 = vmatpush1.msra.mxu0 0.0
      %2044 = vmatprep.subr.mxu0 0.0
      %2045 = vmatpush1.msra.mxu0 0.0
      %2046 = vmatprep.subr.mxu0 0.0
      %2047 = vmatpush1.msra.mxu0 0.0
      %2048 = vmatprep.subr.mxu0 0.0
      %2049 = vmatpush1.msra.mxu0 0.0
      %2050 = vmatprep.subr.mxu0 0.0
      %2051 = vmatpush1.msra.mxu0 0.0
      %2052 = vmatprep.subr.mxu0 0.0
      %2053 = vmatpush1.msra.mxu0 0.0
      %2054 = vmatprep.subr.mxu0 0.0
      %2055 = vmatpush1.msra.mxu0 0.0
      %2056 = vmatprep.subr.mxu0 0.0
      %2057 = vmatpush1.msra.mxu0 0.0
      %2058 = vmatprep.subr.mxu0 0.0
      %2059 = vmatpush1.msra.mxu0 0.0
      %2060 = vmatprep.subr.mxu0 0.0
      %2061 = vmatpush1.msra.mxu0 0.0
      %2062 = vmatprep.subr.mxu0 0.0
      %2063 = vmatpush1.msra.mxu0 0.0
      %2064 = vmatprep.subr.mxu0 0.0
      %2065 = vmatpush1.msra.mxu0 0.0
      %2066 = vmatprep.subr.mxu0 0.0
      %2067 = vmatpush1.msra.mxu0 0.0
      %2068 = vmatprep.subr.mxu0 0.0
      %2069 = vmatpush1.msra.mxu0 0.0
      %2070 = vmatprep.subr.mxu0 0.0
      %2071 = vmatpush1.msra.mxu0 0.0
      %2072 = vmatprep.subr.mxu0 0.0
      %2073 = vmatpush1.msra.mxu0 0.0
      %2074 = vmatprep.subr.mxu0 0.0
      %2075 = vmatpush1.msra.mxu0 0.0
      %2076 = vmatprep.subr.mxu0 0.0
      %2077 = vmatpush1.msra.mxu0 0.0
      %2078 = vmatprep.subr.mxu0 0.0
      %2079 = vmatpush1.msra.mxu0 0.0
      %2080 = vmatprep.subr.mxu0 0.0
      %2081 = vmatpush1.msra.mxu0 0.0
      %2082 = vmatprep.mubr.f32.mxu0 0.0
      %2083 = vmatmul.mubr.f32.gmra.mrb[0].mxu0 %v1945
      %v2084 = vpop.f32.mrb[0].mxu0
      %v2085 = vadd.f32 0.0, %v2084
      %v2086 = vpop.f32.mrb[0].mxu0
      %2087 = vdwg.mxu0
      %v2089 = vsel %vm1943, %v1917, 0
      %2091 = vmatprep.subr.mxu0 %v1913
      %2092 = vmatpush1.msra.mxu0 %v1915
      %2093 = vmatprep.subr.mxu0 %v1914
      %2094 = vmatpush1.msra.mxu0 %v1916
      %2095 = vmatprep.subr.mxu0 0.0
      %2096 = vmatpush1.msra.mxu0 0.0
      %2097 = vmatprep.subr.mxu0 0.0
      %2098 = vmatpush1.msra.mxu0 0.0
      %2099 = vmatprep.subr.mxu0 0.0
      %2100 = vmatpush1.msra.mxu0 0.0
      %2101 = vmatprep.subr.mxu0 0.0
      %2102 = vmatpush1.msra.mxu0 0.0
      %2103 = vmatprep.subr.mxu0 0.0
      %2104 = vmatpush1.msra.mxu0 0.0
      %2105 = vmatprep.subr.mxu0 0.0
      %2106 = vmatpush1.msra.mxu0 0.0
      %2107 = vmatprep.subr.mxu0 0.0
      %2108 = vmatpush1.msra.mxu0 0.0
      %2109 = vmatprep.subr.mxu0 0.0
      %2110 = vmatpush1.msra.mxu0 0.0
      %2111 = vmatprep.subr.mxu0 0.0
      %2112 = vmatpush1.msra.mxu0 0.0
      %2113 = vmatprep.subr.mxu0 0.0
      %2114 = vmatpush1.msra.mxu0 0.0
      %2115 = vmatprep.subr.mxu0 0.0
      %2116 = vmatpush1.msra.mxu0 0.0
      %2117 = vmatprep.subr.mxu0 0.0
      %2118 = vmatpush1.msra.mxu0 0.0
      %2119 = vmatprep.subr.mxu0 0.0
      %2120 = vmatpush1.msra.mxu0 0.0
      %2121 = vmatprep.subr.mxu0 0.0
      %2122 = vmatpush1.msra.mxu0 0.0
      %2123 = vmatprep.subr.mxu0 0.0
      %2124 = vmatpush1.msra.mxu0 0.0
      %2125 = vmatprep.subr.mxu0 0.0
      %2126 = vmatpush1.msra.mxu0 0.0
      %2127 = vmatprep.subr.mxu0 0.0
      %2128 = vmatpush1.msra.mxu0 0.0
      %2129 = vmatprep.subr.mxu0 0.0
      %2130 = vmatpush1.msra.mxu0 0.0
      %2131 = vmatprep.subr.mxu0 0.0
      %2132 = vmatpush1.msra.mxu0 0.0
      %2133 = vmatprep.subr.mxu0 0.0
      %2134 = vmatpush1.msra.mxu0 0.0
      %2135 = vmatprep.subr.mxu0 0.0
      %2136 = vmatpush1.msra.mxu0 0.0
      %2137 = vmatprep.subr.mxu0 0.0
      %2138 = vmatpush1.msra.mxu0 0.0
      %2139 = vmatprep.subr.mxu0 0.0
      %2140 = vmatpush1.msra.mxu0 0.0
      %2141 = vmatprep.subr.mxu0 0.0
      %2142 = vmatpush1.msra.mxu0 0.0
      %2143 = vmatprep.subr.mxu0 0.0
      %2144 = vmatpush1.msra.mxu0 0.0
      %2145 = vmatprep.subr.mxu0 0.0
      %2146 = vmatpush1.msra.mxu0 0.0
      %2147 = vmatprep.subr.mxu0 0.0
      %2148 = vmatpush1.msra.mxu0 0.0
      %2149 = vmatprep.subr.mxu0 0.0
      %2150 = vmatpush1.msra.mxu0 0.0
      %2151 = vmatprep.subr.mxu0 0.0
      %2152 = vmatpush1.msra.mxu0 0.0
      %2153 = vmatprep.subr.mxu0 0.0
      %2154 = vmatpush1.msra.mxu0 0.0
      %2155 = vmatprep.mubr.f32.mxu0 0.0
      %2156 = vmatmul.mubr.f32.gmra.mrb[0].mxu0 %v2089
      %v2157 = vpop.f32.mrb[0].mxu0
      %v2158 = vadd.f32 %v2014, %v2157
      %v2159 = vpop.f32.mrb[0].mxu0
      %v2160 = vadd.f32 %v2016, %v2159
      %2161 = vdwg.mxu0
      %2162 = vmatprep.subr.mxu0 0.0
      %2163 = vmatpush1.msra.mxu0 %v1911
      %2164 = vmatprep.subr.mxu0 0.0
      %2165 = vmatpush1.msra.mxu0 %v1912
      %2166 = vmatprep.subr.mxu0 0.0
      %2167 = vmatpush1.msra.mxu0 0.0
      %2168 = vmatprep.subr.mxu0 0.0
      %2169 = vmatpush1.msra.mxu0 0.0
      %2170 = vmatprep.subr.mxu0 0.0
      %2171 = vmatpush1.msra.mxu0 0.0
      %2172 = vmatprep.subr.mxu0 0.0
      %2173 = vmatpush1.msra.mxu0 0.0
      %2174 = vmatprep.subr.mxu0 0.0
      %2175 = vmatpush1.msra.mxu0 0.0
      %2176 = vmatprep.subr.mxu0 0.0
      %2177 = vmatpush1.msra.mxu0 0.0
      %2178 = vmatprep.subr.mxu0 0.0
      %2179 = vmatpush1.msra.mxu0 0.0
      %2180 = vmatprep.subr.mxu0 0.0
      %2181 = vmatpush1.msra.mxu0 0.0
      %2182 = vmatprep.subr.mxu0 0.0
      %2183 = vmatpush1.msra.mxu0 0.0
      %2184 = vmatprep.subr.mxu0 0.0
      %2185 = vmatpush1.msra.mxu0 0.0
      %2186 = vmatprep.subr.mxu0 0.0
      %2187 = vmatpush1.msra.mxu0 0.0
      %2188 = vmatprep.subr.mxu0 0.0
      %2189 = vmatpush1.msra.mxu0 0.0
      %2190 = vmatprep.subr.mxu0 0.0
      %2191 = vmatpush1.msra.mxu0 0.0
      %2192 = vmatprep.subr.mxu0 0.0
      %2193 = vmatpush1.msra.mxu0 0.0
      %2194 = vmatprep.subr.mxu0 0.0
      %2195 = vmatpush1.msra.mxu0 0.0
      %2196 = vmatprep.subr.mxu0 0.0
      %2197 = vmatpush1.msra.mxu0 0.0
      %2198 = vmatprep.subr.mxu0 0.0
      %2199 = vmatpush1.msra.mxu0 0.0
      %2200 = vmatprep.subr.mxu0 0.0
      %2201 = vmatpush1.msra.mxu0 0.0
      %2202 = vmatprep.subr.mxu0 0.0
      %2203 = vmatpush1.msra.mxu0 0.0
      %2204 = vmatprep.subr.mxu0 0.0
      %2205 = vmatpush1.msra.mxu0 0.0
      %2206 = vmatprep.subr.mxu0 0.0
      %2207 = vmatpush1.msra.mxu0 0.0
      %2208 = vmatprep.subr.mxu0 0.0
      %2209 = vmatpush1.msra.mxu0 0.0
      %2210 = vmatprep.subr.mxu0 0.0
      %2211 = vmatpush1.msra.mxu0 0.0
      %2212 = vmatprep.subr.mxu0 0.0
      %2213 = vmatpush1.msra.mxu0 0.0
      %2214 = vmatprep.subr.mxu0 0.0
      %2215 = vmatpush1.msra.mxu0 0.0
      %2216 = vmatprep.subr.mxu0 0.0
      %2217 = vmatpush1.msra.mxu0 0.0
      %2218 = vmatprep.subr.mxu0 0.0
      %2219 = vmatpush1.msra.mxu0 0.0
      %2220 = vmatprep.subr.mxu0 0.0
      %2221 = vmatpush1.msra.mxu0 0.0
      %2222 = vmatprep.subr.mxu0 0.0
      %2223 = vmatpush1.msra.mxu0 0.0
      %2224 = vmatprep.subr.mxu0 0.0
      %2225 = vmatpush1.msra.mxu0 0.0
      %2226 = vmatprep.mubr.f32.mxu0 0.0
      %2227 = vmatmul.mubr.f32.gmra.mrb[0].mxu0 %v2089
      %v2228 = vpop.f32.mrb[0].mxu0
      %v2229 = vadd.f32 %v2085, %v2228
      %v2230 = vpop.f32.mrb[0].mxu0
      %2231 = vdwg.mxu0
      %2232 = vrot.lane.b32.xlu0 %v1886, 17
      %v2233 = vpop.permute.xlu0 %2232
      %2234 = vrot.lane.b32.xlu0 %v1890, 17
      %v2235 = vpop.permute.xlu0 %2234
      %2236 = vrot.lane.b32.xlu0 %v1887, 17
      %v2237 = vpop.permute.xlu0 %2236
      %2238 = vrot.lane.b32.xlu0 %v1891, 17
      %v2239 = vpop.permute.xlu0 %2238
      %2240 = vrot.lane.b32.xlu0 %v1888, 17
      %v2241 = vpop.permute.xlu0 %2240
      %2242 = vrot.lane.b32.xlu0 %v1892, 17
      %v2243 = vpop.permute.xlu0 %2242
      %2244 = vrot.lane.b32.xlu0 %v1889, 17
      %v2245 = vpop.permute.xlu0 %2244
      %2246 = vrot.lane.b32.xlu0 %v1893, 17
      %v2247 = vpop.permute.xlu0 %2246
      %vm2248 = vcmp.lt.s32.totalorder %v267, 17
      %v2249 = vsel %vm2248, %v2241, %v2245
      %v2250 = vsel %vm2248, %v2243, %v2247
      %v2251 = vsel %vm2248, %v2237, %v2241
      %v2252 = vsel %vm2248, %v2239, %v2243
      %v2253 = vsel %vm2248, %v2233, %v2237
      %v2254 = vsel %vm2248, %v2235, %v2239
      %s2255 = scalar_lea.vmem %s3, 8
      %v2256 = vld [vmem:[%s2255] sm:$0x7]
      %v2258 = vsel %vm1943, %v2256, 0
      %2260 = vmatprep.subr.mxu0 %v2251
      %2261 = vmatpush1.msra.mxu0 %v2253
      %2262 = vmatprep.subr.mxu0 %v2252
      %2263 = vmatpush1.msra.mxu0 %v2254
      %2264 = vmatprep.subr.mxu0 0.0
      %2265 = vmatpush1.msra.mxu0 0.0
      %2266 = vmatprep.subr.mxu0 0.0
      %2267 = vmatpush1.msra.mxu0 0.0
      %2268 = vmatprep.subr.mxu0 0.0
      %2269 = vmatpush1.msra.mxu0 0.0
      %2270 = vmatprep.subr.mxu0 0.0
      %2271 = vmatpush1.msra.mxu0 0.0
      %2272 = vmatprep.subr.mxu0 0.0
      %2273 = vmatpush1.msra.mxu0 0.0
      %2274 = vmatprep.subr.mxu0 0.0
      %2275 = vmatpush1.msra.mxu0 0.0
      %2276 = vmatprep.subr.mxu0 0.0
      %2277 = vmatpush1.msra.mxu0 0.0
      %2278 = vmatprep.subr.mxu0 0.0
      %2279 = vmatpush1.msra.mxu0 0.0
      %2280 = vmatprep.subr.mxu0 0.0
      %2281 = vmatpush1.msra.mxu0 0.0
      %2282 = vmatprep.subr.mxu0 0.0
      %2283 = vmatpush1.msra.mxu0 0.0
      %2284 = vmatprep.subr.mxu0 0.0
      %2285 = vmatpush1.msra.mxu0 0.0
      %2286 = vmatprep.subr.mxu0 0.0
      %2287 = vmatpush1.msra.mxu0 0.0
      %2288 = vmatprep.subr.mxu0 0.0
      %2289 = vmatpush1.msra.mxu0 0.0
      %2290 = vmatprep.subr.mxu0 0.0
      %2291 = vmatpush1.msra.mxu0 0.0
      %2292 = vmatprep.subr.mxu0 0.0
      %2293 = vmatpush1.msra.mxu0 0.0
      %2294 = vmatprep.subr.mxu0 0.0
      %2295 = vmatpush1.msra.mxu0 0.0
      %2296 = vmatprep.subr.mxu0 0.0
      %2297 = vmatpush1.msra.mxu0 0.0
      %2298 = vmatprep.subr.mxu0 0.0
      %2299 = vmatpush1.msra.mxu0 0.0
      %2300 = vmatprep.subr.mxu0 0.0
      %2301 = vmatpush1.msra.mxu0 0.0
      %2302 = vmatprep.subr.mxu0 0.0
      %2303 = vmatpush1.msra.mxu0 0.0
      %2304 = vmatprep.subr.mxu0 0.0
      %2305 = vmatpush1.msra.mxu0 0.0
      %2306 = vmatprep.subr.mxu0 0.0
      %2307 = vmatpush1.msra.mxu0 0.0
      %2308 = vmatprep.subr.mxu0 0.0
      %2309 = vmatpush1.msra.mxu0 0.0
      %2310 = vmatprep.subr.mxu0 0.0
      %2311 = vmatpush1.msra.mxu0 0.0
      %2312 = vmatprep.subr.mxu0 0.0
      %2313 = vmatpush1.msra.mxu0 0.0
      %2314 = vmatprep.subr.mxu0 0.0
      %2315 = vmatpush1.msra.mxu0 0.0
      %2316 = vmatprep.subr.mxu0 0.0
      %2317 = vmatpush1.msra.mxu0 0.0
      %2318 = vmatprep.subr.mxu0 0.0
      %2319 = vmatpush1.msra.mxu0 0.0
      %2320 = vmatprep.subr.mxu0 0.0
      %2321 = vmatpush1.msra.mxu0 0.0
      %2322 = vmatprep.subr.mxu0 0.0
      %2323 = vmatpush1.msra.mxu0 0.0
      %2324 = vmatprep.mubr.f32.mxu0 0.0
      %2325 = vmatmul.mubr.f32.gmra.mrb[0].mxu0 %v2258
      %v2326 = vpop.f32.mrb[0].mxu0
      %v2327 = vadd.f32 0.0, %v2326
      %v2328 = vpop.f32.mrb[0].mxu0
      %v2329 = vadd.f32 0.0, %v2328
      %2330 = vdwg.mxu0
      %2331 = vmatprep.subr.mxu0 0.0
      %2332 = vmatpush1.msra.mxu0 %v2249
      %2333 = vmatprep.subr.mxu0 0.0
      %2334 = vmatpush1.msra.mxu0 %v2250
      %2335 = vmatprep.subr.mxu0 0.0
      %2336 = vmatpush1.msra.mxu0 0.0
      %2337 = vmatprep.subr.mxu0 0.0
      %2338 = vmatpush1.msra.mxu0 0.0
      %2339 = vmatprep.subr.mxu0 0.0
      %2340 = vmatpush1.msra.mxu0 0.0
      %2341 = vmatprep.subr.mxu0 0.0
      %2342 = vmatpush1.msra.mxu0 0.0
      %2343 = vmatprep.subr.mxu0 0.0
      %2344 = vmatpush1.msra.mxu0 0.0
      %2345 = vmatprep.subr.mxu0 0.0
      %2346 = vmatpush1.msra.mxu0 0.0
      %2347 = vmatprep.subr.mxu0 0.0
      %2348 = vmatpush1.msra.mxu0 0.0
      %2349 = vmatprep.subr.mxu0 0.0
      %2350 = vmatpush1.msra.mxu0 0.0
      %2351 = vmatprep.subr.mxu0 0.0
      %2352 = vmatpush1.msra.mxu0 0.0
      %2353 = vmatprep.subr.mxu0 0.0
      %2354 = vmatpush1.msra.mxu0 0.0
      %2355 = vmatprep.subr.mxu0 0.0
      %2356 = vmatpush1.msra.mxu0 0.0
      %2357 = vmatprep.subr.mxu0 0.0
      %2358 = vmatpush1.msra.mxu0 0.0
      %2359 = vmatprep.subr.mxu0 0.0
      %2360 = vmatpush1.msra.mxu0 0.0
      %2361 = vmatprep.subr.mxu0 0.0
      %2362 = vmatpush1.msra.mxu0 0.0
      %2363 = vmatprep.subr.mxu0 0.0
      %2364 = vmatpush1.msra.mxu0 0.0
      %2365 = vmatprep.subr.mxu0 0.0
      %2366 = vmatpush1.msra.mxu0 0.0
      %2367 = vmatprep.subr.mxu0 0.0
      %2368 = vmatpush1.msra.mxu0 0.0
      %2369 = vmatprep.subr.mxu0 0.0
      %2370 = vmatpush1.msra.mxu0 0.0
      %2371 = vmatprep.subr.mxu0 0.0
      %2372 = vmatpush1.msra.mxu0 0.0
      %2373 = vmatprep.subr.mxu0 0.0
      %2374 = vmatpush1.msra.mxu0 0.0
      %2375 = vmatprep.subr.mxu0 0.0
      %2376 = vmatpush1.msra.mxu0 0.0
      %2377 = vmatprep.subr.mxu0 0.0
      %2378 = vmatpush1.msra.mxu0 0.0
      %2379 = vmatprep.subr.mxu0 0.0
      %2380 = vmatpush1.msra.mxu0 0.0
      %2381 = vmatprep.subr.mxu0 0.0
      %2382 = vmatpush1.msra.mxu0 0.0
      %2383 = vmatprep.subr.mxu0 0.0
      %2384 = vmatpush1.msra.mxu0 0.0
      %2385 = vmatprep.subr.mxu0 0.0
      %2386 = vmatpush1.msra.mxu0 0.0
      %2387 = vmatprep.subr.mxu0 0.0
      %2388 = vmatpush1.msra.mxu0 0.0
      %2389 = vmatprep.subr.mxu0 0.0
      %2390 = vmatpush1.msra.mxu0 0.0
      %2391 = vmatprep.subr.mxu0 0.0
      %2392 = vmatpush1.msra.mxu0 0.0
      %2393 = vmatprep.subr.mxu0 0.0
      %2394 = vmatpush1.msra.mxu0 0.0
      %2395 = vmatprep.mubr.f32.mxu0 0.0
      %2396 = vmatmul.mubr.f32.gmra.mrb[0].mxu0 %v2258
      %v2397 = vpop.f32.mrb[0].mxu0
      %v2398 = vadd.f32 0.0, %v2397
      %v2399 = vpop.f32.mrb[0].mxu0
      %2400 = vdwg.mxu0
      %v2401 = vadd.f32 %v2158, %v2327
      %v2402 = vadd.f32 %v2160, %v2329
      %v2403 = vadd.f32 %v2229, %v2398
      %2404 = vrot.lane.b32.xlu0 %v1886, 1
      %v2405 = vpop.permute.xlu0 %2404
      %2406 = vrot.lane.b32.xlu0 %v1890, 1
      %v2407 = vpop.permute.xlu0 %2406
      %2408 = vrot.lane.b32.xlu0 %v1887, 1
      %v2409 = vpop.permute.xlu0 %2408
      %2410 = vrot.lane.b32.xlu0 %v1891, 1
      %v2411 = vpop.permute.xlu0 %2410
      %2412 = vrot.lane.b32.xlu0 %v1888, 1
      %v2413 = vpop.permute.xlu0 %2412
      %2414 = vrot.lane.b32.xlu0 %v1892, 1
      %v2415 = vpop.permute.xlu0 %2414
      %2416 = vrot.lane.b32.xlu0 %v1889, 1
      %v2417 = vpop.permute.xlu0 %2416
      %2418 = vrot.lane.b32.xlu0 %v1893, 1
      %v2419 = vpop.permute.xlu0 %2418
      %vm2420 = vcmp.lt.s32.totalorder %v267, 1
      %v2421 = vsel %vm2420, %v2413, %v2417
      %v2422 = vsel %vm2420, %v2415, %v2419
      %v2423 = vsel %vm2420, %v2409, %v2413
      %v2424 = vsel %vm2420, %v2411, %v2415
      %v2425 = vsel %vm2420, %v2405, %v2409
      %v2426 = vsel %vm2420, %v2407, %v2411
      %s2427 = scalar_lea.vmem %s3, 12
      %v2428 = vld [vmem:[%s2427] sm:$0x7]
      %v2430 = vsel %vm1943, %v2428, 0
      %2432 = vmatprep.subr.mxu0 %v2423
      %2433 = vmatpush1.msra.mxu0 %v2425
      %2434 = vmatprep.subr.mxu0 %v2424
      %2435 = vmatpush1.msra.mxu0 %v2426
      %2436 = vmatprep.subr.mxu0 0.0
      %2437 = vmatpush1.msra.mxu0 0.0
      %2438 = vmatprep.subr.mxu0 0.0
      %2439 = vmatpush1.msra.mxu0 0.0
      %2440 = vmatprep.subr.mxu0 0.0
      %2441 = vmatpush1.msra.mxu0 0.0
      %2442 = vmatprep.subr.mxu0 0.0
      %2443 = vmatpush1.msra.mxu0 0.0
      %2444 = vmatprep.subr.mxu0 0.0
      %2445 = vmatpush1.msra.mxu0 0.0
      %2446 = vmatprep.subr.mxu0 0.0
      %2447 = vmatpush1.msra.mxu0 0.0
      %2448 = vmatprep.subr.mxu0 0.0
      %2449 = vmatpush1.msra.mxu0 0.0
      %2450 = vmatprep.subr.mxu0 0.0
      %2451 = vmatpush1.msra.mxu0 0.0
      %2452 = vmatprep.subr.mxu0 0.0
      %2453 = vmatpush1.msra.mxu0 0.0
      %2454 = vmatprep.subr.mxu0 0.0
      %2455 = vmatpush1.msra.mxu0 0.0
      %2456 = vmatprep.subr.mxu0 0.0
      %2457 = vmatpush1.msra.mxu0 0.0
      %2458 = vmatprep.subr.mxu0 0.0
      %2459 = vmatpush1.msra.mxu0 0.0
      %2460 = vmatprep.subr.mxu0 0.0
      %2461 = vmatpush1.msra.mxu0 0.0
      %2462 = vmatprep.subr.mxu0 0.0
      %2463 = vmatpush1.msra.mxu0 0.0
      %2464 = vmatprep.subr.mxu0 0.0
      %2465 = vmatpush1.msra.mxu0 0.0
      %2466 = vmatprep.subr.mxu0 0.0
      %2467 = vmatpush1.msra.mxu0 0.0
      %2468 = vmatprep.subr.mxu0 0.0
      %2469 = vmatpush1.msra.mxu0 0.0
      %2470 = vmatprep.subr.mxu0 0.0
      %2471 = vmatpush1.msra.mxu0 0.0
      %2472 = vmatprep.subr.mxu0 0.0
      %2473 = vmatpush1.msra.mxu0 0.0
      %2474 = vmatprep.subr.mxu0 0.0
      %2475 = vmatpush1.msra.mxu0 0.0
      %2476 = vmatprep.subr.mxu0 0.0
      %2477 = vmatpush1.msra.mxu0 0.0
      %2478 = vmatprep.subr.mxu0 0.0
      %2479 = vmatpush1.msra.mxu0 0.0
      %2480 = vmatprep.subr.mxu0 0.0
      %2481 = vmatpush1.msra.mxu0 0.0
      %2482 = vmatprep.subr.mxu0 0.0
      %2483 = vmatpush1.msra.mxu0 0.0
      %2484 = vmatprep.subr.mxu0 0.0
      %2485 = vmatpush1.msra.mxu0 0.0
      %2486 = vmatprep.subr.mxu0 0.0
      %2487 = vmatpush1.msra.mxu0 0.0
      %2488 = vmatprep.subr.mxu0 0.0
      %2489 = vmatpush1.msra.mxu0 0.0
      %2490 = vmatprep.subr.mxu0 0.0
      %2491 = vmatpush1.msra.mxu0 0.0
      %2492 = vmatprep.subr.mxu0 0.0
      %2493 = vmatpush1.msra.mxu0 0.0
      %2494 = vmatprep.subr.mxu0 0.0
      %2495 = vmatpush1.msra.mxu0 0.0
      %2496 = vmatprep.mubr.f32.mxu0 0.0
      %2497 = vmatmul.mubr.f32.gmra.mrb[0].mxu0 %v2430
      %v2498 = vpop.f32.mrb[0].mxu0
      %v2499 = vadd.f32 0.0, %v2498
      %v2500 = vpop.f32.mrb[0].mxu0
      %v2501 = vadd.f32 0.0, %v2500
      %2502 = vdwg.mxu0
      %2503 = vmatprep.subr.mxu0 0.0
      %2504 = vmatpush1.msra.mxu0 %v2421
      %2505 = vmatprep.subr.mxu0 0.0
      %2506 = vmatpush1.msra.mxu0 %v2422
      %2507 = vmatprep.subr.mxu0 0.0
      %2508 = vmatpush1.msra.mxu0 0.0
      %2509 = vmatprep.subr.mxu0 0.0
      %2510 = vmatpush1.msra.mxu0 0.0
      %2511 = vmatprep.subr.mxu0 0.0
      %2512 = vmatpush1.msra.mxu0 0.0
      %2513 = vmatprep.subr.mxu0 0.0
      %2514 = vmatpush1.msra.mxu0 0.0
      %2515 = vmatprep.subr.mxu0 0.0
      %2516 = vmatpush1.msra.mxu0 0.0
      %2517 = vmatprep.subr.mxu0 0.0
      %2518 = vmatpush1.msra.mxu0 0.0
      %2519 = vmatprep.subr.mxu0 0.0
      %2520 = vmatpush1.msra.mxu0 0.0
      %2521 = vmatprep.subr.mxu0 0.0
      %2522 = vmatpush1.msra.mxu0 0.0
      %2523 = vmatprep.subr.mxu0 0.0
      %2524 = vmatpush1.msra.mxu0 0.0
      %2525 = vmatprep.subr.mxu0 0.0
      %2526 = vmatpush1.msra.mxu0 0.0
      %2527 = vmatprep.subr.mxu0 0.0
      %2528 = vmatpush1.msra.mxu0 0.0
      %2529 = vmatprep.subr.mxu0 0.0
      %2530 = vmatpush1.msra.mxu0 0.0
      %2531 = vmatprep.subr.mxu0 0.0
      %2532 = vmatpush1.msra.mxu0 0.0
      %2533 = vmatprep.subr.mxu0 0.0
      %2534 = vmatpush1.msra.mxu0 0.0
      %2535 = vmatprep.subr.mxu0 0.0
      %2536 = vmatpush1.msra.mxu0 0.0
      %2537 = vmatprep.subr.mxu0 0.0
      %2538 = vmatpush1.msra.mxu0 0.0
      %2539 = vmatprep.subr.mxu0 0.0
      %2540 = vmatpush1.msra.mxu0 0.0
      %2541 = vmatprep.subr.mxu0 0.0
      %2542 = vmatpush1.msra.mxu0 0.0
      %2543 = vmatprep.subr.mxu0 0.0
      %2544 = vmatpush1.msra.mxu0 0.0
      %2545 = vmatprep.subr.mxu0 0.0
      %2546 = vmatpush1.msra.mxu0 0.0
      %2547 = vmatprep.subr.mxu0 0.0
      %2548 = vmatpush1.msra.mxu0 0.0
      %2549 = vmatprep.subr.mxu0 0.0
      %2550 = vmatpush1.msra.mxu0 0.0
      %2551 = vmatprep.subr.mxu0 0.0
      %2552 = vmatpush1.msra.mxu0 0.0
      %2553 = vmatprep.subr.mxu0 0.0
      %2554 = vmatpush1.msra.mxu0 0.0
      %2555 = vmatprep.subr.mxu0 0.0
      %2556 = vmatpush1.msra.mxu0 0.0
      %2557 = vmatprep.subr.mxu0 0.0
      %2558 = vmatpush1.msra.mxu0 0.0
      %2559 = vmatprep.subr.mxu0 0.0
      %2560 = vmatpush1.msra.mxu0 0.0
      %2561 = vmatprep.subr.mxu0 0.0
      %2562 = vmatpush1.msra.mxu0 0.0
      %2563 = vmatprep.subr.mxu0 0.0
      %2564 = vmatpush1.msra.mxu0 0.0
      %2565 = vmatprep.subr.mxu0 0.0
      %2566 = vmatpush1.msra.mxu0 0.0
      %2567 = vmatprep.mubr.f32.mxu0 0.0
      %2568 = vmatmul.mubr.f32.gmra.mrb[0].mxu0 %v2430
      %v2569 = vpop.f32.mrb[0].mxu0
      %v2570 = vadd.f32 0.0, %v2569
      %v2571 = vpop.f32.mrb[0].mxu0
      %2572 = vdwg.mxu0
      %v2573 = vadd.f32 %v2401, %v2499
      %v2574 = vadd.f32 %v2402, %v2501
      %v2575 = vadd.f32 %v2403, %v2570
      %s2576 = scalar_lea.vmem %s3, 16
      %v2577 = vld [vmem:[%s2576] sm:$0x7]
      %v2579 = vsel %vm1943, %v2577, 0
      %2581 = vmatprep.subr.mxu0 %v1888
      %2582 = vmatpush1.msra.mxu0 %v1887
      %2583 = vmatprep.subr.mxu0 %v1892
      %2584 = vmatpush1.msra.mxu0 %v1891
      %2585 = vmatprep.subr.mxu0 0.0
      %2586 = vmatpush1.msra.mxu0 0.0
      %2587 = vmatprep.subr.mxu0 0.0
      %2588 = vmatpush1.msra.mxu0 0.0
      %2589 = vmatprep.subr.mxu0 0.0
      %2590 = vmatpush1.msra.mxu0 0.0
      %2591 = vmatprep.subr.mxu0 0.0
      %2592 = vmatpush1.msra.mxu0 0.0
      %2593 = vmatprep.subr.mxu0 0.0
      %2594 = vmatpush1.msra.mxu0 0.0
      %2595 = vmatprep.subr.mxu0 0.0
      %2596 = vmatpush1.msra.mxu0 0.0
      %2597 = vmatprep.subr.mxu0 0.0
      %2598 = vmatpush1.msra.mxu0 0.0
      %2599 = vmatprep.subr.mxu0 0.0
      %2600 = vmatpush1.msra.mxu0 0.0
      %2601 = vmatprep.subr.mxu0 0.0
      %2602 = vmatpush1.msra.mxu0 0.0
      %2603 = vmatprep.subr.mxu0 0.0
      %2604 = vmatpush1.msra.mxu0 0.0
      %2605 = vmatprep.subr.mxu0 0.0
      %2606 = vmatpush1.msra.mxu0 0.0
      %2607 = vmatprep.subr.mxu0 0.0
      %2608 = vmatpush1.msra.mxu0 0.0
      %2609 = vmatprep.subr.mxu0 0.0
      %2610 = vmatpush1.msra.mxu0 0.0
      %2611 = vmatprep.subr.mxu0 0.0
      %2612 = vmatpush1.msra.mxu0 0.0
      %2613 = vmatprep.subr.mxu0 0.0
      %2614 = vmatpush1.msra.mxu0 0.0
      %2615 = vmatprep.subr.mxu0 0.0
      %2616 = vmatpush1.msra.mxu0 0.0
      %2617 = vmatprep.subr.mxu0 0.0
      %2618 = vmatpush1.msra.mxu0 0.0
      %2619 = vmatprep.subr.mxu0 0.0
      %2620 = vmatpush1.msra.mxu0 0.0
      %2621 = vmatprep.subr.mxu0 0.0
      %2622 = vmatpush1.msra.mxu0 0.0
      %2623 = vmatprep.subr.mxu0 0.0
      %2624 = vmatpush1.msra.mxu0 0.0
      %2625 = vmatprep.subr.mxu0 0.0
      %2626 = vmatpush1.msra.mxu0 0.0
      %2627 = vmatprep.subr.mxu0 0.0
      %2628 = vmatpush1.msra.mxu0 0.0
      %2629 = vmatprep.subr.mxu0 0.0
      %2630 = vmatpush1.msra.mxu0 0.0
      %2631 = vmatprep.subr.mxu0 0.0
      %2632 = vmatpush1.msra.mxu0 0.0
      %2633 = vmatprep.subr.mxu0 0.0
      %2634 = vmatpush1.msra.mxu0 0.0
      %2635 = vmatprep.subr.mxu0 0.0
      %2636 = vmatpush1.msra.mxu0 0.0
      %2637 = vmatprep.subr.mxu0 0.0
      %2638 = vmatpush1.msra.mxu0 0.0
      %2639 = vmatprep.subr.mxu0 0.0
      %2640 = vmatpush1.msra.mxu0 0.0
      %2641 = vmatprep.subr.mxu0 0.0
      %2642 = vmatpush1.msra.mxu0 0.0
      %2643 = vmatprep.subr.mxu0 0.0
      %2644 = vmatpush1.msra.mxu0 0.0
      %2645 = vmatprep.mubr.f32.mxu0 0.0
      %2646 = vmatmul.mubr.f32.gmra.mrb[0].mxu0 %v2579
      %v2647 = vpop.f32.mrb[0].mxu0
      %v2648 = vadd.f32 0.0, %v2647
      %v2649 = vpop.f32.mrb[0].mxu0
      %v2650 = vadd.f32 0.0, %v2649
      %2651 = vdwg.mxu0
      %2652 = vmatprep.subr.mxu0 0.0
      %2653 = vmatpush1.msra.mxu0 %v1889
      %2654 = vmatprep.subr.mxu0 0.0
      %2655 = vmatpush1.msra.mxu0 %v1893
      %2656 = vmatprep.subr.mxu0 0.0
      %2657 = vmatpush1.msra.mxu0 0.0
      %2658 = vmatprep.subr.mxu0 0.0
      %2659 = vmatpush1.msra.mxu0 0.0
      %2660 = vmatprep.subr.mxu0 0.0
      %2661 = vmatpush1.msra.mxu0 0.0
      %2662 = vmatprep.subr.mxu0 0.0
      %2663 = vmatpush1.msra.mxu0 0.0
      %2664 = vmatprep.subr.mxu0 0.0
      %2665 = vmatpush1.msra.mxu0 0.0
      %2666 = vmatprep.subr.mxu0 0.0
      %2667 = vmatpush1.msra.mxu0 0.0
      %2668 = vmatprep.subr.mxu0 0.0
      %2669 = vmatpush1.msra.mxu0 0.0
      %2670 = vmatprep.subr.mxu0 0.0
      %2671 = vmatpush1.msra.mxu0 0.0
      %2672 = vmatprep.subr.mxu0 0.0
      %2673 = vmatpush1.msra.mxu0 0.0
      %2674 = vmatprep.subr.mxu0 0.0
      %2675 = vmatpush1.msra.mxu0 0.0
      %2676 = vmatprep.subr.mxu0 0.0
      %2677 = vmatpush1.msra.mxu0 0.0
      %2678 = vmatprep.subr.mxu0 0.0
      %2679 = vmatpush1.msra.mxu0 0.0
      %2680 = vmatprep.subr.mxu0 0.0
      %2681 = vmatpush1.msra.mxu0 0.0
      %2682 = vmatprep.subr.mxu0 0.0
      %2683 = vmatpush1.msra.mxu0 0.0
      %2684 = vmatprep.subr.mxu0 0.0
      %2685 = vmatpush1.msra.mxu0 0.0
      %2686 = vmatprep.subr.mxu0 0.0
      %2687 = vmatpush1.msra.mxu0 0.0
      %2688 = vmatprep.subr.mxu0 0.0
      %2689 = vmatpush1.msra.mxu0 0.0
      %2690 = vmatprep.subr.mxu0 0.0
      %2691 = vmatpush1.msra.mxu0 0.0
      %2692 = vmatprep.subr.mxu0 0.0
      %2693 = vmatpush1.msra.mxu0 0.0
      %2694 = vmatprep.subr.mxu0 0.0
      %2695 = vmatpush1.msra.mxu0 0.0
      %2696 = vmatprep.subr.mxu0 0.0
      %2697 = vmatpush1.msra.mxu0 0.0
      %2698 = vmatprep.subr.mxu0 0.0
      %2699 = vmatpush1.msra.mxu0 0.0
      %2700 = vmatprep.subr.mxu0 0.0
      %2701 = vmatpush1.msra.mxu0 0.0
      %2702 = vmatprep.subr.mxu0 0.0
      %2703 = vmatpush1.msra.mxu0 0.0
      %2704 = vmatprep.subr.mxu0 0.0
      %2705 = vmatpush1.msra.mxu0 0.0
      %2706 = vmatprep.subr.mxu0 0.0
      %2707 = vmatpush1.msra.mxu0 0.0
      %2708 = vmatprep.subr.mxu0 0.0
      %2709 = vmatpush1.msra.mxu0 0.0
      %2710 = vmatprep.subr.mxu0 0.0
      %2711 = vmatpush1.msra.mxu0 0.0
      %2712 = vmatprep.subr.mxu0 0.0
      %2713 = vmatpush1.msra.mxu0 0.0
      %2714 = vmatprep.subr.mxu0 0.0
      %2715 = vmatpush1.msra.mxu0 0.0
      %2716 = vmatprep.mubr.f32.mxu0 0.0
      %2717 = vmatmul.mubr.f32.gmra.mrb[0].mxu0 %v2579
      %v2718 = vpop.f32.mrb[0].mxu0
      %v2719 = vadd.f32 0.0, %v2718
      %v2720 = vpop.f32.mrb[0].mxu0
      %2721 = vdwg.mxu0
      %v2722 = vadd.f32 %v2573, %v2648
      %v2723 = vadd.f32 %v2574, %v2650
      %v2724 = vadd.f32 %v2575, %v2719
      %2725 = vrot.lane.b32.xlu0 %v1886, 127
      %v2726 = vpop.permute.xlu0 %2725
      %2727 = vrot.lane.b32.xlu0 %v1890, 127
      %v2728 = vpop.permute.xlu0 %2727
      %2729 = vrot.lane.b32.xlu0 %v1887, 127
      %v2730 = vpop.permute.xlu0 %2729
      %2731 = vrot.lane.b32.xlu0 %v1891, 127
      %v2732 = vpop.permute.xlu0 %2731
      %2733 = vrot.lane.b32.xlu0 %v1888, 127
      %v2734 = vpop.permute.xlu0 %2733
      %2735 = vrot.lane.b32.xlu0 %v1892, 127
      %v2736 = vpop.permute.xlu0 %2735
      %2737 = vrot.lane.b32.xlu0 %v1889, 127
      %v2738 = vpop.permute.xlu0 %2737
      %2739 = vrot.lane.b32.xlu0 %v1893, 127
      %v2740 = vpop.permute.xlu0 %2739
      %v2741 = vsel %vm268, %v2734, %v2738
      %v2742 = vsel %vm268, %v2736, %v2740
      %v2743 = vsel %vm268, %v2730, %v2734
      %v2744 = vsel %vm268, %v2732, %v2736
      %v2745 = vsel %vm268, %v2738, %v2726
      %v2746 = vsel %vm268, %v2740, %v2728
      %s2747 = scalar_lea.vmem %s3, 20
      %v2748 = vld [vmem:[%s2747] sm:$0x7]
      %v2750 = vsel %vm1943, %v2748, 0
      %2752 = vmatprep.subr.mxu0 %v2741
      %2753 = vmatpush1.msra.mxu0 %v2743
      %2754 = vmatprep.subr.mxu0 %v2742
      %2755 = vmatpush1.msra.mxu0 %v2744
      %2756 = vmatprep.subr.mxu0 0.0
      %2757 = vmatpush1.msra.mxu0 0.0
      %2758 = vmatprep.subr.mxu0 0.0
      %2759 = vmatpush1.msra.mxu0 0.0
      %2760 = vmatprep.subr.mxu0 0.0
      %2761 = vmatpush1.msra.mxu0 0.0
      %2762 = vmatprep.subr.mxu0 0.0
      %2763 = vmatpush1.msra.mxu0 0.0
      %2764 = vmatprep.subr.mxu0 0.0
      %2765 = vmatpush1.msra.mxu0 0.0
      %2766 = vmatprep.subr.mxu0 0.0
      %2767 = vmatpush1.msra.mxu0 0.0
      %2768 = vmatprep.subr.mxu0 0.0
      %2769 = vmatpush1.msra.mxu0 0.0
      %2770 = vmatprep.subr.mxu0 0.0
      %2771 = vmatpush1.msra.mxu0 0.0
      %2772 = vmatprep.subr.mxu0 0.0
      %2773 = vmatpush1.msra.mxu0 0.0
      %2774 = vmatprep.subr.mxu0 0.0
      %2775 = vmatpush1.msra.mxu0 0.0
      %2776 = vmatprep.subr.mxu0 0.0
      %2777 = vmatpush1.msra.mxu0 0.0
      %2778 = vmatprep.subr.mxu0 0.0
      %2779 = vmatpush1.msra.mxu0 0.0
      %2780 = vmatprep.subr.mxu0 0.0
      %2781 = vmatpush1.msra.mxu0 0.0
      %2782 = vmatprep.subr.mxu0 0.0
      %2783 = vmatpush1.msra.mxu0 0.0
      %2784 = vmatprep.subr.mxu0 0.0
      %2785 = vmatpush1.msra.mxu0 0.0
      %2786 = vmatprep.subr.mxu0 0.0
      %2787 = vmatpush1.msra.mxu0 0.0
      %2788 = vmatprep.subr.mxu0 0.0
      %2789 = vmatpush1.msra.mxu0 0.0
      %2790 = vmatprep.subr.mxu0 0.0
      %2791 = vmatpush1.msra.mxu0 0.0
      %2792 = vmatprep.subr.mxu0 0.0
      %2793 = vmatpush1.msra.mxu0 0.0
      %2794 = vmatprep.subr.mxu0 0.0
      %2795 = vmatpush1.msra.mxu0 0.0
      %2796 = vmatprep.subr.mxu0 0.0
      %2797 = vmatpush1.msra.mxu0 0.0
      %2798 = vmatprep.subr.mxu0 0.0
      %2799 = vmatpush1.msra.mxu0 0.0
      %2800 = vmatprep.subr.mxu0 0.0
      %2801 = vmatpush1.msra.mxu0 0.0
      %2802 = vmatprep.subr.mxu0 0.0
      %2803 = vmatpush1.msra.mxu0 0.0
      %2804 = vmatprep.subr.mxu0 0.0
      %2805 = vmatpush1.msra.mxu0 0.0
      %2806 = vmatprep.subr.mxu0 0.0
      %2807 = vmatpush1.msra.mxu0 0.0
      %2808 = vmatprep.subr.mxu0 0.0
      %2809 = vmatpush1.msra.mxu0 0.0
      %2810 = vmatprep.subr.mxu0 0.0
      %2811 = vmatpush1.msra.mxu0 0.0
      %2812 = vmatprep.subr.mxu0 0.0
      %2813 = vmatpush1.msra.mxu0 0.0
      %2814 = vmatprep.subr.mxu0 0.0
      %2815 = vmatpush1.msra.mxu0 0.0
      %2816 = vmatprep.mubr.f32.mxu0 0.0
      %2817 = vmatmul.mubr.f32.gmra.mrb[0].mxu0 %v2750
      %v2818 = vpop.f32.mrb[0].mxu0
      %v2819 = vadd.f32 0.0, %v2818
      %v2820 = vpop.f32.mrb[0].mxu0
      %v2821 = vadd.f32 0.0, %v2820
      %2822 = vdwg.mxu0
      %2823 = vmatprep.subr.mxu0 0.0
      %2824 = vmatpush1.msra.mxu0 %v2745
      %2825 = vmatprep.subr.mxu0 0.0
      %2826 = vmatpush1.msra.mxu0 %v2746
      %2827 = vmatprep.subr.mxu0 0.0
      %2828 = vmatpush1.msra.mxu0 0.0
      %2829 = vmatprep.subr.mxu0 0.0
      %2830 = vmatpush1.msra.mxu0 0.0
      %2831 = vmatprep.subr.mxu0 0.0
      %2832 = vmatpush1.msra.mxu0 0.0
      %2833 = vmatprep.subr.mxu0 0.0
      %2834 = vmatpush1.msra.mxu0 0.0
      %2835 = vmatprep.subr.mxu0 0.0
      %2836 = vmatpush1.msra.mxu0 0.0
      %2837 = vmatprep.subr.mxu0 0.0
      %2838 = vmatpush1.msra.mxu0 0.0
      %2839 = vmatprep.subr.mxu0 0.0
      %2840 = vmatpush1.msra.mxu0 0.0
      %2841 = vmatprep.subr.mxu0 0.0
      %2842 = vmatpush1.msra.mxu0 0.0
      %2843 = vmatprep.subr.mxu0 0.0
      %2844 = vmatpush1.msra.mxu0 0.0
      %2845 = vmatprep.subr.mxu0 0.0
      %2846 = vmatpush1.msra.mxu0 0.0
      %2847 = vmatprep.subr.mxu0 0.0
      %2848 = vmatpush1.msra.mxu0 0.0
      %2849 = vmatprep.subr.mxu0 0.0
      %2850 = vmatpush1.msra.mxu0 0.0
      %2851 = vmatprep.subr.mxu0 0.0
      %2852 = vmatpush1.msra.mxu0 0.0
      %2853 = vmatprep.subr.mxu0 0.0
      %2854 = vmatpush1.msra.mxu0 0.0
      %2855 = vmatprep.subr.mxu0 0.0
      %2856 = vmatpush1.msra.mxu0 0.0
      %2857 = vmatprep.subr.mxu0 0.0
      %2858 = vmatpush1.msra.mxu0 0.0
      %2859 = vmatprep.subr.mxu0 0.0
      %2860 = vmatpush1.msra.mxu0 0.0
      %2861 = vmatprep.subr.mxu0 0.0
      %2862 = vmatpush1.msra.mxu0 0.0
      %2863 = vmatprep.subr.mxu0 0.0
      %2864 = vmatpush1.msra.mxu0 0.0
      %2865 = vmatprep.subr.mxu0 0.0
      %2866 = vmatpush1.msra.mxu0 0.0
      %2867 = vmatprep.subr.mxu0 0.0
      %2868 = vmatpush1.msra.mxu0 0.0
      %2869 = vmatprep.subr.mxu0 0.0
      %2870 = vmatpush1.msra.mxu0 0.0
      %2871 = vmatprep.subr.mxu0 0.0
      %2872 = vmatpush1.msra.mxu0 0.0
      %2873 = vmatprep.subr.mxu0 0.0
      %2874 = vmatpush1.msra.mxu0 0.0
      %2875 = vmatprep.subr.mxu0 0.0
      %2876 = vmatpush1.msra.mxu0 0.0
      %2877 = vmatprep.subr.mxu0 0.0
      %2878 = vmatpush1.msra.mxu0 0.0
      %2879 = vmatprep.subr.mxu0 0.0
      %2880 = vmatpush1.msra.mxu0 0.0
      %2881 = vmatprep.subr.mxu0 0.0
      %2882 = vmatpush1.msra.mxu0 0.0
      %2883 = vmatprep.subr.mxu0 0.0
      %2884 = vmatpush1.msra.mxu0 0.0
      %2885 = vmatprep.subr.mxu0 0.0
      %2886 = vmatpush1.msra.mxu0 0.0
      %2887 = vmatprep.mubr.f32.mxu0 0.0
      %2888 = vmatmul.mubr.f32.gmra.mrb[0].mxu0 %v2750
      %v2889 = vpop.f32.mrb[0].mxu0
      %v2890 = vadd.f32 0.0, %v2889
      %v2891 = vpop.f32.mrb[0].mxu0
      %2892 = vdwg.mxu0
      %v2893 = vadd.f32 %v2722, %v2819
      %v2894 = vadd.f32 %v2723, %v2821
      %v2895 = vadd.f32 %v2724, %v2890
      %2896 = vrot.lane.b32.xlu0 %v1886, 111
      %v2897 = vpop.permute.xlu0 %2896
      %2898 = vrot.lane.b32.xlu0 %v1890, 111
      %v2899 = vpop.permute.xlu0 %2898
      %2900 = vrot.lane.b32.xlu0 %v1887, 111
      %v2901 = vpop.permute.xlu0 %2900
      %2902 = vrot.lane.b32.xlu0 %v1891, 111
      %v2903 = vpop.permute.xlu0 %2902
      %2904 = vrot.lane.b32.xlu0 %v1888, 111
      %v2905 = vpop.permute.xlu0 %2904
      %2906 = vrot.lane.b32.xlu0 %v1892, 111
      %v2907 = vpop.permute.xlu0 %2906
      %2908 = vrot.lane.b32.xlu0 %v1889, 111
      %v2909 = vpop.permute.xlu0 %2908
      %2910 = vrot.lane.b32.xlu0 %v1893, 111
      %v2911 = vpop.permute.xlu0 %2910
      %vm2912 = vcmp.lt.s32.totalorder %v267, 111
      %v2913 = vsel %vm2912, %v2905, %v2909
      %v2914 = vsel %vm2912, %v2907, %v2911
      %v2915 = vsel %vm2912, %v2901, %v2905
      %v2916 = vsel %vm2912, %v2903, %v2907
      %v2917 = vsel %vm2912, %v2909, %v2897
      %v2918 = vsel %vm2912, %v2911, %v2899
      %s2919 = scalar_lea.vmem %s3, 24
      %v2920 = vld [vmem:[%s2919] sm:$0x7]
      %v2922 = vsel %vm1943, %v2920, 0
      %2924 = vmatprep.subr.mxu0 %v2913
      %2925 = vmatpush1.msra.mxu0 %v2915
      %2926 = vmatprep.subr.mxu0 %v2914
      %2927 = vmatpush1.msra.mxu0 %v2916
      %2928 = vmatprep.subr.mxu0 0.0
      %2929 = vmatpush1.msra.mxu0 0.0
      %2930 = vmatprep.subr.mxu0 0.0
      %2931 = vmatpush1.msra.mxu0 0.0
      %2932 = vmatprep.subr.mxu0 0.0
      %2933 = vmatpush1.msra.mxu0 0.0
      %2934 = vmatprep.subr.mxu0 0.0
      %2935 = vmatpush1.msra.mxu0 0.0
      %2936 = vmatprep.subr.mxu0 0.0
      %2937 = vmatpush1.msra.mxu0 0.0
      %2938 = vmatprep.subr.mxu0 0.0
      %2939 = vmatpush1.msra.mxu0 0.0
      %2940 = vmatprep.subr.mxu0 0.0
      %2941 = vmatpush1.msra.mxu0 0.0
      %2942 = vmatprep.subr.mxu0 0.0
      %2943 = vmatpush1.msra.mxu0 0.0
      %2944 = vmatprep.subr.mxu0 0.0
      %2945 = vmatpush1.msra.mxu0 0.0
      %2946 = vmatprep.subr.mxu0 0.0
      %2947 = vmatpush1.msra.mxu0 0.0
      %2948 = vmatprep.subr.mxu0 0.0
      %2949 = vmatpush1.msra.mxu0 0.0
      %2950 = vmatprep.subr.mxu0 0.0
      %2951 = vmatpush1.msra.mxu0 0.0
      %2952 = vmatprep.subr.mxu0 0.0
      %2953 = vmatpush1.msra.mxu0 0.0
      %2954 = vmatprep.subr.mxu0 0.0
      %2955 = vmatpush1.msra.mxu0 0.0
      %2956 = vmatprep.subr.mxu0 0.0
      %2957 = vmatpush1.msra.mxu0 0.0
      %2958 = vmatprep.subr.mxu0 0.0
      %2959 = vmatpush1.msra.mxu0 0.0
      %2960 = vmatprep.subr.mxu0 0.0
      %2961 = vmatpush1.msra.mxu0 0.0
      %2962 = vmatprep.subr.mxu0 0.0
      %2963 = vmatpush1.msra.mxu0 0.0
      %2964 = vmatprep.subr.mxu0 0.0
      %2965 = vmatpush1.msra.mxu0 0.0
      %2966 = vmatprep.subr.mxu0 0.0
      %2967 = vmatpush1.msra.mxu0 0.0
      %2968 = vmatprep.subr.mxu0 0.0
      %2969 = vmatpush1.msra.mxu0 0.0
      %2970 = vmatprep.subr.mxu0 0.0
      %2971 = vmatpush1.msra.mxu0 0.0
      %2972 = vmatprep.subr.mxu0 0.0
      %2973 = vmatpush1.msra.mxu0 0.0
      %2974 = vmatprep.subr.mxu0 0.0
      %2975 = vmatpush1.msra.mxu0 0.0
      %2976 = vmatprep.subr.mxu0 0.0
      %2977 = vmatpush1.msra.mxu0 0.0
      %2978 = vmatprep.subr.mxu0 0.0
      %2979 = vmatpush1.msra.mxu0 0.0
      %2980 = vmatprep.subr.mxu0 0.0
      %2981 = vmatpush1.msra.mxu0 0.0
      %2982 = vmatprep.subr.mxu0 0.0
      %2983 = vmatpush1.msra.mxu0 0.0
      %2984 = vmatprep.subr.mxu0 0.0
      %2985 = vmatpush1.msra.mxu0 0.0
      %2986 = vmatprep.subr.mxu0 0.0
      %2987 = vmatpush1.msra.mxu0 0.0
      %2988 = vmatprep.mubr.f32.mxu0 0.0
      %2989 = vmatmul.mubr.f32.gmra.mrb[0].mxu0 %v2922
      %v2990 = vpop.f32.mrb[0].mxu0
      %v2991 = vadd.f32 0.0, %v2990
      %v2992 = vpop.f32.mrb[0].mxu0
      %v2993 = vadd.f32 0.0, %v2992
      %2994 = vdwg.mxu0
      %2995 = vmatprep.subr.mxu0 0.0
      %2996 = vmatpush1.msra.mxu0 %v2917
      %2997 = vmatprep.subr.mxu0 0.0
      %2998 = vmatpush1.msra.mxu0 %v2918
      %2999 = vmatprep.subr.mxu0 0.0
      %3000 = vmatpush1.msra.mxu0 0.0
      %3001 = vmatprep.subr.mxu0 0.0
      %3002 = vmatpush1.msra.mxu0 0.0
      %3003 = vmatprep.subr.mxu0 0.0
      %3004 = vmatpush1.msra.mxu0 0.0
      %3005 = vmatprep.subr.mxu0 0.0
      %3006 = vmatpush1.msra.mxu0 0.0
      %3007 = vmatprep.subr.mxu0 0.0
      %3008 = vmatpush1.msra.mxu0 0.0
      %3009 = vmatprep.subr.mxu0 0.0
      %3010 = vmatpush1.msra.mxu0 0.0
      %3011 = vmatprep.subr.mxu0 0.0
      %3012 = vmatpush1.msra.mxu0 0.0
      %3013 = vmatprep.subr.mxu0 0.0
      %3014 = vmatpush1.msra.mxu0 0.0
      %3015 = vmatprep.subr.mxu0 0.0
      %3016 = vmatpush1.msra.mxu0 0.0
      %3017 = vmatprep.subr.mxu0 0.0
      %3018 = vmatpush1.msra.mxu0 0.0
      %3019 = vmatprep.subr.mxu0 0.0
      %3020 = vmatpush1.msra.mxu0 0.0
      %3021 = vmatprep.subr.mxu0 0.0
      %3022 = vmatpush1.msra.mxu0 0.0
      %3023 = vmatprep.subr.mxu0 0.0
      %3024 = vmatpush1.msra.mxu0 0.0
      %3025 = vmatprep.subr.mxu0 0.0
      %3026 = vmatpush1.msra.mxu0 0.0
      %3027 = vmatprep.subr.mxu0 0.0
      %3028 = vmatpush1.msra.mxu0 0.0
      %3029 = vmatprep.subr.mxu0 0.0
      %3030 = vmatpush1.msra.mxu0 0.0
      %3031 = vmatprep.subr.mxu0 0.0
      %3032 = vmatpush1.msra.mxu0 0.0
      %3033 = vmatprep.subr.mxu0 0.0
      %3034 = vmatpush1.msra.mxu0 0.0
      %3035 = vmatprep.subr.mxu0 0.0
      %3036 = vmatpush1.msra.mxu0 0.0
      %3037 = vmatprep.subr.mxu0 0.0
      %3038 = vmatpush1.msra.mxu0 0.0
      %3039 = vmatprep.subr.mxu0 0.0
      %3040 = vmatpush1.msra.mxu0 0.0
      %3041 = vmatprep.subr.mxu0 0.0
      %3042 = vmatpush1.msra.mxu0 0.0
      %3043 = vmatprep.subr.mxu0 0.0
      %3044 = vmatpush1.msra.mxu0 0.0
      %3045 = vmatprep.subr.mxu0 0.0
      %3046 = vmatpush1.msra.mxu0 0.0
      %3047 = vmatprep.subr.mxu0 0.0
      %3048 = vmatpush1.msra.mxu0 0.0
      %3049 = vmatprep.subr.mxu0 0.0
      %3050 = vmatpush1.msra.mxu0 0.0
      %3051 = vmatprep.subr.mxu0 0.0
      %3052 = vmatpush1.msra.mxu0 0.0
      %3053 = vmatprep.subr.mxu0 0.0
      %3054 = vmatpush1.msra.mxu0 0.0
      %3055 = vmatprep.subr.mxu0 0.0
      %3056 = vmatpush1.msra.mxu0 0.0
      %3057 = vmatprep.subr.mxu0 0.0
      %3058 = vmatpush1.msra.mxu0 0.0
      %3059 = vmatprep.mubr.f32.mxu0 0.0
      %3060 = vmatmul.mubr.f32.gmra.mrb[0].mxu0 %v2922
      %v3061 = vpop.f32.mrb[0].mxu0
      %v3062 = vadd.f32 0.0, %v3061
      %v3063 = vpop.f32.mrb[0].mxu0
      %3064 = vdwg.mxu0
      %v3065 = vadd.f32 %v2893, %v2991
      %v3066 = vadd.f32 %v2894, %v2993
      %v3067 = vadd.f32 %v2895, %v3062
      %3068 = vrot.lane.b32.xlu0 %v1886, 110
      %v3069 = vpop.permute.xlu0 %3068
      %3070 = vrot.lane.b32.xlu0 %v1890, 110
      %v3071 = vpop.permute.xlu0 %3070
      %3072 = vrot.lane.b32.xlu0 %v1887, 110
      %v3073 = vpop.permute.xlu0 %3072
      %3074 = vrot.lane.b32.xlu0 %v1891, 110
      %v3075 = vpop.permute.xlu0 %3074
      %3076 = vrot.lane.b32.xlu0 %v1888, 110
      %v3077 = vpop.permute.xlu0 %3076
      %3078 = vrot.lane.b32.xlu0 %v1892, 110
      %v3079 = vpop.permute.xlu0 %3078
      %3080 = vrot.lane.b32.xlu0 %v1889, 110
      %v3081 = vpop.permute.xlu0 %3080
      %3082 = vrot.lane.b32.xlu0 %v1893, 110
      %v3083 = vpop.permute.xlu0 %3082
      %v3084 = vsel %vm775, %v3077, %v3081
      %v3085 = vsel %vm775, %v3079, %v3083
      %v3086 = vsel %vm775, %v3073, %v3077
      %v3087 = vsel %vm775, %v3075, %v3079
      %v3088 = vsel %vm775, %v3081, %v3069
      %v3089 = vsel %vm775, %v3083, %v3071
      %s3090 = scalar_lea.vmem %s3, 28
      %v3091 = vld [vmem:[%s3090] sm:$0x7]
      %v3093 = vsel %vm1943, %v3091, 0
      %3095 = vmatprep.subr.mxu0 %v3084
      %3096 = vmatpush1.msra.mxu0 %v3086
      %3097 = vmatprep.subr.mxu0 %v3085
      %3098 = vmatpush1.msra.mxu0 %v3087
      %3099 = vmatprep.subr.mxu0 0.0
      %3100 = vmatpush1.msra.mxu0 0.0
      %3101 = vmatprep.subr.mxu0 0.0
      %3102 = vmatpush1.msra.mxu0 0.0
      %3103 = vmatprep.subr.mxu0 0.0
      %3104 = vmatpush1.msra.mxu0 0.0
      %3105 = vmatprep.subr.mxu0 0.0
      %3106 = vmatpush1.msra.mxu0 0.0
      %3107 = vmatprep.subr.mxu0 0.0
      %3108 = vmatpush1.msra.mxu0 0.0
      %3109 = vmatprep.subr.mxu0 0.0
      %3110 = vmatpush1.msra.mxu0 0.0
      %3111 = vmatprep.subr.mxu0 0.0
      %3112 = vmatpush1.msra.mxu0 0.0
      %3113 = vmatprep.subr.mxu0 0.0
      %3114 = vmatpush1.msra.mxu0 0.0
      %3115 = vmatprep.subr.mxu0 0.0
      %3116 = vmatpush1.msra.mxu0 0.0
      %3117 = vmatprep.subr.mxu0 0.0
      %3118 = vmatpush1.msra.mxu0 0.0
      %3119 = vmatprep.subr.mxu0 0.0
      %3120 = vmatpush1.msra.mxu0 0.0
      %3121 = vmatprep.subr.mxu0 0.0
      %3122 = vmatpush1.msra.mxu0 0.0
      %3123 = vmatprep.subr.mxu0 0.0
      %3124 = vmatpush1.msra.mxu0 0.0
      %3125 = vmatprep.subr.mxu0 0.0
      %3126 = vmatpush1.msra.mxu0 0.0
      %3127 = vmatprep.subr.mxu0 0.0
      %3128 = vmatpush1.msra.mxu0 0.0
      %3129 = vmatprep.subr.mxu0 0.0
      %3130 = vmatpush1.msra.mxu0 0.0
      %3131 = vmatprep.subr.mxu0 0.0
      %3132 = vmatpush1.msra.mxu0 0.0
      %3133 = vmatprep.subr.mxu0 0.0
      %3134 = vmatpush1.msra.mxu0 0.0
      %3135 = vmatprep.subr.mxu0 0.0
      %3136 = vmatpush1.msra.mxu0 0.0
      %3137 = vmatprep.subr.mxu0 0.0
      %3138 = vmatpush1.msra.mxu0 0.0
      %3139 = vmatprep.subr.mxu0 0.0
      %3140 = vmatpush1.msra.mxu0 0.0
      %3141 = vmatprep.subr.mxu0 0.0
      %3142 = vmatpush1.msra.mxu0 0.0
      %3143 = vmatprep.subr.mxu0 0.0
      %3144 = vmatpush1.msra.mxu0 0.0
      %3145 = vmatprep.subr.mxu0 0.0
      %3146 = vmatpush1.msra.mxu0 0.0
      %3147 = vmatprep.subr.mxu0 0.0
      %3148 = vmatpush1.msra.mxu0 0.0
      %3149 = vmatprep.subr.mxu0 0.0
      %3150 = vmatpush1.msra.mxu0 0.0
      %3151 = vmatprep.subr.mxu0 0.0
      %3152 = vmatpush1.msra.mxu0 0.0
      %3153 = vmatprep.subr.mxu0 0.0
      %3154 = vmatpush1.msra.mxu0 0.0
      %3155 = vmatprep.subr.mxu0 0.0
      %3156 = vmatpush1.msra.mxu0 0.0
      %3157 = vmatprep.subr.mxu0 0.0
      %3158 = vmatpush1.msra.mxu0 0.0
      %3159 = vmatprep.mubr.f32.mxu0 0.0
      %3160 = vmatmul.mubr.f32.gmra.mrb[0].mxu0 %v3093
      %v3161 = vpop.f32.mrb[0].mxu0
      %v3162 = vadd.f32 0.0, %v3161
      %v3163 = vpop.f32.mrb[0].mxu0
      %v3164 = vadd.f32 0.0, %v3163
      %3165 = vdwg.mxu0
      %3166 = vmatprep.subr.mxu0 0.0
      %3167 = vmatpush1.msra.mxu0 %v3088
      %3168 = vmatprep.subr.mxu0 0.0
      %3169 = vmatpush1.msra.mxu0 %v3089
      %3170 = vmatprep.subr.mxu0 0.0
      %3171 = vmatpush1.msra.mxu0 0.0
      %3172 = vmatprep.subr.mxu0 0.0
      %3173 = vmatpush1.msra.mxu0 0.0
      %3174 = vmatprep.subr.mxu0 0.0
      %3175 = vmatpush1.msra.mxu0 0.0
      %3176 = vmatprep.subr.mxu0 0.0
      %3177 = vmatpush1.msra.mxu0 0.0
      %3178 = vmatprep.subr.mxu0 0.0
      %3179 = vmatpush1.msra.mxu0 0.0
      %3180 = vmatprep.subr.mxu0 0.0
      %3181 = vmatpush1.msra.mxu0 0.0
      %3182 = vmatprep.subr.mxu0 0.0
      %3183 = vmatpush1.msra.mxu0 0.0
      %3184 = vmatprep.subr.mxu0 0.0
      %3185 = vmatpush1.msra.mxu0 0.0
      %3186 = vmatprep.subr.mxu0 0.0
      %3187 = vmatpush1.msra.mxu0 0.0
      %3188 = vmatprep.subr.mxu0 0.0
      %3189 = vmatpush1.msra.mxu0 0.0
      %3190 = vmatprep.subr.mxu0 0.0
      %3191 = vmatpush1.msra.mxu0 0.0
      %3192 = vmatprep.subr.mxu0 0.0
      %3193 = vmatpush1.msra.mxu0 0.0
      %3194 = vmatprep.subr.mxu0 0.0
      %3195 = vmatpush1.msra.mxu0 0.0
      %3196 = vmatprep.subr.mxu0 0.0
      %3197 = vmatpush1.msra.mxu0 0.0
      %3198 = vmatprep.subr.mxu0 0.0
      %3199 = vmatpush1.msra.mxu0 0.0
      %3200 = vmatprep.subr.mxu0 0.0
      %3201 = vmatpush1.msra.mxu0 0.0
      %3202 = vmatprep.subr.mxu0 0.0
      %3203 = vmatpush1.msra.mxu0 0.0
      %3204 = vmatprep.subr.mxu0 0.0
      %3205 = vmatpush1.msra.mxu0 0.0
      %3206 = vmatprep.subr.mxu0 0.0
      %3207 = vmatpush1.msra.mxu0 0.0
      %3208 = vmatprep.subr.mxu0 0.0
      %3209 = vmatpush1.msra.mxu0 0.0
      %3210 = vmatprep.subr.mxu0 0.0
      %3211 = vmatpush1.msra.mxu0 0.0
      %3212 = vmatprep.subr.mxu0 0.0
      %3213 = vmatpush1.msra.mxu0 0.0
      %3214 = vmatprep.subr.mxu0 0.0
      %3215 = vmatpush1.msra.mxu0 0.0
      %3216 = vmatprep.subr.mxu0 0.0
      %3217 = vmatpush1.msra.mxu0 0.0
      %3218 = vmatprep.subr.mxu0 0.0
      %3219 = vmatpush1.msra.mxu0 0.0
      %3220 = vmatprep.subr.mxu0 0.0
      %3221 = vmatpush1.msra.mxu0 0.0
      %3222 = vmatprep.subr.mxu0 0.0
      %3223 = vmatpush1.msra.mxu0 0.0
      %3224 = vmatprep.subr.mxu0 0.0
      %3225 = vmatpush1.msra.mxu0 0.0
      %3226 = vmatprep.subr.mxu0 0.0
      %3227 = vmatpush1.msra.mxu0 0.0
      %3228 = vmatprep.subr.mxu0 0.0
      %3229 = vmatpush1.msra.mxu0 0.0
      %3230 = vmatprep.mubr.f32.mxu0 0.0
      %3231 = vmatmul.mubr.f32.gmra.mrb[0].mxu0 %v3093
      %v3232 = vpop.f32.mrb[0].mxu0
      %v3233 = vadd.f32 0.0, %v3232
      %v3234 = vpop.f32.mrb[0].mxu0
      %3235 = vdwg.mxu0
      %v3236 = vadd.f32 %v3065, %v3162
      %v3237 = vadd.f32 %v3066, %v3164
      %v3238 = vadd.f32 %v3067, %v3233
      %3239 = vrot.lane.b32.xlu0 %v1886, 109
      %v3240 = vpop.permute.xlu0 %3239
      %3241 = vrot.lane.b32.xlu0 %v1890, 109
      %v3242 = vpop.permute.xlu0 %3241
      %3243 = vrot.lane.b32.xlu0 %v1887, 109
      %v3244 = vpop.permute.xlu0 %3243
      %3245 = vrot.lane.b32.xlu0 %v1891, 109
      %v3246 = vpop.permute.xlu0 %3245
      %3247 = vrot.lane.b32.xlu0 %v1888, 109
      %v3248 = vpop.permute.xlu0 %3247
      %3249 = vrot.lane.b32.xlu0 %v1892, 109
      %v3250 = vpop.permute.xlu0 %3249
      %3251 = vrot.lane.b32.xlu0 %v1889, 109
      %v3252 = vpop.permute.xlu0 %3251
      %3253 = vrot.lane.b32.xlu0 %v1893, 109
      %v3254 = vpop.permute.xlu0 %3253
      %v3255 = vsel %vm952, %v3248, %v3252
      %v3256 = vsel %vm952, %v3250, %v3254
      %v3257 = vsel %vm952, %v3244, %v3248
      %v3258 = vsel %vm952, %v3246, %v3250
      %v3259 = vsel %vm952, %v3252, %v3240
      %v3260 = vsel %vm952, %v3254, %v3242
      %s3261 = scalar_lea.vmem %s3, 32
      %v3262 = vld [vmem:[%s3261] sm:$0x7]
      %v3264 = vsel %vm1943, %v3262, 0
      %3266 = vmatprep.subr.mxu0 %v3255
      %3267 = vmatpush1.msra.mxu0 %v3257
      %3268 = vmatprep.subr.mxu0 %v3256
      %3269 = vmatpush1.msra.mxu0 %v3258
      %3270 = vmatprep.subr.mxu0 0.0
      %3271 = vmatpush1.msra.mxu0 0.0
      %3272 = vmatprep.subr.mxu0 0.0
      %3273 = vmatpush1.msra.mxu0 0.0
      %3274 = vmatprep.subr.mxu0 0.0
      %3275 = vmatpush1.msra.mxu0 0.0
      %3276 = vmatprep.subr.mxu0 0.0
      %3277 = vmatpush1.msra.mxu0 0.0
      %3278 = vmatprep.subr.mxu0 0.0
      %3279 = vmatpush1.msra.mxu0 0.0
      %3280 = vmatprep.subr.mxu0 0.0
      %3281 = vmatpush1.msra.mxu0 0.0
      %3282 = vmatprep.subr.mxu0 0.0
      %3283 = vmatpush1.msra.mxu0 0.0
      %3284 = vmatprep.subr.mxu0 0.0
      %3285 = vmatpush1.msra.mxu0 0.0
      %3286 = vmatprep.subr.mxu0 0.0
      %3287 = vmatpush1.msra.mxu0 0.0
      %3288 = vmatprep.subr.mxu0 0.0
      %3289 = vmatpush1.msra.mxu0 0.0
      %3290 = vmatprep.subr.mxu0 0.0
      %3291 = vmatpush1.msra.mxu0 0.0
      %3292 = vmatprep.subr.mxu0 0.0
      %3293 = vmatpush1.msra.mxu0 0.0
      %3294 = vmatprep.subr.mxu0 0.0
      %3295 = vmatpush1.msra.mxu0 0.0
      %3296 = vmatprep.subr.mxu0 0.0
      %3297 = vmatpush1.msra.mxu0 0.0
      %3298 = vmatprep.subr.mxu0 0.0
      %3299 = vmatpush1.msra.mxu0 0.0
      %3300 = vmatprep.subr.mxu0 0.0
      %3301 = vmatpush1.msra.mxu0 0.0
      %3302 = vmatprep.subr.mxu0 0.0
      %3303 = vmatpush1.msra.mxu0 0.0
      %3304 = vmatprep.subr.mxu0 0.0
      %3305 = vmatpush1.msra.mxu0 0.0
      %3306 = vmatprep.subr.mxu0 0.0
      %3307 = vmatpush1.msra.mxu0 0.0
      %3308 = vmatprep.subr.mxu0 0.0
      %3309 = vmatpush1.msra.mxu0 0.0
      %3310 = vmatprep.subr.mxu0 0.0
      %3311 = vmatpush1.msra.mxu0 0.0
      %3312 = vmatprep.subr.mxu0 0.0
      %3313 = vmatpush1.msra.mxu0 0.0
      %3314 = vmatprep.subr.mxu0 0.0
      %3315 = vmatpush1.msra.mxu0 0.0
      %3316 = vmatprep.subr.mxu0 0.0
      %3317 = vmatpush1.msra.mxu0 0.0
      %3318 = vmatprep.subr.mxu0 0.0
      %3319 = vmatpush1.msra.mxu0 0.0
      %3320 = vmatprep.subr.mxu0 0.0
      %3321 = vmatpush1.msra.mxu0 0.0
      %3322 = vmatprep.subr.mxu0 0.0
      %3323 = vmatpush1.msra.mxu0 0.0
      %3324 = vmatprep.subr.mxu0 0.0
      %3325 = vmatpush1.msra.mxu0 0.0
      %3326 = vmatprep.subr.mxu0 0.0
      %3327 = vmatpush1.msra.mxu0 0.0
      %3328 = vmatprep.subr.mxu0 0.0
      %3329 = vmatpush1.msra.mxu0 0.0
      %3330 = vmatprep.mubr.f32.mxu0 0.0
      %3331 = vmatmul.mubr.f32.gmra.mrb[0].mxu0 %v3264
      %v3332 = vpop.f32.mrb[0].mxu0
      %v3333 = vadd.f32 0.0, %v3332
      %v3334 = vpop.f32.mrb[0].mxu0
      %v3335 = vadd.f32 0.0, %v3334
      %3336 = vdwg.mxu0
      %3337 = vmatprep.subr.mxu0 0.0
      %3338 = vmatpush1.msra.mxu0 %v3259
      %3339 = vmatprep.subr.mxu0 0.0
      %3340 = vmatpush1.msra.mxu0 %v3260
      %3341 = vmatprep.subr.mxu0 0.0
      %3342 = vmatpush1.msra.mxu0 0.0
      %3343 = vmatprep.subr.mxu0 0.0
      %3344 = vmatpush1.msra.mxu0 0.0
      %3345 = vmatprep.subr.mxu0 0.0
      %3346 = vmatpush1.msra.mxu0 0.0
      %3347 = vmatprep.subr.mxu0 0.0
      %3348 = vmatpush1.msra.mxu0 0.0
      %3349 = vmatprep.subr.mxu0 0.0
      %3350 = vmatpush1.msra.mxu0 0.0
      %3351 = vmatprep.subr.mxu0 0.0
      %3352 = vmatpush1.msra.mxu0 0.0
      %3353 = vmatprep.subr.mxu0 0.0
      %3354 = vmatpush1.msra.mxu0 0.0
      %3355 = vmatprep.subr.mxu0 0.0
      %3356 = vmatpush1.msra.mxu0 0.0
      %3357 = vmatprep.subr.mxu0 0.0
      %3358 = vmatpush1.msra.mxu0 0.0
      %3359 = vmatprep.subr.mxu0 0.0
      %3360 = vmatpush1.msra.mxu0 0.0
      %3361 = vmatprep.subr.mxu0 0.0
      %3362 = vmatpush1.msra.mxu0 0.0
      %3363 = vmatprep.subr.mxu0 0.0
      %3364 = vmatpush1.msra.mxu0 0.0
      %3365 = vmatprep.subr.mxu0 0.0
      %3366 = vmatpush1.msra.mxu0 0.0
      %3367 = vmatprep.subr.mxu0 0.0
      %3368 = vmatpush1.msra.mxu0 0.0
      %3369 = vmatprep.subr.mxu0 0.0
      %3370 = vmatpush1.msra.mxu0 0.0
      %3371 = vmatprep.subr.mxu0 0.0
      %3372 = vmatpush1.msra.mxu0 0.0
      %3373 = vmatprep.subr.mxu0 0.0
      %3374 = vmatpush1.msra.mxu0 0.0
      %3375 = vmatprep.subr.mxu0 0.0
      %3376 = vmatpush1.msra.mxu0 0.0
      %3377 = vmatprep.subr.mxu0 0.0
      %3378 = vmatpush1.msra.mxu0 0.0
      %3379 = vmatprep.subr.mxu0 0.0
      %3380 = vmatpush1.msra.mxu0 0.0
      %3381 = vmatprep.subr.mxu0 0.0
      %3382 = vmatpush1.msra.mxu0 0.0
      %3383 = vmatprep.subr.mxu0 0.0
      %3384 = vmatpush1.msra.mxu0 0.0
      %3385 = vmatprep.subr.mxu0 0.0
      %3386 = vmatpush1.msra.mxu0 0.0
      %3387 = vmatprep.subr.mxu0 0.0
      %3388 = vmatpush1.msra.mxu0 0.0
      %3389 = vmatprep.subr.mxu0 0.0
      %3390 = vmatpush1.msra.mxu0 0.0
      %3391 = vmatprep.subr.mxu0 0.0
      %3392 = vmatpush1.msra.mxu0 0.0
      %3393 = vmatprep.subr.mxu0 0.0
      %3394 = vmatpush1.msra.mxu0 0.0
      %3395 = vmatprep.subr.mxu0 0.0
      %3396 = vmatpush1.msra.mxu0 0.0
      %3397 = vmatprep.subr.mxu0 0.0
      %3398 = vmatpush1.msra.mxu0 0.0
      %3399 = vmatprep.subr.mxu0 0.0
      %3400 = vmatpush1.msra.mxu0 0.0
      %3401 = vmatprep.mubr.f32.mxu0 0.0
      %3402 = vmatmul.mubr.f32.gmra.mrb[0].mxu0 %v3264
      %v3403 = vpop.f32.mrb[0].mxu0
      %v3404 = vadd.f32 0.0, %v3403
      %v3405 = vpop.f32.mrb[0].mxu0
      %3406 = vdwg.mxu0
      %v3407 = vadd.f32 %v3236, %v3333
      %v3408 = vadd.f32 %v3237, %v3335
      %v3409 = vadd.f32 %v3238, %v3404
      %v3410 = vld [vmem:[%s4] sm:$0x7]
      %3412 = vset.pattern.permute.xlu0 0
      %3413 = vperm.xlu0 %3412, %v3410
      %v3414 = vpop.permute.xlu0 %3413
      %v3416 = vadd.f32 %v3407, %v3414
      %v3417 = vadd.f32 %v3408, %v3414
      %v3418 = vadd.f32 %v3409, %v3414
      %v3421 = vcombine.low %v3416, %v3417
      %3423 = vst [vmem:[%s253] sm:$0x77] %v3421
      %3424 = vst [vmem:[%s253 + $0x8] sm:$0x7] %v3418
      %s3425 = smul.u32 3, %s17
      %p3426 = scmp.lt.s32.totalorder %s3425, 5
      %s3427 = scalar_select %p3426, %s3425, 5
      %s3428 = smul.addr %s3427, 4
      %s3429 = scalar_lea.vmem %s6, %s3428
      // Predicated region
      $region45: #{no_blocks_model.1} parent=43 // pred_check
        %p3430 = pneg %p166
      $region46: #{no_blocks_model.1} parent=43 // pred_check_branch
        %3432 = sbr.rel (%p3430) target = $region48
      $region47: #{no_blocks_model.1} parent=43 // pred_region
        %s3433 = smul.u32 3, %s17
      $region48: #{no_blocks_model.1} parent=43 // pred_fallthru
        _
    $region44: #{no_blocks_model.1} parent=5 // pred_fallthru
      _
    %p3434 = scmp.le.s32.totalorder 2, %s12
    // Predicated region
    $region49: #{no_blocks_model.1} parent=5 // pred_check
      %p3435 = pneg %p3434
    $region50: #{no_blocks_model.1} parent=5 // pred_check_branch
      %3437 = sbr.rel (%p3435) target = $region52
    $region51: #{no_blocks_model.1} parent=5 // pred_region
      %s3438 = ssub.s32 %s12, 2
      // Predicated region
      $region53: #{no_blocks_model.1} parent=51 // pred_check
        %p3439 = pneg %p172
      $region54: #{no_blocks_model.1} parent=51 // pred_check_branch
        %3441 = sbr.rel (%p3439) target = $region56
      $region55: #{no_blocks_model.1} parent=51 // pred_region
        %s3442 = smul.u32 3, %s18
        %p3443 = scmp.lt.s32.totalorder %s3442, 5
        %s3444 = scalar_select %p3443, %s3442, 5
        %s3445 = smul.addr %s3444, 4
        %s3446 = scalar_lea.vmem %s6, %s3445
      $region56: #{no_blocks_model.1} parent=51 // pred_fallthru
        _
    $region52: #{no_blocks_model.1} parent=5 // pred_fallthru
      _
  $region6: #{no_blocks_model.1} parent=0 // loop_footer
    %s16 = sadd.s32 1, %s12
  $region7: #{no_blocks_model.1} parent=0 // loop_footer_branch
    %11 = sbr.rel target = $region3
  $region8: #{no_blocks_model.1} parent=0 // loop_exit
    _

</llo_original>
